<compile_context>
chip_gen: v7x
topology: tpu7x:2x2x1
jax: 0.10.0
libtpu: 0.0.40
codegen_flags: <defaults>
</compile_context>

<pallas_src>
import jax
import jax.numpy as jnp
from jax import lax
from jax.experimental import pallas as pl
from jax.experimental.pallas import tpu as pltpu

BN_EPS = 1e-5
MATMUL_DTYPE = jnp.bfloat16           # MXU operand dtype (accumulation stays f32)


# --------------------------------------------------------------------------------
# Fused per-source-node kernel:
#   ReLU -> conv (all batched branches, one im2col matmul) + per-image BN stats
#   + avg_pool_3x3 (count_include_pad=False) from the same raw taps.
# --------------------------------------------------------------------------------
def _fused_node_ops_call(x_col, w_col, pool_gather, pool_inv):
    n, hw, kpad = x_col.shape          # [N, H*W, Kpad]  (Kpad = 9*Cin padded to 128k)
    kpad_w, ct = w_col.shape
    _, c = pool_gather.shape
    assert kpad == kpad_w

    def kernel(x_ref, w_ref, g_ref, inv_ref, y_ref, p_ref, s1_ref, s2_ref):
        xc = x_ref[0]                                        # [HW, Kpad] f32, raw taps
        # ReLU once + bf16 cast for the MXU; single batched-branch matmul, f32 acc.
        xr = jnp.maximum(xc, 0.0).astype(MATMUL_DTYPE)
        y = jnp.dot(xr, w_ref[...], preferred_element_type=jnp.float32)   # [HW, Ct]
        y_ref[0] = y
        # Per-image BN stat partials (sublane reductions). Blocked per image ->
        # no resident accumulators -> the image grid axis can be "parallel".
        s1_ref[0] = jnp.sum(y, axis=0, keepdims=True)
        s2_ref[0] = jnp.sum(y * y, axis=0, keepdims=True)
        # avg-pool from the raw (pre-ReLU) taps: 0/1 gather matmul (f32, exact zeros
        # on the padded rows) + per-position 1/count scaling (count_include_pad=False).
        p_ref[0] = jnp.dot(xc, g_ref[...],
                           preferred_element_type=jnp.float32) * inv_ref[...]

    return pl.pallas_call(
        kernel,
        out_shape=(jax.ShapeDtypeStruct((n, hw, ct), jnp.float32),   # conv (pre-BN)
                   jax.ShapeDtypeStruct((n, hw, c), jnp.float32),    # avg-pool
                   jax.ShapeDtypeStruct((n, 1, ct), jnp.float32),    # sum(y)   per image
                   jax.ShapeDtypeStruct((n, 1, ct), jnp.float32)),   # sum(y*y) per image
        grid=(n,),
        in_specs=[pl.BlockSpec((1, hw, kpad), lambda i: (i, 0, 0)),
                  pl.BlockSpec((kpad, ct), lambda i: (0, 0)),
                  pl.BlockSpec((kpad, c), lambda i: (0, 0)),
                  pl.BlockSpec((hw, c), lambda i: (0, 0))],
        out_specs=(pl.BlockSpec((1, hw, ct), lambda i: (i, 0, 0)),
                   pl.BlockSpec((1, hw, c), lambda i: (i, 0, 0)),
                   pl.BlockSpec((1, 1, ct), lambda i: (i, 0, 0)),
                   pl.BlockSpec((1, 1, ct), lambda i: (i, 0, 0))),
        compiler_params=pltpu.CompilerParams(
            dimension_semantics=("parallel",)),   # megacore over images on v7x
    )(x_col, w_col, pool_gather, pool_inv)


# --------------------------------------------------------------------------------
# XLA-side glue (kept minimal, all in lane-dense NHWC layout)
# --------------------------------------------------------------------------------
def _im2col_nhwc(z_nhwc, kpad):
    """[N,H,W,C] -> zero-padded 3x3 im2col [N, H*W, kpad] (tap-major, channel-minor)."""
    n, h, w, c = z_nhwc.shape
    zp = jnp.pad(z_nhwc, ((0, 0), (1, 1), (1, 1), (0, 0)))
    taps = [zp[:, kh:kh + h, kw:kw + w, :] for kh in range(3) for kw in range(3)]
    col = jnp.concatenate(taps, axis=-1).reshape(n, h * w, 9 * c)
    return jnp.pad(col, ((0, 0), (0, 0), (0, kpad - 9 * c)))


def _conv_w_col(w_oihw, kpad):
    """[O, Cin, 3, 3] -> [kpad, O] matching the im2col tap/channel order (zero-padded K)."""
    o, cin, kh, kw = w_oihw.shape
    wc = jnp.transpose(w_oihw, (2, 3, 1, 0)).reshape(kh * kw * cin, o)
    return jnp.pad(wc, ((0, kpad - kh * kw * cin), (0, 0)))


def embed_1x1_as_3x3(w1):
    """1x1 conv (pad 0) == 3x3 conv (pad 1) with zeros everywhere but the center tap."""
    cout, cin = w1.shape[0], w1.shape[1]
    w3 = jnp.zeros((cout, cin, 3, 3), w1.dtype)
    return w3.at[:, :, 1, 1].set(w1[:, :, 0, 0])


def _node_source_ops(z_nhwc, w_cols, gammas, betas, pool_gather, pool_inv, kpad):
    """Run the fused kernel for one source node.

    Returns BN-applied conv branch outputs (list of [N,H,W,C]) and the avg-pool
    output [N,H,W,C]."""
    n, h, w, c = z_nhwc.shape
    x_col = _im2col_nhwc(z_nhwc, kpad)
    w_all = jnp.concatenate(w_cols, axis=1).astype(MATMUL_DTYPE)     # [kpad, Ct]
    g_all = jnp.concatenate(gammas).astype(jnp.float32)              # [Ct]
    b_all = jnp.concatenate(betas).astype(jnp.float32)               # [Ct]

    y, pool, s1p, s2p = _fused_node_ops_call(x_col, w_all, pool_gather, pool_inv)

    # Tiny per-channel BN math (training-mode batch stats), folded into one FMA that
    # XLA fuses with the reshape/slice and the downstream node sums.
    m_total = float(n * h * w)
    s1 = jnp.sum(s1p, axis=0)[0]
    s2 = jnp.sum(s2p, axis=0)[0]
    mean = s1 / m_total
    # TODO(synk): E[x^2]-E[x]^2 is cancellation-prone at larger scale; fine here.
    var = jnp.maximum(s2 / m_total - mean * mean, 0.0)
    a = g_all * lax.rsqrt(var + BN_EPS)
    b = b_all - mean * a
    ybn = (y * a + b).reshape(n, h, w, -1)

    ct = w_all.shape[1]
    branches = [ybn[..., i * c:(i + 1) * c] for i in range(ct // c)]
    return branches, pool.reshape(n, h, w, c)


# --------------------------------------------------------------------------------
# SearchCell forward (keep_mask all True, num_nodes=4, in_channels == out_channels)
# --------------------------------------------------------------------------------
def search_cell_forward(x_nchw, edge_params, num_nodes=4):
    """edge_params[(prev_node, curr_node)] = dict(w3, g3, b3, w1, g1, b1)."""
    n, c, h, w = x_nchw.shape
    x = jnp.transpose(x_nchw, (0, 2, 3, 1))        # NHWC once, at the cell boundary
    kpad = ((9 * c + 127) // 128) * 128

    # Grid-invariant pool constants, shared by every source node.
    cnt = lax.reduce_window(jnp.ones((h, w), jnp.float32), 0.0, lax.add,
                            (3, 3), (1, 1), ((1, 1), (1, 1)))
    pool_inv = jnp.tile((1.0 / cnt).reshape(h * w, 1), (1, c))        # [H*W, C]
    pool_gather = jnp.pad(jnp.tile(jnp.eye(c, dtype=jnp.float32), (9, 1)),
                          ((0, kpad - 9 * c), (0, 0)))                # [kpad, C]

    outs = [x]
    pools, convs = {}, {}
    for curr in range(num_nodes - 1):
        # Source node `curr` just became available: compute its avg-pool and ALL its
        # outgoing conv branches (3x3 + embedded 1x1 of every edge) in ONE fused call.
        src = curr
        keys, wcols, gs, bs = [], [], [], []
        for tgt in range(src, num_nodes - 1):
            prm = edge_params[(src, tgt)]
            wcols.append(_conv_w_col(prm['w3'], kpad)); gs.append(prm['g3']); bs.append(prm['b3'])
            keys.append((src, tgt, '3'))
            wcols.append(_conv_w_col(embed_1x1_as_3x3(prm['w1']), kpad))
            gs.append(prm['g1']); bs.append(prm['b1'])
            keys.append((src, tgt, '1'))

        branches, pools[src] = _node_source_ops(outs[src], wcols, gs, bs,
                                                pool_gather, pool_inv, kpad)
        for key, br in zip(keys, branches):
            convs[key] = br

        # node `curr + 1` = sum over incoming edges of {none, pool, conv3, conv1, skip}
        node = jnp.zeros_like(x)
        for p in range(curr + 1):
            node = (node + pools[p]
                    + convs[(p, curr, '3')]
                    + convs[(p, curr, '1')]
                    + outs[p])                       # 'none' contributes exact zero
        outs.append(node)

    return jnp.transpose(outs[-1], (0, 3, 1, 2))     # back to NCHW at the boundary


# --------------------------------------------------------------------------------
# Pure-JAX references (independent formulations) for validation
# --------------------------------------------------------------------------------
def _ref_relu_conv_bn(xp, wgt, gamma, beta, padding, bf16_matmul):
    xr = jnp.maximum(xp, 0.0)
    lhs, rhs = xr, wgt
    if bf16_matmul:
        lhs, rhs = xr.astype(jnp.bfloat16), wgt.astype(jnp.bfloat16)
    y = lax.conv_general_dilated(
        lhs, rhs, window_strides=(1, 1),
        padding=((padding, padding), (padding, padding)),
        dimension_numbers=("NCHW", "OIHW", "NCHW"),
        preferred_element_type=jnp.float32)
    mean = jnp.mean(y, axis=(0, 2, 3), keepdims=True)
    var = jnp.mean((y - mean) ** 2, axis=(0, 2, 3), keepdims=True)
    y_hat = (y - mean) * lax.rsqrt(var + BN_EPS)
    return y_hat * gamma.reshape(1, -1, 1, 1) + beta.reshape(1, -1, 1, 1)


def _ref_avg_pool_3x3(xp):
    n, c, h, w = xp.shape
    xpad = jnp.pad(xp, ((0, 0), (0, 0), (1, 1), (1, 1)))
    mpad = jnp.pad(jnp.ones((1, 1, h, w), xp.dtype), ((0, 0), (0, 0), (1, 1), (1, 1)))
    s = jnp.zeros_like(xp)
    cnt = jnp.zeros((1, 1, h, w), xp.dtype)
    for dh in range(3):
        for dw in range(3):
            s = s + xpad[:, :, dh:dh + h, dw:dw + w]
            cnt = cnt + mpad[:, :, dh:dh + h, dw:dw + w]
    return s / cnt


def _ref_search_cell(x, edge_params, num_nodes=4, bf16_matmul=True):
    """Literal translation of SearchCell.forward (all keep_mask entries True)."""
    outs = [x]
    for curr in range(num_nodes - 1):
        edges = []
        for prev in range(curr + 1):
            xp = outs[prev]
            prm = edge_params[(prev, curr)]
            edges.append(0.0 * xp)                                              # none
            edges.append(_ref_avg_pool_3x3(xp))                                 # avg_pool_3x3
            edges.append(_ref_relu_conv_bn(xp, prm['w3'], prm['g3'], prm['b3'], 1, bf16_matmul))
            edges.append(_ref_relu_conv_bn(xp, prm['w1'], prm['g1'], prm['b1'], 0, bf16_matmul))
            edges.append(xp)                                                    # skip_connect
        outs.append(sum(edges))
    return outs[-1]


if __name__ == "__main__":
    # SearchCell(in_channels=8, out_channels=8, stride=1, affine=True,
    #            track_running_stats=True, use_bn=True, num_nodes=4), keep_mask=None.
    NUM_NODES = 4
    N, C, H, W = 2, 8, 16, 16

    key = jax.random.PRNGKey(0)
    key, kx = jax.random.split(key)
    x = jax.random.normal(kx, (N, C, H, W), dtype=jnp.float32)

    edge_params = {}
    for curr in range(NUM_NODES - 1):
        for prev in range(curr + 1):
            key, k1, k2, k3, k4, k5, k6 = jax.random.split(key, 7)
            edge_params[(prev, curr)] = dict(
                w3=0.1 * jax.random.normal(k1, (C, C, 3, 3), jnp.float32),
                g3=1.0 + 0.05 * jax.random.normal(k2, (C,), jnp.float32),
                b3=0.05 * jax.random.normal(k3, (C,), jnp.float32),
                w1=0.1 * jax.random.normal(k4, (C, C, 1, 1), jnp.float32),
                g1=1.0 + 0.05 * jax.random.normal(k5, (C,), jnp.float32),
                b1=0.05 * jax.random.normal(k6, (C,), jnp.float32),
            )

    fwd = jax.jit(lambda xx, pp: search_cell_forward(xx, pp, num_nodes=NUM_NODES))
    out = jax.block_until_ready(fwd(x, edge_params))
    assert out.shape == (N, C, H, W)

    # Tight check vs a precision-matched reference (same bf16 MXU operands).
    ref_bf16 = _ref_search_cell(x, edge_params, NUM_NODES, bf16_matmul=True)
    assert float(jnp.max(jnp.abs(out - ref_bf16))) < 5e-2

    # Loose sanity bound vs the full-f32 reference (bf16 quantization accumulates
    # through the 3-node cascade of conv/BN/skip sums; output magnitude is O(10+)).
    ref_f32 = _ref_search_cell(x, edge_params, NUM_NODES, bf16_matmul=False)
    assert float(jnp.max(jnp.abs(out - ref_f32))) < 1.0

    print("KERNEL_OK")
</pallas_src>

<mosaic_0001>
module attributes {stable_mosaic.version = 11 : i64} {
  func.func @kernel(%arg0: i32, %arg1: memref<1x256x128xf32, #tpu.memory_space<vmem>>, %arg2: memref<128x48xbf16, #tpu.memory_space<vmem>>, %arg3: memref<128x8xf32, #tpu.memory_space<vmem>>, %arg4: memref<256x8xf32, #tpu.memory_space<vmem>>, %arg5: memref<1x256x48xf32, #tpu.memory_space<vmem>>, %arg6: memref<1x256x8xf32, #tpu.memory_space<vmem>>, %arg7: memref<1x1x48xf32, #tpu.memory_space<vmem>>, %arg8: memref<1x1x48xf32, #tpu.memory_space<vmem>>) attributes {dimension_semantics = [#tpu.dimension_semantics<parallel>], iteration_bounds = array<i64: 2>, scalar_prefetch = 0 : i64, scratch_operands = 0 : i64, tpu.core_type = #tpu.core_type<tc>, window_params = [{transform_indices = @transform_0, window_bounds = array<i64: 1, 256, 128>}, {pipeline_mode = #tpu.pipeline_mode<synchronous>, transform_indices = @transform_1, window_bounds = array<i64: 128, 48>}, {pipeline_mode = #tpu.pipeline_mode<synchronous>, transform_indices = @transform_2, window_bounds = array<i64: 128, 8>}, {pipeline_mode = #tpu.pipeline_mode<synchronous>, transform_indices = @transform_3, window_bounds = array<i64: 256, 8>}, {transform_indices = @transform_4, window_bounds = array<i64: 1, 256, 48>}, {transform_indices = @transform_5, window_bounds = array<i64: 1, 256, 8>}, {transform_indices = @transform_6, window_bounds = array<i64: 1, 1, 48>}, {transform_indices = @transform_7, window_bounds = array<i64: 1, 1, 48>}]} {
    %c0 = arith.constant 0 : index
    %c0_0 = arith.constant 0 : index
    %c0_1 = arith.constant 0 : index
    %0 = vector.load %arg1[%c0, %c0_0, %c0_1] : memref<1x256x128xf32, #tpu.memory_space<vmem>>, vector<1x256x128xf32>
    %1 = vector.shape_cast %0 : vector<1x256x128xf32> to vector<256x128xf32>
    %cst = arith.constant 0.000000e+00 : f32
    %2 = vector.broadcast %cst : f32 to vector<256x128xf32>
    %3 = arith.maximumf %1, %2 : vector<256x128xf32>
    %4 = arith.truncf %3 : vector<256x128xf32> to vector<256x128xbf16>
    %c0_2 = arith.constant 0 : index
    %c0_3 = arith.constant 0 : index
    %5 = vector.load %arg2[%c0_2, %c0_3] : memref<128x48xbf16, #tpu.memory_space<vmem>>, vector<128x48xbf16>
    %cst_4 = arith.constant dense<0.000000e+00> : vector<256x48xf32>
    %6 = tpu.matmul %4, %5, %cst_4 {dimension_numbers = #tpu.dot_dimension_numbers<[1], [0], [0], [1], [0, 0, 1, 1], [], []>} : vector<256x128xbf16>, vector<128x48xbf16>, vector<256x48xf32> -> vector<256x48xf32>
    %c0_5 = arith.constant 0 : index
    %c0_6 = arith.constant 0 : index
    %c0_7 = arith.constant 0 : index
    %7 = vector.load %arg5[%c0_5, %c0_6, %c0_7] : memref<1x256x48xf32, #tpu.memory_space<vmem>>, vector<1x256x48xf32>
    %8 = vector.shape_cast %7 : vector<1x256x48xf32> to vector<256x48xf32>
    %9 = vector.shape_cast %6 : vector<256x48xf32> to vector<1x256x48xf32>
    tpu.vector_store %arg5[%c0_5, %c0_6, %c0_7], %9 {strides = array<i32>} : memref<1x256x48xf32, #tpu.memory_space<vmem>>, vector<1x256x48xf32>,
    %cst_8 = arith.constant dense<0.000000e+00> : vector<48xf32>
    %10 = vector.multi_reduction <add>, %6, %cst_8 [0] : vector<256x48xf32> to vector<48xf32>
    %11 = vector.shape_cast %10 : vector<48xf32> to vector<1x48xf32>
    %c0_9 = arith.constant 0 : index
    %c0_10 = arith.constant 0 : index
    %c0_11 = arith.constant 0 : index
    %12 = vector.load %arg7[%c0_9, %c0_10, %c0_11] : memref<1x1x48xf32, #tpu.memory_space<vmem>>, vector<1x1x48xf32>
    %13 = vector.shape_cast %12 : vector<1x1x48xf32> to vector<1x48xf32>
    %14 = vector.shape_cast %11 : vector<1x48xf32> to vector<1x1x48xf32>
    tpu.vector_store %arg7[%c0_9, %c0_10, %c0_11], %14 {strides = array<i32>} : memref<1x1x48xf32, #tpu.memory_space<vmem>>, vector<1x1x48xf32>,
    %15 = arith.mulf %6, %6 : vector<256x48xf32>
    %cst_12 = arith.constant dense<0.000000e+00> : vector<48xf32>
    %16 = vector.multi_reduction <add>, %15, %cst_12 [0] : vector<256x48xf32> to vector<48xf32>
    %17 = vector.shape_cast %16 : vector<48xf32> to vector<1x48xf32>
    %c0_13 = arith.constant 0 : index
    %c0_14 = arith.constant 0 : index
    %c0_15 = arith.constant 0 : index
    %18 = vector.load %arg8[%c0_13, %c0_14, %c0_15] : memref<1x1x48xf32, #tpu.memory_space<vmem>>, vector<1x1x48xf32>
    %19 = vector.shape_cast %18 : vector<1x1x48xf32> to vector<1x48xf32>
    %20 = vector.shape_cast %17 : vector<1x48xf32> to vector<1x1x48xf32>
    tpu.vector_store %arg8[%c0_13, %c0_14, %c0_15], %20 {strides = array<i32>} : memref<1x1x48xf32, #tpu.memory_space<vmem>>, vector<1x1x48xf32>,
    %c0_16 = arith.constant 0 : index
    %c0_17 = arith.constant 0 : index
    %21 = vector.load %arg3[%c0_16, %c0_17] : memref<128x8xf32, #tpu.memory_space<vmem>>, vector<128x8xf32>
    %cst_18 = arith.constant dense<0.000000e+00> : vector<256x8xf32>
    %22 = tpu.matmul %1, %21, %cst_18 {dimension_numbers = #tpu.dot_dimension_numbers<[1], [0], [0], [1], [0, 0, 1, 1], [], []>} : vector<256x128xf32>, vector<128x8xf32>, vector<256x8xf32> -> vector<256x8xf32>
    %c0_19 = arith.constant 0 : index
    %c0_20 = arith.constant 0 : index
    %23 = vector.load %arg4[%c0_19, %c0_20] : memref<256x8xf32, #tpu.memory_space<vmem>>, vector<256x8xf32>
    %24 = arith.mulf %22, %23 : vector<256x8xf32>
    %c0_21 = arith.constant 0 : index
    %c0_22 = arith.constant 0 : index
    %c0_23 = arith.constant 0 : index
    %25 = vector.load %arg6[%c0_21, %c0_22, %c0_23] : memref<1x256x8xf32, #tpu.memory_space<vmem>>, vector<1x256x8xf32>
    %26 = vector.shape_cast %25 : vector<1x256x8xf32> to vector<256x8xf32>
    %27 = vector.shape_cast %24 : vector<256x8xf32> to vector<1x256x8xf32>
    tpu.vector_store %arg6[%c0_21, %c0_22, %c0_23], %27 {strides = array<i32>} : memref<1x256x8xf32, #tpu.memory_space<vmem>>, vector<1x256x8xf32>,
    return
  }
  func.func @transform_0(%arg0: i32) -> (i32, i32, i32) {
    %c0_i32 = arith.constant 0 : i32
    %c0_i32_0 = arith.constant 0 : i32
    %c0_i32_1 = arith.constant 0 : i32
    return %arg0, %c0_i32, %c0_i32_0 : i32, i32, i32
  }
  func.func @transform_1(%arg0: i32) -> (i32, i32) {
    %c0_i32 = arith.constant 0 : i32
    %c0_i32_0 = arith.constant 0 : i32
    %c0_i32_1 = arith.constant 0 : i32
    return %c0_i32, %c0_i32_0 : i32, i32
  }
  func.func @transform_2(%arg0: i32) -> (i32, i32) {
    %c0_i32 = arith.constant 0 : i32
    %c0_i32_0 = arith.constant 0 : i32
    %c0_i32_1 = arith.constant 0 : i32
    return %c0_i32, %c0_i32_0 : i32, i32
  }
  func.func @transform_3(%arg0: i32) -> (i32, i32) {
    %c0_i32 = arith.constant 0 : i32
    %c0_i32_0 = arith.constant 0 : i32
    %c0_i32_1 = arith.constant 0 : i32
    return %c0_i32, %c0_i32_0 : i32, i32
  }
  func.func @transform_4(%arg0: i32) -> (i32, i32, i32) {
    %c0_i32 = arith.constant 0 : i32
    %c0_i32_0 = arith.constant 0 : i32
    %c0_i32_1 = arith.constant 0 : i32
    return %arg0, %c0_i32, %c0_i32_0 : i32, i32, i32
  }
  func.func @transform_5(%arg0: i32) -> (i32, i32, i32) {
    %c0_i32 = arith.constant 0 : i32
    %c0_i32_0 = arith.constant 0 : i32
    %c0_i32_1 = arith.constant 0 : i32
    return %arg0, %c0_i32, %c0_i32_0 : i32, i32, i32
  }
  func.func @transform_6(%arg0: i32) -> (i32, i32, i32) {
    %c0_i32 = arith.constant 0 : i32
    %c0_i32_0 = arith.constant 0 : i32
    %c0_i32_1 = arith.constant 0 : i32
    return %arg0, %c0_i32, %c0_i32_0 : i32, i32, i32
  }
  func.func @transform_7(%arg0: i32) -> (i32, i32, i32) {
    %c0_i32 = arith.constant 0 : i32
    %c0_i32_0 = arith.constant 0 : i32
    %c0_i32_1 = arith.constant 0 : i32
    return %arg0, %c0_i32, %c0_i32_0 : i32, i32, i32
  }
}

module attributes {stable_mosaic.version = 11 : i64} {
  func.func @kernel(%arg0: i32, %arg1: memref<1x256x128xf32, #tpu.memory_space<vmem>>, %arg2: memref<128x32xbf16, #tpu.memory_space<vmem>>, %arg3: memref<128x8xf32, #tpu.memory_space<vmem>>, %arg4: memref<256x8xf32, #tpu.memory_space<vmem>>, %arg5: memref<1x256x32xf32, #tpu.memory_space<vmem>>, %arg6: memref<1x256x8xf32, #tpu.memory_space<vmem>>, %arg7: memref<1x1x32xf32, #tpu.memory_space<vmem>>, %arg8: memref<1x1x32xf32, #tpu.memory_space<vmem>>) attributes {dimension_semantics = [#tpu.dimension_semantics<parallel>], iteration_bounds = array<i64: 2>, scalar_prefetch = 0 : i64, scratch_operands = 0 : i64, tpu.core_type = #tpu.core_type<tc>, window_params = [{transform_indices = @transform_0, window_bounds = array<i64: 1, 256, 128>}, {pipeline_mode = #tpu.pipeline_mode<synchronous>, transform_indices = @transform_1, window_bounds = array<i64: 128, 32>}, {pipeline_mode = #tpu.pipeline_mode<synchronous>, transform_indices = @transform_2, window_bounds = array<i64: 128, 8>}, {pipeline_mode = #tpu.pipeline_mode<synchronous>, transform_indices = @transform_3, window_bounds = array<i64: 256, 8>}, {transform_indices = @transform_4, window_bounds = array<i64: 1, 256, 32>}, {transform_indices = @transform_5, window_bounds = array<i64: 1, 256, 8>}, {transform_indices = @transform_6, window_bounds = array<i64: 1, 1, 32>}, {transform_indices = @transform_7, window_bounds = array<i64: 1, 1, 32>}]} {
    %c0 = arith.constant 0 : index
    %c0_0 = arith.constant 0 : index
    %c0_1 = arith.constant 0 : index
    %0 = vector.load %arg1[%c0, %c0_0, %c0_1] : memref<1x256x128xf32, #tpu.memory_space<vmem>>, vector<1x256x128xf32>
    %1 = vector.shape_cast %0 : vector<1x256x128xf32> to vector<256x128xf32>
    %cst = arith.constant 0.000000e+00 : f32
    %2 = vector.broadcast %cst : f32 to vector<256x128xf32>
    %3 = arith.maximumf %1, %2 : vector<256x128xf32>
    %4 = arith.truncf %3 : vector<256x128xf32> to vector<256x128xbf16>
    %c0_2 = arith.constant 0 : index
    %c0_3 = arith.constant 0 : index
    %5 = vector.load %arg2[%c0_2, %c0_3] : memref<128x32xbf16, #tpu.memory_space<vmem>>, vector<128x32xbf16>
    %cst_4 = arith.constant dense<0.000000e+00> : vector<256x32xf32>
    %6 = tpu.matmul %4, %5, %cst_4 {dimension_numbers = #tpu.dot_dimension_numbers<[1], [0], [0], [1], [0, 0, 1, 1], [], []>} : vector<256x128xbf16>, vector<128x32xbf16>, vector<256x32xf32> -> vector<256x32xf32>
    %c0_5 = arith.constant 0 : index
    %c0_6 = arith.constant 0 : index
    %c0_7 = arith.constant 0 : index
    %7 = vector.load %arg5[%c0_5, %c0_6, %c0_7] : memref<1x256x32xf32, #tpu.memory_space<vmem>>, vector<1x256x32xf32>
    %8 = vector.shape_cast %7 : vector<1x256x32xf32> to vector<256x32xf32>
    %9 = vector.shape_cast %6 : vector<256x32xf32> to vector<1x256x32xf32>
    tpu.vector_store %arg5[%c0_5, %c0_6, %c0_7], %9 {strides = array<i32>} : memref<1x256x32xf32, #tpu.memory_space<vmem>>, vector<1x256x32xf32>,
    %cst_8 = arith.constant dense<0.000000e+00> : vector<32xf32>
    %10 = vector.multi_reduction <add>, %6, %cst_8 [0] : vector<256x32xf32> to vector<32xf32>
    %11 = vector.shape_cast %10 : vector<32xf32> to vector<1x32xf32>
    %c0_9 = arith.constant 0 : index
    %c0_10 = arith.constant 0 : index
    %c0_11 = arith.constant 0 : index
    %12 = vector.load %arg7[%c0_9, %c0_10, %c0_11] : memref<1x1x32xf32, #tpu.memory_space<vmem>>, vector<1x1x32xf32>
    %13 = vector.shape_cast %12 : vector<1x1x32xf32> to vector<1x32xf32>
    %14 = vector.shape_cast %11 : vector<1x32xf32> to vector<1x1x32xf32>
    tpu.vector_store %arg7[%c0_9, %c0_10, %c0_11], %14 {strides = array<i32>} : memref<1x1x32xf32, #tpu.memory_space<vmem>>, vector<1x1x32xf32>,
    %15 = arith.mulf %6, %6 : vector<256x32xf32>
    %cst_12 = arith.constant dense<0.000000e+00> : vector<32xf32>
    %16 = vector.multi_reduction <add>, %15, %cst_12 [0] : vector<256x32xf32> to vector<32xf32>
    %17 = vector.shape_cast %16 : vector<32xf32> to vector<1x32xf32>
    %c0_13 = arith.constant 0 : index
    %c0_14 = arith.constant 0 : index
    %c0_15 = arith.constant 0 : index
    %18 = vector.load %arg8[%c0_13, %c0_14, %c0_15] : memref<1x1x32xf32, #tpu.memory_space<vmem>>, vector<1x1x32xf32>
    %19 = vector.shape_cast %18 : vector<1x1x32xf32> to vector<1x32xf32>
    %20 = vector.shape_cast %17 : vector<1x32xf32> to vector<1x1x32xf32>
    tpu.vector_store %arg8[%c0_13, %c0_14, %c0_15], %20 {strides = array<i32>} : memref<1x1x32xf32, #tpu.memory_space<vmem>>, vector<1x1x32xf32>,
    %c0_16 = arith.constant 0 : index
    %c0_17 = arith.constant 0 : index
    %21 = vector.load %arg3[%c0_16, %c0_17] : memref<128x8xf32, #tpu.memory_space<vmem>>, vector<128x8xf32>
    %cst_18 = arith.constant dense<0.000000e+00> : vector<256x8xf32>
    %22 = tpu.matmul %1, %21, %cst_18 {dimension_numbers = #tpu.dot_dimension_numbers<[1], [0], [0], [1], [0, 0, 1, 1], [], []>} : vector<256x128xf32>, vector<128x8xf32>, vector<256x8xf32> -> vector<256x8xf32>
    %c0_19 = arith.constant 0 : index
    %c0_20 = arith.constant 0 : index
    %23 = vector.load %arg4[%c0_19, %c0_20] : memref<256x8xf32, #tpu.memory_space<vmem>>, vector<256x8xf32>
    %24 = arith.mulf %22, %23 : vector<256x8xf32>
    %c0_21 = arith.constant 0 : index
    %c0_22 = arith.constant 0 : index
    %c0_23 = arith.constant 0 : index
    %25 = vector.load %arg6[%c0_21, %c0_22, %c0_23] : memref<1x256x8xf32, #tpu.memory_space<vmem>>, vector<1x256x8xf32>
    %26 = vector.shape_cast %25 : vector<1x256x8xf32> to vector<256x8xf32>
    %27 = vector.shape_cast %24 : vector<256x8xf32> to vector<1x256x8xf32>
    tpu.vector_store %arg6[%c0_21, %c0_22, %c0_23], %27 {strides = array<i32>} : memref<1x256x8xf32, #tpu.memory_space<vmem>>, vector<1x256x8xf32>,
    return
  }
  func.func @transform_0(%arg0: i32) -> (i32, i32, i32) {
    %c0_i32 = arith.constant 0 : i32
    %c0_i32_0 = arith.constant 0 : i32
    %c0_i32_1 = arith.constant 0 : i32
    return %arg0, %c0_i32, %c0_i32_0 : i32, i32, i32
  }
  func.func @transform_1(%arg0: i32) -> (i32, i32) {
    %c0_i32 = arith.constant 0 : i32
    %c0_i32_0 = arith.constant 0 : i32
    %c0_i32_1 = arith.constant 0 : i32
    return %c0_i32, %c0_i32_0 : i32, i32
  }
  func.func @transform_2(%arg0: i32) -> (i32, i32) {
    %c0_i32 = arith.constant 0 : i32
    %c0_i32_0 = arith.constant 0 : i32
    %c0_i32_1 = arith.constant 0 : i32
    return %c0_i32, %c0_i32_0 : i32, i32
  }
  func.func @transform_3(%arg0: i32) -> (i32, i32) {
    %c0_i32 = arith.constant 0 : i32
    %c0_i32_0 = arith.constant 0 : i32
    %c0_i32_1 = arith.constant 0 : i32
    return %c0_i32, %c0_i32_0 : i32, i32
  }
  func.func @transform_4(%arg0: i32) -> (i32, i32, i32) {
    %c0_i32 = arith.constant 0 : i32
    %c0_i32_0 = arith.constant 0 : i32
    %c0_i32_1 = arith.constant 0 : i32
    return %arg0, %c0_i32, %c0_i32_0 : i32, i32, i32
  }
  func.func @transform_5(%arg0: i32) -> (i32, i32, i32) {
    %c0_i32 = arith.constant 0 : i32
    %c0_i32_0 = arith.constant 0 : i32
    %c0_i32_1 = arith.constant 0 : i32
    return %arg0, %c0_i32, %c0_i32_0 : i32, i32, i32
  }
  func.func @transform_6(%arg0: i32) -> (i32, i32, i32) {
    %c0_i32 = arith.constant 0 : i32
    %c0_i32_0 = arith.constant 0 : i32
    %c0_i32_1 = arith.constant 0 : i32
    return %arg0, %c0_i32, %c0_i32_0 : i32, i32, i32
  }
  func.func @transform_7(%arg0: i32) -> (i32, i32, i32) {
    %c0_i32 = arith.constant 0 : i32
    %c0_i32_0 = arith.constant 0 : i32
    %c0_i32_1 = arith.constant 0 : i32
    return %arg0, %c0_i32, %c0_i32_0 : i32, i32, i32
  }
}

module attributes {stable_mosaic.version = 11 : i64} {
  func.func @kernel(%arg0: i32, %arg1: memref<1x256x128xf32, #tpu.memory_space<vmem>>, %arg2: memref<128x16xbf16, #tpu.memory_space<vmem>>, %arg3: memref<128x8xf32, #tpu.memory_space<vmem>>, %arg4: memref<256x8xf32, #tpu.memory_space<vmem>>, %arg5: memref<1x256x16xf32, #tpu.memory_space<vmem>>, %arg6: memref<1x256x8xf32, #tpu.memory_space<vmem>>, %arg7: memref<1x1x16xf32, #tpu.memory_space<vmem>>, %arg8: memref<1x1x16xf32, #tpu.memory_space<vmem>>) attributes {dimension_semantics = [#tpu.dimension_semantics<parallel>], iteration_bounds = array<i64: 2>, scalar_prefetch = 0 : i64, scratch_operands = 0 : i64, tpu.core_type = #tpu.core_type<tc>, window_params = [{transform_indices = @transform_0, window_bounds = array<i64: 1, 256, 128>}, {pipeline_mode = #tpu.pipeline_mode<synchronous>, transform_indices = @transform_1, window_bounds = array<i64: 128, 16>}, {pipeline_mode = #tpu.pipeline_mode<synchronous>, transform_indices = @transform_2, window_bounds = array<i64: 128, 8>}, {pipeline_mode = #tpu.pipeline_mode<synchronous>, transform_indices = @transform_3, window_bounds = array<i64: 256, 8>}, {transform_indices = @transform_4, window_bounds = array<i64: 1, 256, 16>}, {transform_indices = @transform_5, window_bounds = array<i64: 1, 256, 8>}, {transform_indices = @transform_6, window_bounds = array<i64: 1, 1, 16>}, {transform_indices = @transform_7, window_bounds = array<i64: 1, 1, 16>}]} {
    %c0 = arith.constant 0 : index
    %c0_0 = arith.constant 0 : index
    %c0_1 = arith.constant 0 : index
    %0 = vector.load %arg1[%c0, %c0_0, %c0_1] : memref<1x256x128xf32, #tpu.memory_space<vmem>>, vector<1x256x128xf32>
    %1 = vector.shape_cast %0 : vector<1x256x128xf32> to vector<256x128xf32>
    %cst = arith.constant 0.000000e+00 : f32
    %2 = vector.broadcast %cst : f32 to vector<256x128xf32>
    %3 = arith.maximumf %1, %2 : vector<256x128xf32>
    %4 = arith.truncf %3 : vector<256x128xf32> to vector<256x128xbf16>
    %c0_2 = arith.constant 0 : index
    %c0_3 = arith.constant 0 : index
    %5 = vector.load %arg2[%c0_2, %c0_3] : memref<128x16xbf16, #tpu.memory_space<vmem>>, vector<128x16xbf16>
    %cst_4 = arith.constant dense<0.000000e+00> : vector<256x16xf32>
    %6 = tpu.matmul %4, %5, %cst_4 {dimension_numbers = #tpu.dot_dimension_numbers<[1], [0], [0], [1], [0, 0, 1, 1], [], []>} : vector<256x128xbf16>, vector<128x16xbf16>, vector<256x16xf32> -> vector<256x16xf32>
    %c0_5 = arith.constant 0 : index
    %c0_6 = arith.constant 0 : index
    %c0_7 = arith.constant 0 : index
    %7 = vector.load %arg5[%c0_5, %c0_6, %c0_7] : memref<1x256x16xf32, #tpu.memory_space<vmem>>, vector<1x256x16xf32>
    %8 = vector.shape_cast %7 : vector<1x256x16xf32> to vector<256x16xf32>
    %9 = vector.shape_cast %6 : vector<256x16xf32> to vector<1x256x16xf32>
    tpu.vector_store %arg5[%c0_5, %c0_6, %c0_7], %9 {strides = array<i32>} : memref<1x256x16xf32, #tpu.memory_space<vmem>>, vector<1x256x16xf32>,
    %cst_8 = arith.constant dense<0.000000e+00> : vector<16xf32>
    %10 = vector.multi_reduction <add>, %6, %cst_8 [0] : vector<256x16xf32> to vector<16xf32>
    %11 = vector.shape_cast %10 : vector<16xf32> to vector<1x16xf32>
    %c0_9 = arith.constant 0 : index
    %c0_10 = arith.constant 0 : index
    %c0_11 = arith.constant 0 : index
    %12 = vector.load %arg7[%c0_9, %c0_10, %c0_11] : memref<1x1x16xf32, #tpu.memory_space<vmem>>, vector<1x1x16xf32>
    %13 = vector.shape_cast %12 : vector<1x1x16xf32> to vector<1x16xf32>
    %14 = vector.shape_cast %11 : vector<1x16xf32> to vector<1x1x16xf32>
    tpu.vector_store %arg7[%c0_9, %c0_10, %c0_11], %14 {strides = array<i32>} : memref<1x1x16xf32, #tpu.memory_space<vmem>>, vector<1x1x16xf32>,
    %15 = arith.mulf %6, %6 : vector<256x16xf32>
    %cst_12 = arith.constant dense<0.000000e+00> : vector<16xf32>
    %16 = vector.multi_reduction <add>, %15, %cst_12 [0] : vector<256x16xf32> to vector<16xf32>
    %17 = vector.shape_cast %16 : vector<16xf32> to vector<1x16xf32>
    %c0_13 = arith.constant 0 : index
    %c0_14 = arith.constant 0 : index
    %c0_15 = arith.constant 0 : index
    %18 = vector.load %arg8[%c0_13, %c0_14, %c0_15] : memref<1x1x16xf32, #tpu.memory_space<vmem>>, vector<1x1x16xf32>
    %19 = vector.shape_cast %18 : vector<1x1x16xf32> to vector<1x16xf32>
    %20 = vector.shape_cast %17 : vector<1x16xf32> to vector<1x1x16xf32>
    tpu.vector_store %arg8[%c0_13, %c0_14, %c0_15], %20 {strides = array<i32>} : memref<1x1x16xf32, #tpu.memory_space<vmem>>, vector<1x1x16xf32>,
    %c0_16 = arith.constant 0 : index
    %c0_17 = arith.constant 0 : index
    %21 = vector.load %arg3[%c0_16, %c0_17] : memref<128x8xf32, #tpu.memory_space<vmem>>, vector<128x8xf32>
    %cst_18 = arith.constant dense<0.000000e+00> : vector<256x8xf32>
    %22 = tpu.matmul %1, %21, %cst_18 {dimension_numbers = #tpu.dot_dimension_numbers<[1], [0], [0], [1], [0, 0, 1, 1], [], []>} : vector<256x128xf32>, vector<128x8xf32>, vector<256x8xf32> -> vector<256x8xf32>
    %c0_19 = arith.constant 0 : index
    %c0_20 = arith.constant 0 : index
    %23 = vector.load %arg4[%c0_19, %c0_20] : memref<256x8xf32, #tpu.memory_space<vmem>>, vector<256x8xf32>
    %24 = arith.mulf %22, %23 : vector<256x8xf32>
    %c0_21 = arith.constant 0 : index
    %c0_22 = arith.constant 0 : index
    %c0_23 = arith.constant 0 : index
    %25 = vector.load %arg6[%c0_21, %c0_22, %c0_23] : memref<1x256x8xf32, #tpu.memory_space<vmem>>, vector<1x256x8xf32>
    %26 = vector.shape_cast %25 : vector<1x256x8xf32> to vector<256x8xf32>
    %27 = vector.shape_cast %24 : vector<256x8xf32> to vector<1x256x8xf32>
    tpu.vector_store %arg6[%c0_21, %c0_22, %c0_23], %27 {strides = array<i32>} : memref<1x256x8xf32, #tpu.memory_space<vmem>>, vector<1x256x8xf32>,
    return
  }
  func.func @transform_0(%arg0: i32) -> (i32, i32, i32) {
    %c0_i32 = arith.constant 0 : i32
    %c0_i32_0 = arith.constant 0 : i32
    %c0_i32_1 = arith.constant 0 : i32
    return %arg0, %c0_i32, %c0_i32_0 : i32, i32, i32
  }
  func.func @transform_1(%arg0: i32) -> (i32, i32) {
    %c0_i32 = arith.constant 0 : i32
    %c0_i32_0 = arith.constant 0 : i32
    %c0_i32_1 = arith.constant 0 : i32
    return %c0_i32, %c0_i32_0 : i32, i32
  }
  func.func @transform_2(%arg0: i32) -> (i32, i32) {
    %c0_i32 = arith.constant 0 : i32
    %c0_i32_0 = arith.constant 0 : i32
    %c0_i32_1 = arith.constant 0 : i32
    return %c0_i32, %c0_i32_0 : i32, i32
  }
  func.func @transform_3(%arg0: i32) -> (i32, i32) {
    %c0_i32 = arith.constant 0 : i32
    %c0_i32_0 = arith.constant 0 : i32
    %c0_i32_1 = arith.constant 0 : i32
    return %c0_i32, %c0_i32_0 : i32, i32
  }
  func.func @transform_4(%arg0: i32) -> (i32, i32, i32) {
    %c0_i32 = arith.constant 0 : i32
    %c0_i32_0 = arith.constant 0 : i32
    %c0_i32_1 = arith.constant 0 : i32
    return %arg0, %c0_i32, %c0_i32_0 : i32, i32, i32
  }
  func.func @transform_5(%arg0: i32) -> (i32, i32, i32) {
    %c0_i32 = arith.constant 0 : i32
    %c0_i32_0 = arith.constant 0 : i32
    %c0_i32_1 = arith.constant 0 : i32
    return %arg0, %c0_i32, %c0_i32_0 : i32, i32, i32
  }
  func.func @transform_6(%arg0: i32) -> (i32, i32, i32) {
    %c0_i32 = arith.constant 0 : i32
    %c0_i32_0 = arith.constant 0 : i32
    %c0_i32_1 = arith.constant 0 : i32
    return %arg0, %c0_i32, %c0_i32_0 : i32, i32, i32
  }
  func.func @transform_7(%arg0: i32) -> (i32, i32, i32) {
    %c0_i32 = arith.constant 0 : i32
    %c0_i32_0 = arith.constant 0 : i32
    %c0_i32_1 = arith.constant 0 : i32
    return %arg0, %c0_i32, %c0_i32_0 : i32, i32, i32
  }
}

</mosaic_0001>

<llo_original>
// kernel: _lambda_.4
$region0: #{_lambda_.4}
  #allocation0 [shape = 'u32[]', space=smem, size = 0x4, offset = 0x4, fixed_abs, tag = 'smem constant byte address 0x4 - core index']
  #allocation1 [shape = 'u32[144,128]{1,0:T(1,128)}', space=vmem, size = 0x12000, scoped, tag = 'internal scratch']
  %s0 = inlined_call_operand.vmem [shape: f32[2,256,128], index: 0, kind: input, shape index: {}]
  %s1 = inlined_call_operand.vmem [shape: bf16[128,32], index: 1, kind: input, shape index: {}]
  %s2 = inlined_call_operand.vmem [shape: f32[128,8], index: 2, kind: input, shape index: {}]
  %s3 = inlined_call_operand.vmem [shape: f32[256,8], index: 3, kind: input, shape index: {}]
  %s4 = inlined_call_operand.vmem [shape: f32[2,256,32], index: 4, kind: output, shape index: {0}]
  %s5 = inlined_call_operand.vmem [shape: f32[2,256,8], index: 5, kind: output, shape index: {1}]
  %s6 = inlined_call_operand.vmem [shape: f32[2,1,32], index: 6, kind: output, shape index: {2}]
  %s7 = inlined_call_operand.vmem [shape: f32[2,1,32], index: 7, kind: output, shape index: {3}]
  %8 = xla_tuple %s4, %s5, %s6, %s7
  %s9 = sld [smem:[#allocation0]]
  $region73: #{_lambda_.4} parent=0
    _
  %s11 = ssub.s32 1, %s9
  %s12 = scalar_select 0, %s11, %s9
  loop: start=0, step=1, limit=4
  $region2: #{_lambda_.4} parent=0 // loop_pre_header
    _
  $region3: #{_lambda_.4} parent=0 // loop_header
    %s14 = sphi 0, %s18
    %p15 = scmp.ge.s32.totalorder %s14, 4
    %s24 = sphi 0, %s26
    %s27 = sphi 0, %s24
    %s28 = sphi 0, %s27
    %s44 = sphi 0, %s28
    %s48 = sphi 0, %s48
    %s50 = sphi 0, %s48
    %s51 = sphi 0, %s50
    %s65 = sphi 0, %s51
    %s69 = sphi 0, %s69
    %s71 = sphi 0, %s69
    %s72 = sphi 0, %s71
    %s86 = sphi 0, %s72
    %s90 = sphi 0, %s90
    %s92 = sphi 0, %s90
    %s93 = sphi 0, %s92
    %s107 = sphi 0, %s93
    %s113 = sphi 0, %s115
    %s116 = sphi 0, %s113
    %s117 = sphi 0, %s116
    %s133 = sphi 0, %s117
    %s139 = sphi 0, %s141
    %s142 = sphi 0, %s139
    %s143 = sphi 0, %s142
    %s159 = sphi 0, %s143
    %s165 = sphi 0, %s167
    %s168 = sphi 0, %s165
    %s169 = sphi 0, %s168
    %s185 = sphi 0, %s169
    %s191 = sphi 0, %s193
    %s194 = sphi 0, %s191
    %s195 = sphi 0, %s194
    %s211 = sphi 0, %s195
  $region4: #{_lambda_.4} parent=0 // loop_header_branch
    %17 = sbr.rel (%p15) target = $region8
  $region5: #{_lambda_.4} parent=0 // loop_body
    %s19 = ssub.s32 %s14, 1
    %s20 = ssub.s32 %s14, 2
    %s21 = sadd.s32 %s14, 1
    %s22 = ssub.s32 %s14, %s21
    %p23 = scmp.eq.s32.totalorder %s22, 0
    %s25 = sadd.s32 %s24, 1
    %s26 = scalar_select %p23, %s24, %s25
    %p29 = pneg %p23
    %p30 = scmp.eq.s32.totalorder %s14, 1
    %p31 = por %p29, %p30
    %p32 = scmp.ne.s32.totalorder %s24, %s27
    %p33 = scmp.eq.s32.totalorder %s14, 0
    %p34 = por %p32, %p33
    %p35 = scmp.ne.s32.totalorder %s24, %s27
    %p36 = scmp.eq.s32.totalorder %s19, 1
    %p37 = por %p35, %p36
    %p38 = scmp.ne.s32.totalorder %s27, %s28
    %p39 = scmp.eq.s32.totalorder %s19, 0
    %p40 = por %p38, %p39
    %p41 = scmp.ne.s32.totalorder %s27, %s28
    %p42 = scmp.eq.s32.totalorder %s20, 1
    %p43 = por %p41, %p42
    %p45 = scmp.ne.s32.totalorder %s28, %s44
    %p46 = scmp.eq.s32.totalorder %s20, 0
    %p47 = por %p45, %p46
    %s49 = sadd.s32 %s48, 1
    %p52 = scmp.eq.s32.totalorder %s14, 1
    %p53 = scmp.ne.s32.totalorder %s48, %s50
    %p54 = scmp.eq.s32.totalorder %s14, 0
    %p55 = por %p53, %p54
    %p56 = scmp.ne.s32.totalorder %s48, %s50
    %p57 = scmp.eq.s32.totalorder %s19, 1
    %p58 = por %p56, %p57
    %p59 = scmp.ne.s32.totalorder %s50, %s51
    %p60 = scmp.eq.s32.totalorder %s19, 0
    %p61 = por %p59, %p60
    %p62 = scmp.ne.s32.totalorder %s50, %s51
    %p63 = scmp.eq.s32.totalorder %s20, 1
    %p64 = por %p62, %p63
    %p66 = scmp.ne.s32.totalorder %s51, %s65
    %p67 = scmp.eq.s32.totalorder %s20, 0
    %p68 = por %p66, %p67
    %s70 = sadd.s32 %s69, 1
    %p73 = scmp.eq.s32.totalorder %s14, 1
    %p74 = scmp.ne.s32.totalorder %s69, %s71
    %p75 = scmp.eq.s32.totalorder %s14, 0
    %p76 = por %p74, %p75
    %p77 = scmp.ne.s32.totalorder %s69, %s71
    %p78 = scmp.eq.s32.totalorder %s19, 1
    %p79 = por %p77, %p78
    %p80 = scmp.ne.s32.totalorder %s71, %s72
    %p81 = scmp.eq.s32.totalorder %s19, 0
    %p82 = por %p80, %p81
    %p83 = scmp.ne.s32.totalorder %s71, %s72
    %p84 = scmp.eq.s32.totalorder %s20, 1
    %p85 = por %p83, %p84
    %p87 = scmp.ne.s32.totalorder %s72, %s86
    %p88 = scmp.eq.s32.totalorder %s20, 0
    %p89 = por %p87, %p88
    %s91 = sadd.s32 %s90, 1
    %p94 = scmp.eq.s32.totalorder %s14, 1
    %p95 = scmp.ne.s32.totalorder %s90, %s92
    %p96 = scmp.eq.s32.totalorder %s14, 0
    %p97 = por %p95, %p96
    %p98 = scmp.ne.s32.totalorder %s90, %s92
    %p99 = scmp.eq.s32.totalorder %s19, 1
    %p100 = por %p98, %p99
    %p101 = scmp.ne.s32.totalorder %s92, %s93
    %p102 = scmp.eq.s32.totalorder %s19, 0
    %p103 = por %p101, %p102
    %p104 = scmp.ne.s32.totalorder %s92, %s93
    %p105 = scmp.eq.s32.totalorder %s20, 1
    %p106 = por %p104, %p105
    %p108 = scmp.ne.s32.totalorder %s93, %s107
    %p109 = scmp.eq.s32.totalorder %s20, 0
    %p110 = por %p108, %p109
    %s111 = ssub.s32 %s14, %s21
    %p112 = scmp.eq.s32.totalorder %s111, 0
    %s114 = sadd.s32 %s113, 1
    %s115 = scalar_select %p112, %s113, %s114
    %p118 = pneg %p112
    %p119 = scmp.eq.s32.totalorder %s14, 1
    %p120 = por %p118, %p119
    %p121 = scmp.ne.s32.totalorder %s113, %s116
    %p122 = scmp.eq.s32.totalorder %s14, 0
    %p123 = por %p121, %p122
    %p124 = scmp.ne.s32.totalorder %s113, %s116
    %p125 = scmp.eq.s32.totalorder %s19, 1
    %p126 = por %p124, %p125
    %p127 = scmp.ne.s32.totalorder %s116, %s117
    %p128 = scmp.eq.s32.totalorder %s19, 0
    %p129 = por %p127, %p128
    %p130 = scmp.ne.s32.totalorder %s116, %s117
    %p131 = scmp.eq.s32.totalorder %s20, 1
    %p132 = por %p130, %p131
    %p134 = scmp.ne.s32.totalorder %s117, %s133
    %p135 = scmp.eq.s32.totalorder %s20, 0
    %p136 = por %p134, %p135
    %s137 = ssub.s32 %s14, %s21
    %p138 = scmp.eq.s32.totalorder %s137, 0
    %s140 = sadd.s32 %s139, 1
    %s141 = scalar_select %p138, %s139, %s140
    %p144 = pneg %p138
    %p145 = scmp.eq.s32.totalorder %s14, 1
    %p146 = por %p144, %p145
    %p147 = scmp.ne.s32.totalorder %s139, %s142
    %p148 = scmp.eq.s32.totalorder %s14, 0
    %p149 = por %p147, %p148
    %p150 = scmp.ne.s32.totalorder %s139, %s142
    %p151 = scmp.eq.s32.totalorder %s19, 1
    %p152 = por %p150, %p151
    %p153 = scmp.ne.s32.totalorder %s142, %s143
    %p154 = scmp.eq.s32.totalorder %s19, 0
    %p155 = por %p153, %p154
    %p156 = scmp.ne.s32.totalorder %s142, %s143
    %p157 = scmp.eq.s32.totalorder %s20, 1
    %p158 = por %p156, %p157
    %p160 = scmp.ne.s32.totalorder %s143, %s159
    %p161 = scmp.eq.s32.totalorder %s20, 0
    %p162 = por %p160, %p161
    %s163 = ssub.s32 %s14, %s21
    %p164 = scmp.eq.s32.totalorder %s163, 0
    %s166 = sadd.s32 %s165, 1
    %s167 = scalar_select %p164, %s165, %s166
    %p170 = pneg %p164
    %p171 = scmp.eq.s32.totalorder %s14, 1
    %p172 = por %p170, %p171
    %p173 = scmp.ne.s32.totalorder %s165, %s168
    %p174 = scmp.eq.s32.totalorder %s14, 0
    %p175 = por %p173, %p174
    %p176 = scmp.ne.s32.totalorder %s165, %s168
    %p177 = scmp.eq.s32.totalorder %s19, 1
    %p178 = por %p176, %p177
    %p179 = scmp.ne.s32.totalorder %s168, %s169
    %p180 = scmp.eq.s32.totalorder %s19, 0
    %p181 = por %p179, %p180
    %p182 = scmp.ne.s32.totalorder %s168, %s169
    %p183 = scmp.eq.s32.totalorder %s20, 1
    %p184 = por %p182, %p183
    %p186 = scmp.ne.s32.totalorder %s169, %s185
    %p187 = scmp.eq.s32.totalorder %s20, 0
    %p188 = por %p186, %p187
    %s189 = ssub.s32 %s14, %s21
    %p190 = scmp.eq.s32.totalorder %s189, 0
    %s192 = sadd.s32 %s191, 1
    %s193 = scalar_select %p190, %s191, %s192
    %p196 = pneg %p190
    %p197 = scmp.eq.s32.totalorder %s14, 1
    %p198 = por %p196, %p197
    %p199 = scmp.ne.s32.totalorder %s191, %s194
    %p200 = scmp.eq.s32.totalorder %s14, 0
    %p201 = por %p199, %p200
    %p202 = scmp.ne.s32.totalorder %s191, %s194
    %p203 = scmp.eq.s32.totalorder %s19, 1
    %p204 = por %p202, %p203
    %p205 = scmp.ne.s32.totalorder %s194, %s195
    %p206 = scmp.eq.s32.totalorder %s19, 0
    %p207 = por %p205, %p206
    %p208 = scmp.ne.s32.totalorder %s194, %s195
    %p209 = scmp.eq.s32.totalorder %s20, 1
    %p210 = por %p208, %p209
    %p212 = scmp.ne.s32.totalorder %s195, %s211
    %p213 = scmp.eq.s32.totalorder %s20, 0
    %p214 = por %p212, %p213
    %p215 = scmp.le.s32.totalorder 1, %s14
    %p216 = scmp.lt.s32.totalorder %s14, 3
    %p217 = pnand %p215, %p216
    %p218 = pneg %p217
    // Predicated region
    $region9: #{_lambda_.4} parent=5 // pred_check
      _
    $region10: #{_lambda_.4} parent=5 // pred_check_branch
      %220 = sbr.rel (%p217) target = $region12
    $region11: #{_lambda_.4} parent=5 // pred_region
      %s221 = ssub.s32 %s14, 1
      // Predicated region
      $region13: #{_lambda_.4} parent=11 // pred_check
        %p222 = pneg %p61
      $region14: #{_lambda_.4} parent=11 // pred_check_branch
        %224 = sbr.rel (%p222) target = $region16
      $region15: #{_lambda_.4} parent=11 // pred_region
        _
      $region16: #{_lambda_.4} parent=11 // pred_fallthru
        _
      // Predicated region
      $region17: #{_lambda_.4} parent=11 // pred_check
        %p225 = pneg %p82
      $region18: #{_lambda_.4} parent=11 // pred_check_branch
        %227 = sbr.rel (%p225) target = $region20
      $region19: #{_lambda_.4} parent=11 // pred_region
        _
      $region20: #{_lambda_.4} parent=11 // pred_fallthru
        _
      // Predicated region
      $region21: #{_lambda_.4} parent=11 // pred_check
        %p228 = pneg %p103
      $region22: #{_lambda_.4} parent=11 // pred_check_branch
        %230 = sbr.rel (%p228) target = $region24
      $region23: #{_lambda_.4} parent=11 // pred_region
        _
      $region24: #{_lambda_.4} parent=11 // pred_fallthru
        _
    $region12: #{_lambda_.4} parent=5 // pred_fallthru
      _
    %p231 = scmp.lt.s32.totalorder %s14, 2
    // Predicated region
    $region25: #{_lambda_.4} parent=5 // pred_check
      %p232 = pneg %p231
    $region26: #{_lambda_.4} parent=5 // pred_check_branch
      %234 = sbr.rel (%p232) target = $region28
    $region27: #{_lambda_.4} parent=5 // pred_region
      // Predicated region
      $region29: #{_lambda_.4} parent=27 // pred_check
        %p235 = pneg %p34
      $region30: #{_lambda_.4} parent=27 // pred_check_branch
        %237 = sbr.rel (%p235) target = $region32
      $region31: #{_lambda_.4} parent=27 // pred_region
        %p238 = scmp.lt.s32.totalorder %s14, 1
        %s239 = scalar_select %p238, %s14, 1
        %s240 = smul.addr %s239, 32
        %s241 = smul.addr %s240, 8
        %s242 = scalar_lea.vmem %s0, %s241
      $region32: #{_lambda_.4} parent=27 // pred_fallthru
        _
    $region28: #{_lambda_.4} parent=5 // pred_fallthru
      _
    %p243 = scmp.le.s32.totalorder 1, %s14
    %p244 = scmp.lt.s32.totalorder %s14, 3
    %p245 = pnand %p243, %p244
    %p246 = pneg %p245
    // Predicated region
    $region33: #{_lambda_.4} parent=5 // pred_check
      _
    $region34: #{_lambda_.4} parent=5 // pred_check_branch
      %248 = sbr.rel (%p245) target = $region36
    $region35: #{_lambda_.4} parent=5 // pred_region
      %s249 = ssub.s32 %s14, 1
      %p250 = scmp.lt.s32.totalorder %s19, 1
      %s251 = scalar_select %p250, %s19, 1
      %s252 = smul.addr %s251, 32
      %s253 = smul.addr %s252, 8
      %s254 = scalar_lea.vmem %s0, %s253
      %p255 = pneg %p40
      %p256 = pneg %p37
      %p257 = pneg %p61
      %p258 = pneg %p58
      %p259 = pneg %p82
      %p260 = pneg %p79
      %p261 = pneg %p103
      %p262 = pneg %p100
      %p263 = pneg %p129
      %p264 = pneg %p126
      %p265 = scmp.lt.s32.totalorder %s19, 1
      %s266 = scalar_select %p265, %s19, 1
      %s267 = smul.addr %s266, 32
      %s268 = smul.addr %s267, 8
      %s269 = scalar_lea.vmem %s4, %s268
      %p270 = pneg %p155
      %p271 = pneg %p152
      %p272 = scmp.lt.s32.totalorder %s19, 1
      %s273 = scalar_select %p272, %s19, 1
      %s274 = smul.addr %s273, 32
      %s275 = smul.addr %s274, 8
      %s276 = scalar_lea.vmem %s5, %s275
      %p277 = pneg %p181
      %p278 = pneg %p178
      %p279 = scmp.lt.s32.totalorder %s19, 1
      %s280 = scalar_select %p279, %s19, 1
      %s281 = scalar_lea.vmem %s6, %s280
      %p282 = pneg %p207
      %p283 = pneg %p204
      %p284 = scmp.lt.s32.totalorder %s19, 1
      %s285 = scalar_select %p284, %s19, 1
      %s286 = scalar_lea.vmem %s7, %s285
      %p287 = scmp.lt.s32.totalorder %s19, 1
      %s288 = scalar_select %p287, %s19, 1
      %s289 = smul.addr %s288, 32
      %s290 = smul.addr %s289, 8
      %s291 = scalar_lea.vmem %s0, %s290
      %p292 = scmp.lt.s32.totalorder %s19, 1
      %s293 = scalar_select %p292, %s19, 1
      %s294 = smul.addr %s293, 32
      %s295 = smul.addr %s294, 8
      %s296 = scalar_lea.vmem %s4, %s295
      %p297 = scmp.lt.s32.totalorder %s19, 1
      %s298 = scalar_select %p297, %s19, 1
      %s299 = smul.addr %s298, 32
      %s300 = smul.addr %s299, 8
      %s301 = scalar_lea.vmem %s5, %s300
      %p302 = scmp.lt.s32.totalorder %s19, 1
      %s303 = scalar_select %p302, %s19, 1
      %s304 = scalar_lea.vmem %s6, %s303
      %p305 = scmp.lt.s32.totalorder %s19, 1
      %s306 = scalar_select %p305, %s19, 1
      %s307 = scalar_lea.vmem %s7, %s306
      %v309 = vld [vmem:[%s291] sm:$0xff]
      %v310 = vld [vmem:[%s291 + $0x8] sm:$0xff]
      %v311 = vld [vmem:[%s291 + $0x10] sm:$0xff]
      %v312 = vld [vmem:[%s291 + $0x18] sm:$0xff]
      %v313 = vld [vmem:[%s291 + $0x20] sm:$0xff]
      %v314 = vld [vmem:[%s291 + $0x28] sm:$0xff]
      %v315 = vld [vmem:[%s291 + $0x30] sm:$0xff]
      %v316 = vld [vmem:[%s291 + $0x38] sm:$0xff]
      %v317 = vld [vmem:[%s291 + $0x40] sm:$0xff]
      %v318 = vld [vmem:[%s291 + $0x48] sm:$0xff]
      %v319 = vld [vmem:[%s291 + $0x50] sm:$0xff]
      %v320 = vld [vmem:[%s291 + $0x58] sm:$0xff]
      %v321 = vld [vmem:[%s291 + $0x60] sm:$0xff]
      %v322 = vld [vmem:[%s291 + $0x68] sm:$0xff]
      %v323 = vld [vmem:[%s291 + $0x70] sm:$0xff]
      %v324 = vld [vmem:[%s291 + $0x78] sm:$0xff]
      %v325 = vld [vmem:[%s291 + $0x80] sm:$0xff]
      %v326 = vld [vmem:[%s291 + $0x88] sm:$0xff]
      %v327 = vld [vmem:[%s291 + $0x90] sm:$0xff]
      %v328 = vld [vmem:[%s291 + $0x98] sm:$0xff]
      %v329 = vld [vmem:[%s291 + $0xa0] sm:$0xff]
      %v330 = vld [vmem:[%s291 + $0xa8] sm:$0xff]
      %v331 = vld [vmem:[%s291 + $0xb0] sm:$0xff]
      %v332 = vld [vmem:[%s291 + $0xb8] sm:$0xff]
      %v333 = vld [vmem:[%s291 + $0xc0] sm:$0xff]
      %v334 = vld [vmem:[%s291 + $0xc8] sm:$0xff]
      %v335 = vld [vmem:[%s291 + $0xd0] sm:$0xff]
      %v336 = vld [vmem:[%s291 + $0xd8] sm:$0xff]
      %v337 = vld [vmem:[%s291 + $0xe0] sm:$0xff]
      %v338 = vld [vmem:[%s291 + $0xe8] sm:$0xff]
      %v339 = vld [vmem:[%s291 + $0xf0] sm:$0xff]
      %v340 = vld [vmem:[%s291 + $0xf8] sm:$0xff]
      %v341 = vmax.f32 %v309, 0.0
      %v342 = vmax.f32 %v310, 0.0
      %v343 = vmax.f32 %v311, 0.0
      %v344 = vmax.f32 %v312, 0.0
      %v345 = vmax.f32 %v313, 0.0
      %v346 = vmax.f32 %v314, 0.0
      %v347 = vmax.f32 %v315, 0.0
      %v348 = vmax.f32 %v316, 0.0
      %v349 = vmax.f32 %v317, 0.0
      %v350 = vmax.f32 %v318, 0.0
      %v351 = vmax.f32 %v319, 0.0
      %v352 = vmax.f32 %v320, 0.0
      %v353 = vmax.f32 %v321, 0.0
      %v354 = vmax.f32 %v322, 0.0
      %v355 = vmax.f32 %v323, 0.0
      %v356 = vmax.f32 %v324, 0.0
      %v357 = vmax.f32 %v325, 0.0
      %v358 = vmax.f32 %v326, 0.0
      %v359 = vmax.f32 %v327, 0.0
      %v360 = vmax.f32 %v328, 0.0
      %v361 = vmax.f32 %v329, 0.0
      %v362 = vmax.f32 %v330, 0.0
      %v363 = vmax.f32 %v331, 0.0
      %v364 = vmax.f32 %v332, 0.0
      %v365 = vmax.f32 %v333, 0.0
      %v366 = vmax.f32 %v334, 0.0
      %v367 = vmax.f32 %v335, 0.0
      %v368 = vmax.f32 %v336, 0.0
      %v369 = vmax.f32 %v337, 0.0
      %v370 = vmax.f32 %v338, 0.0
      %v371 = vmax.f32 %v339, 0.0
      %v372 = vmax.f32 %v340, 0.0
      %v373 = vpack.c.bf16 %v342, %v341
      %v374 = vpack.c.bf16 %v344, %v343
      %v375 = vpack.c.bf16 %v346, %v345
      %v376 = vpack.c.bf16 %v348, %v347
      %v377 = vpack.c.bf16 %v350, %v349
      %v378 = vpack.c.bf16 %v352, %v351
      %v379 = vpack.c.bf16 %v354, %v353
      %v380 = vpack.c.bf16 %v356, %v355
      %v381 = vpack.c.bf16 %v358, %v357
      %v382 = vpack.c.bf16 %v360, %v359
      %v383 = vpack.c.bf16 %v362, %v361
      %v384 = vpack.c.bf16 %v364, %v363
      %v385 = vpack.c.bf16 %v366, %v365
      %v386 = vpack.c.bf16 %v368, %v367
      %v387 = vpack.c.bf16 %v370, %v369
      %v388 = vpack.c.bf16 %v372, %v371
      %v389 = vld [vmem:[%s1] sm:$0xf]
      %v390 = vld [vmem:[%s1 + $0x4] sm:$0xf]
      %v391 = vld [vmem:[%s1 + $0x8] sm:$0xf]
      %v392 = vld [vmem:[%s1 + $0xc] sm:$0xf]
      %v393 = vld [vmem:[%s1 + $0x10] sm:$0xf]
      %v394 = vld [vmem:[%s1 + $0x14] sm:$0xf]
      %v395 = vld [vmem:[%s1 + $0x18] sm:$0xf]
      %v396 = vld [vmem:[%s1 + $0x1c] sm:$0xf]
      %v397 = vld [vmem:[%s1 + $0x20] sm:$0xf]
      %v398 = vld [vmem:[%s1 + $0x24] sm:$0xf]
      %v399 = vld [vmem:[%s1 + $0x28] sm:$0xf]
      %v400 = vld [vmem:[%s1 + $0x2c] sm:$0xf]
      %v401 = vld [vmem:[%s1 + $0x30] sm:$0xf]
      %v402 = vld [vmem:[%s1 + $0x34] sm:$0xf]
      %v403 = vld [vmem:[%s1 + $0x38] sm:$0xf]
      %v404 = vld [vmem:[%s1 + $0x3c] sm:$0xf]
      %v421 = vunpack.c.l.b16 %v389
      %v422 = vunpack.c.l.b16 %v390
      %v423 = vunpack.c.l.b16 %v391
      %v424 = vunpack.c.l.b16 %v392
      %v425 = vunpack.c.l.b16 %v393
      %v426 = vunpack.c.l.b16 %v394
      %v427 = vunpack.c.l.b16 %v395
      %v428 = vunpack.c.l.b16 %v396
      %v429 = vunpack.c.l.b16 %v397
      %v430 = vunpack.c.l.b16 %v398
      %v431 = vunpack.c.l.b16 %v399
      %v432 = vunpack.c.l.b16 %v400
      %v433 = vunpack.c.l.b16 %v401
      %v434 = vunpack.c.l.b16 %v402
      %v435 = vunpack.c.l.b16 %v403
      %v436 = vunpack.c.l.b16 %v404
      %v437 = vpack.c.b16 %v422, %v421
      %v438 = vpack.c.b16 %v424, %v423
      %v439 = vpack.c.b16 %v426, %v425
      %v440 = vpack.c.b16 %v428, %v427
      %v441 = vpack.c.b16 %v430, %v429
      %v442 = vpack.c.b16 %v432, %v431
      %v443 = vpack.c.b16 %v434, %v433
      %v444 = vpack.c.b16 %v436, %v435
      %453 = vmatprep.subr.bf16.mxu0 0
      %454 = vmatpush1.bf16.msra.mxu0 %v437
      %455 = vmatprep.subr.bf16.mxu0 0
      %456 = vmatpush1.bf16.msra.mxu0 %v438
      %457 = vmatprep.subr.bf16.mxu0 0
      %458 = vmatpush1.bf16.msra.mxu0 %v439
      %459 = vmatprep.subr.bf16.mxu0 0
      %460 = vmatpush1.bf16.msra.mxu0 %v440
      %461 = vmatprep.subr.bf16.mxu0 0
      %462 = vmatpush1.bf16.msra.mxu0 %v441
      %463 = vmatprep.subr.bf16.mxu0 0
      %464 = vmatpush1.bf16.msra.mxu0 %v442
      %465 = vmatprep.subr.bf16.mxu0 0
      %466 = vmatpush1.bf16.msra.mxu0 %v443
      %467 = vmatprep.subr.bf16.mxu0 0
      %468 = vmatpush1.bf16.msra.mxu0 %v444
      %469 = vmatprep.subr.bf16.mxu0 0
      %470 = vmatpush1.bf16.msra.mxu0 0
      %471 = vmatprep.subr.bf16.mxu0 0
      %472 = vmatpush1.bf16.msra.mxu0 0
      %473 = vmatprep.subr.bf16.mxu0 0
      %474 = vmatpush1.bf16.msra.mxu0 0
      %475 = vmatprep.subr.bf16.mxu0 0
      %476 = vmatpush1.bf16.msra.mxu0 0
      %477 = vmatprep.subr.bf16.mxu0 0
      %478 = vmatpush1.bf16.msra.mxu0 0
      %479 = vmatprep.subr.bf16.mxu0 0
      %480 = vmatpush1.bf16.msra.mxu0 0
      %481 = vmatprep.subr.bf16.mxu0 0
      %482 = vmatpush1.bf16.msra.mxu0 0
      %483 = vmatprep.subr.bf16.mxu0 0
      %484 = vmatpush1.bf16.msra.mxu0 0
      %485 = vmatprep.mubr.bf16.mxu0 0
      %486 = vmatmul.mubr.bf16.gmra.mrb[0].mxu0 %v373
      %v487 = vpop.f32.mrb[0].mxu0
      %v488 = vadd.f32 0.0, %v487
      %v489 = vpop.f32.mrb[0].mxu0
      %v490 = vpop.f32.mrb[0].mxu0
      %v491 = vadd.f32 0.0, %v490
      %v492 = vpop.f32.mrb[0].mxu0
      %493 = vmatprep.mubr.bf16.mxu0 0
      %494 = vmatmul.mubr.bf16.gmra.mrb[0].mxu0 %v374
      %v495 = vpop.f32.mrb[0].mxu0
      %v496 = vadd.f32 0.0, %v495
      %v497 = vpop.f32.mrb[0].mxu0
      %v498 = vpop.f32.mrb[0].mxu0
      %v499 = vadd.f32 0.0, %v498
      %v500 = vpop.f32.mrb[0].mxu0
      %501 = vmatprep.mubr.bf16.mxu0 0
      %502 = vmatmul.mubr.bf16.gmra.mrb[0].mxu0 %v375
      %v503 = vpop.f32.mrb[0].mxu0
      %v504 = vadd.f32 0.0, %v503
      %v505 = vpop.f32.mrb[0].mxu0
      %v506 = vpop.f32.mrb[0].mxu0
      %v507 = vadd.f32 0.0, %v506
      %v508 = vpop.f32.mrb[0].mxu0
      %509 = vmatprep.mubr.bf16.mxu0 0
      %510 = vmatmul.mubr.bf16.gmra.mrb[0].mxu0 %v376
      %v511 = vpop.f32.mrb[0].mxu0
      %v512 = vadd.f32 0.0, %v511
      %v513 = vpop.f32.mrb[0].mxu0
      %v514 = vpop.f32.mrb[0].mxu0
      %v515 = vadd.f32 0.0, %v514
      %v516 = vpop.f32.mrb[0].mxu0
      %517 = vmatprep.mubr.bf16.mxu0 0
      %518 = vmatmul.mubr.bf16.gmra.mrb[0].mxu0 %v377
      %v519 = vpop.f32.mrb[0].mxu0
      %v520 = vadd.f32 0.0, %v519
      %v521 = vpop.f32.mrb[0].mxu0
      %v522 = vpop.f32.mrb[0].mxu0
      %v523 = vadd.f32 0.0, %v522
      %v524 = vpop.f32.mrb[0].mxu0
      %525 = vmatprep.mubr.bf16.mxu0 0
      %526 = vmatmul.mubr.bf16.gmra.mrb[0].mxu0 %v378
      %v527 = vpop.f32.mrb[0].mxu0
      %v528 = vadd.f32 0.0, %v527
      %v529 = vpop.f32.mrb[0].mxu0
      %v530 = vpop.f32.mrb[0].mxu0
      %v531 = vadd.f32 0.0, %v530
      %v532 = vpop.f32.mrb[0].mxu0
      %533 = vmatprep.mubr.bf16.mxu0 0
      %534 = vmatmul.mubr.bf16.gmra.mrb[0].mxu0 %v379
      %v535 = vpop.f32.mrb[0].mxu0
      %v536 = vadd.f32 0.0, %v535
      %v537 = vpop.f32.mrb[0].mxu0
      %v538 = vpop.f32.mrb[0].mxu0
      %v539 = vadd.f32 0.0, %v538
      %v540 = vpop.f32.mrb[0].mxu0
      %541 = vmatprep.mubr.bf16.mxu0 0
      %542 = vmatmul.mubr.bf16.gmra.mrb[0].mxu0 %v380
      %v543 = vpop.f32.mrb[0].mxu0
      %v544 = vadd.f32 0.0, %v543
      %v545 = vpop.f32.mrb[0].mxu0
      %v546 = vpop.f32.mrb[0].mxu0
      %v547 = vadd.f32 0.0, %v546
      %v548 = vpop.f32.mrb[0].mxu0
      %549 = vmatprep.mubr.bf16.mxu0 0
      %550 = vmatmul.mubr.bf16.gmra.mrb[0].mxu0 %v381
      %v551 = vpop.f32.mrb[0].mxu0
      %v552 = vadd.f32 0.0, %v551
      %v553 = vpop.f32.mrb[0].mxu0
      %v554 = vpop.f32.mrb[0].mxu0
      %v555 = vadd.f32 0.0, %v554
      %v556 = vpop.f32.mrb[0].mxu0
      %557 = vmatprep.mubr.bf16.mxu0 0
      %558 = vmatmul.mubr.bf16.gmra.mrb[0].mxu0 %v382
      %v559 = vpop.f32.mrb[0].mxu0
      %v560 = vadd.f32 0.0, %v559
      %v561 = vpop.f32.mrb[0].mxu0
      %v562 = vpop.f32.mrb[0].mxu0
      %v563 = vadd.f32 0.0, %v562
      %v564 = vpop.f32.mrb[0].mxu0
      %565 = vmatprep.mubr.bf16.mxu0 0
      %566 = vmatmul.mubr.bf16.gmra.mrb[0].mxu0 %v383
      %v567 = vpop.f32.mrb[0].mxu0
      %v568 = vadd.f32 0.0, %v567
      %v569 = vpop.f32.mrb[0].mxu0
      %v570 = vpop.f32.mrb[0].mxu0
      %v571 = vadd.f32 0.0, %v570
      %v572 = vpop.f32.mrb[0].mxu0
      %573 = vmatprep.mubr.bf16.mxu0 0
      %574 = vmatmul.mubr.bf16.gmra.mrb[0].mxu0 %v384
      %v575 = vpop.f32.mrb[0].mxu0
      %v576 = vadd.f32 0.0, %v575
      %v577 = vpop.f32.mrb[0].mxu0
      %v578 = vpop.f32.mrb[0].mxu0
      %v579 = vadd.f32 0.0, %v578
      %v580 = vpop.f32.mrb[0].mxu0
      %581 = vmatprep.mubr.bf16.mxu0 0
      %582 = vmatmul.mubr.bf16.gmra.mrb[0].mxu0 %v385
      %v583 = vpop.f32.mrb[0].mxu0
      %v584 = vadd.f32 0.0, %v583
      %v585 = vpop.f32.mrb[0].mxu0
      %v586 = vpop.f32.mrb[0].mxu0
      %v587 = vadd.f32 0.0, %v586
      %v588 = vpop.f32.mrb[0].mxu0
      %589 = vmatprep.mubr.bf16.mxu0 0
      %590 = vmatmul.mubr.bf16.gmra.mrb[0].mxu0 %v386
      %v591 = vpop.f32.mrb[0].mxu0
      %v592 = vadd.f32 0.0, %v591
      %v593 = vpop.f32.mrb[0].mxu0
      %v594 = vpop.f32.mrb[0].mxu0
      %v595 = vadd.f32 0.0, %v594
      %v596 = vpop.f32.mrb[0].mxu0
      %597 = vmatprep.mubr.bf16.mxu0 0
      %598 = vmatmul.mubr.bf16.gmra.mrb[0].mxu0 %v387
      %v599 = vpop.f32.mrb[0].mxu0
      %v600 = vadd.f32 0.0, %v599
      %v601 = vpop.f32.mrb[0].mxu0
      %v602 = vpop.f32.mrb[0].mxu0
      %v603 = vadd.f32 0.0, %v602
      %v604 = vpop.f32.mrb[0].mxu0
      %605 = vmatprep.mubr.bf16.mxu0 0
      %606 = vmatmul.mubr.bf16.gmra.mrb[0].mxu0 %v388
      %v607 = vpop.f32.mrb[0].mxu0
      %v608 = vadd.f32 0.0, %v607
      %v609 = vpop.f32.mrb[0].mxu0
      %v610 = vpop.f32.mrb[0].mxu0
      %v611 = vadd.f32 0.0, %v610
      %v612 = vpop.f32.mrb[0].mxu0
      %613 = vdwg.mxu0
      %vm614 = vcmask 261120
      %615 = vst.msk [vmem:[%s296] sm:$0xff] %vm614, %v488
      %616 = vst.msk [vmem:[%s296 + $0x8] sm:$0xff] %vm614, %v491
      %617 = vst.msk [vmem:[%s296 + $0x10] sm:$0xff] %vm614, %v496
      %618 = vst.msk [vmem:[%s296 + $0x18] sm:$0xff] %vm614, %v499
      %619 = vst.msk [vmem:[%s296 + $0x20] sm:$0xff] %vm614, %v504
      %620 = vst.msk [vmem:[%s296 + $0x28] sm:$0xff] %vm614, %v507
      %621 = vst.msk [vmem:[%s296 + $0x30] sm:$0xff] %vm614, %v512
      %622 = vst.msk [vmem:[%s296 + $0x38] sm:$0xff] %vm614, %v515
      %623 = vst.msk [vmem:[%s296 + $0x40] sm:$0xff] %vm614, %v520
      %624 = vst.msk [vmem:[%s296 + $0x48] sm:$0xff] %vm614, %v523
      %625 = vst.msk [vmem:[%s296 + $0x50] sm:$0xff] %vm614, %v528
      %626 = vst.msk [vmem:[%s296 + $0x58] sm:$0xff] %vm614, %v531
      %627 = vst.msk [vmem:[%s296 + $0x60] sm:$0xff] %vm614, %v536
      %628 = vst.msk [vmem:[%s296 + $0x68] sm:$0xff] %vm614, %v539
      %629 = vst.msk [vmem:[%s296 + $0x70] sm:$0xff] %vm614, %v544
      %630 = vst.msk [vmem:[%s296 + $0x78] sm:$0xff] %vm614, %v547
      %631 = vst.msk [vmem:[%s296 + $0x80] sm:$0xff] %vm614, %v552
      %632 = vst.msk [vmem:[%s296 + $0x88] sm:$0xff] %vm614, %v555
      %633 = vst.msk [vmem:[%s296 + $0x90] sm:$0xff] %vm614, %v560
      %634 = vst.msk [vmem:[%s296 + $0x98] sm:$0xff] %vm614, %v563
      %635 = vst.msk [vmem:[%s296 + $0xa0] sm:$0xff] %vm614, %v568
      %636 = vst.msk [vmem:[%s296 + $0xa8] sm:$0xff] %vm614, %v571
      %637 = vst.msk [vmem:[%s296 + $0xb0] sm:$0xff] %vm614, %v576
      %638 = vst.msk [vmem:[%s296 + $0xb8] sm:$0xff] %vm614, %v579
      %639 = vst.msk [vmem:[%s296 + $0xc0] sm:$0xff] %vm614, %v584
      %640 = vst.msk [vmem:[%s296 + $0xc8] sm:$0xff] %vm614, %v587
      %641 = vst.msk [vmem:[%s296 + $0xd0] sm:$0xff] %vm614, %v592
      %642 = vst.msk [vmem:[%s296 + $0xd8] sm:$0xff] %vm614, %v595
      %643 = vst.msk [vmem:[%s296 + $0xe0] sm:$0xff] %vm614, %v600
      %644 = vst.msk [vmem:[%s296 + $0xe8] sm:$0xff] %vm614, %v603
      %645 = vst.msk [vmem:[%s296 + $0xf0] sm:$0xff] %vm614, %v608
      %646 = vst.msk [vmem:[%s296 + $0xf8] sm:$0xff] %vm614, %v611
      %v647 = vsel %vm614, %v488, 0.0
      %v648 = vsel %vm614, %v491, 0.0
      %v649 = vadd.f32 %v647, %v648
      %v650 = vsel %vm614, %v496, 0.0
      %v651 = vadd.f32 %v649, %v650
      %v652 = vsel %vm614, %v499, 0.0
      %v653 = vadd.f32 %v651, %v652
      %v654 = vsel %vm614, %v504, 0.0
      %v655 = vadd.f32 %v653, %v654
      %v656 = vsel %vm614, %v507, 0.0
      %v657 = vadd.f32 %v655, %v656
      %v658 = vsel %vm614, %v512, 0.0
      %v659 = vadd.f32 %v657, %v658
      %v660 = vsel %vm614, %v515, 0.0
      %v661 = vadd.f32 %v659, %v660
      %v662 = vsel %vm614, %v520, 0.0
      %v663 = vadd.f32 %v661, %v662
      %v664 = vsel %vm614, %v523, 0.0
      %v665 = vadd.f32 %v663, %v664
      %v666 = vsel %vm614, %v528, 0.0
      %v667 = vadd.f32 %v665, %v666
      %v668 = vsel %vm614, %v531, 0.0
      %v669 = vadd.f32 %v667, %v668
      %v670 = vsel %vm614, %v536, 0.0
      %v671 = vadd.f32 %v669, %v670
      %v672 = vsel %vm614, %v539, 0.0
      %v673 = vadd.f32 %v671, %v672
      %v674 = vsel %vm614, %v544, 0.0
      %v675 = vadd.f32 %v673, %v674
      %v676 = vsel %vm614, %v547, 0.0
      %v677 = vadd.f32 %v675, %v676
      %v678 = vsel %vm614, %v552, 0.0
      %v679 = vadd.f32 %v677, %v678
      %v680 = vsel %vm614, %v555, 0.0
      %v681 = vadd.f32 %v679, %v680
      %v682 = vsel %vm614, %v560, 0.0
      %v683 = vadd.f32 %v681, %v682
      %v684 = vsel %vm614, %v563, 0.0
      %v685 = vadd.f32 %v683, %v684
      %v686 = vsel %vm614, %v568, 0.0
      %v687 = vadd.f32 %v685, %v686
      %v688 = vsel %vm614, %v571, 0.0
      %v689 = vadd.f32 %v687, %v688
      %v690 = vsel %vm614, %v576, 0.0
      %v691 = vadd.f32 %v689, %v690
      %v692 = vsel %vm614, %v579, 0.0
      %v693 = vadd.f32 %v691, %v692
      %v694 = vsel %vm614, %v584, 0.0
      %v695 = vadd.f32 %v693, %v694
      %v696 = vsel %vm614, %v587, 0.0
      %v697 = vadd.f32 %v695, %v696
      %v698 = vsel %vm614, %v592, 0.0
      %v699 = vadd.f32 %v697, %v698
      %v700 = vsel %vm614, %v595, 0.0
      %v701 = vadd.f32 %v699, %v700
      %v702 = vsel %vm614, %v600, 0.0
      %v703 = vadd.f32 %v701, %v702
      %v704 = vsel %vm614, %v603, 0.0
      %v705 = vadd.f32 %v703, %v704
      %v706 = vsel %vm614, %v608, 0.0
      %v707 = vadd.f32 %v705, %v706
      %v708 = vsel %vm614, %v611, 0.0
      %v709 = vadd.f32 %v707, %v708
      %v710 = vrot.slane %v709, 4
      %v711 = vadd.f32 %v709, %v710
      %v712 = vrot.slane %v711, 2
      %v713 = vadd.f32 %v711, %v712
      %v714 = vrot.slane %v713, 1
      %v715 = vadd.f32 %v713, %v714
      %vm716 = vcmask 253952
      %717 = vst.msk [vmem:[%s304] sm:$0x1] %vm716, %v715
      %v718 = vmul.f32 %v488, %v488
      %v719 = vmul.f32 %v491, %v491
      %v720 = vmul.f32 %v496, %v496
      %v721 = vmul.f32 %v499, %v499
      %v722 = vmul.f32 %v504, %v504
      %v723 = vmul.f32 %v507, %v507
      %v724 = vmul.f32 %v512, %v512
      %v725 = vmul.f32 %v515, %v515
      %v726 = vmul.f32 %v520, %v520
      %v727 = vmul.f32 %v523, %v523
      %v728 = vmul.f32 %v528, %v528
      %v729 = vmul.f32 %v531, %v531
      %v730 = vmul.f32 %v536, %v536
      %v731 = vmul.f32 %v539, %v539
      %v732 = vmul.f32 %v544, %v544
      %v733 = vmul.f32 %v547, %v547
      %v734 = vmul.f32 %v552, %v552
      %v735 = vmul.f32 %v555, %v555
      %v736 = vmul.f32 %v560, %v560
      %v737 = vmul.f32 %v563, %v563
      %v738 = vmul.f32 %v568, %v568
      %v739 = vmul.f32 %v571, %v571
      %v740 = vmul.f32 %v576, %v576
      %v741 = vmul.f32 %v579, %v579
      %v742 = vmul.f32 %v584, %v584
      %v743 = vmul.f32 %v587, %v587
      %v744 = vmul.f32 %v592, %v592
      %v745 = vmul.f32 %v595, %v595
      %v746 = vmul.f32 %v600, %v600
      %v747 = vmul.f32 %v603, %v603
      %v748 = vmul.f32 %v608, %v608
      %v749 = vmul.f32 %v611, %v611
      %v750 = vsel %vm614, %v718, 0.0
      %v751 = vsel %vm614, %v719, 0.0
      %v752 = vadd.f32 %v750, %v751
      %v753 = vsel %vm614, %v720, 0.0
      %v754 = vadd.f32 %v752, %v753
      %v755 = vsel %vm614, %v721, 0.0
      %v756 = vadd.f32 %v754, %v755
      %v757 = vsel %vm614, %v722, 0.0
      %v758 = vadd.f32 %v756, %v757
      %v759 = vsel %vm614, %v723, 0.0
      %v760 = vadd.f32 %v758, %v759
      %v761 = vsel %vm614, %v724, 0.0
      %v762 = vadd.f32 %v760, %v761
      %v763 = vsel %vm614, %v725, 0.0
      %v764 = vadd.f32 %v762, %v763
      %v765 = vsel %vm614, %v726, 0.0
      %v766 = vadd.f32 %v764, %v765
      %v767 = vsel %vm614, %v727, 0.0
      %v768 = vadd.f32 %v766, %v767
      %v769 = vsel %vm614, %v728, 0.0
      %v770 = vadd.f32 %v768, %v769
      %v771 = vsel %vm614, %v729, 0.0
      %v772 = vadd.f32 %v770, %v771
      %v773 = vsel %vm614, %v730, 0.0
      %v774 = vadd.f32 %v772, %v773
      %v775 = vsel %vm614, %v731, 0.0
      %v776 = vadd.f32 %v774, %v775
      %v777 = vsel %vm614, %v732, 0.0
      %v778 = vadd.f32 %v776, %v777
      %v779 = vsel %vm614, %v733, 0.0
      %v780 = vadd.f32 %v778, %v779
      %v781 = vsel %vm614, %v734, 0.0
      %v782 = vadd.f32 %v780, %v781
      %v783 = vsel %vm614, %v735, 0.0
      %v784 = vadd.f32 %v782, %v783
      %v785 = vsel %vm614, %v736, 0.0
      %v786 = vadd.f32 %v784, %v785
      %v787 = vsel %vm614, %v737, 0.0
      %v788 = vadd.f32 %v786, %v787
      %v789 = vsel %vm614, %v738, 0.0
      %v790 = vadd.f32 %v788, %v789
      %v791 = vsel %vm614, %v739, 0.0
      %v792 = vadd.f32 %v790, %v791
      %v793 = vsel %vm614, %v740, 0.0
      %v794 = vadd.f32 %v792, %v793
      %v795 = vsel %vm614, %v741, 0.0
      %v796 = vadd.f32 %v794, %v795
      %v797 = vsel %vm614, %v742, 0.0
      %v798 = vadd.f32 %v796, %v797
      %v799 = vsel %vm614, %v743, 0.0
      %v800 = vadd.f32 %v798, %v799
      %v801 = vsel %vm614, %v744, 0.0
      %v802 = vadd.f32 %v800, %v801
      %v803 = vsel %vm614, %v745, 0.0
      %v804 = vadd.f32 %v802, %v803
      %v805 = vsel %vm614, %v746, 0.0
      %v806 = vadd.f32 %v804, %v805
      %v807 = vsel %vm614, %v747, 0.0
      %v808 = vadd.f32 %v806, %v807
      %v809 = vsel %vm614, %v748, 0.0
      %v810 = vadd.f32 %v808, %v809
      %v811 = vsel %vm614, %v749, 0.0
      %v812 = vadd.f32 %v810, %v811
      %v813 = vrot.slane %v812, 4
      %v814 = vadd.f32 %v812, %v813
      %v815 = vrot.slane %v814, 2
      %v816 = vadd.f32 %v814, %v815
      %v817 = vrot.slane %v816, 1
      %v818 = vadd.f32 %v816, %v817
      %819 = vst.msk [vmem:[%s307] sm:$0x1] %vm716, %v818
      %v820 = vld [vmem:[%s2] sm:$0xff]
      %v821 = vld [vmem:[%s2 + $0x8] sm:$0xff]
      %v822 = vld [vmem:[%s2 + $0x10] sm:$0xff]
      %v823 = vld [vmem:[%s2 + $0x18] sm:$0xff]
      %v824 = vld [vmem:[%s2 + $0x20] sm:$0xff]
      %v825 = vld [vmem:[%s2 + $0x28] sm:$0xff]
      %v826 = vld [vmem:[%s2 + $0x30] sm:$0xff]
      %v827 = vld [vmem:[%s2 + $0x38] sm:$0xff]
      %v828 = vld [vmem:[%s2 + $0x40] sm:$0xff]
      %v829 = vld [vmem:[%s2 + $0x48] sm:$0xff]
      %v830 = vld [vmem:[%s2 + $0x50] sm:$0xff]
      %v831 = vld [vmem:[%s2 + $0x58] sm:$0xff]
      %v832 = vld [vmem:[%s2 + $0x60] sm:$0xff]
      %v833 = vld [vmem:[%s2 + $0x68] sm:$0xff]
      %v834 = vld [vmem:[%s2 + $0x70] sm:$0xff]
      %v835 = vld [vmem:[%s2 + $0x78] sm:$0xff]
      %836 = vmatprep.subr.mxu0 0.0
      %837 = vmatpush1.msra.mxu0 %v820
      %838 = vmatprep.subr.mxu0 0.0
      %839 = vmatpush1.msra.mxu0 %v821
      %840 = vmatprep.subr.mxu0 0.0
      %841 = vmatpush1.msra.mxu0 %v822
      %842 = vmatprep.subr.mxu0 0.0
      %843 = vmatpush1.msra.mxu0 %v823
      %844 = vmatprep.subr.mxu0 0.0
      %845 = vmatpush1.msra.mxu0 %v824
      %846 = vmatprep.subr.mxu0 0.0
      %847 = vmatpush1.msra.mxu0 %v825
      %848 = vmatprep.subr.mxu0 0.0
      %849 = vmatpush1.msra.mxu0 %v826
      %850 = vmatprep.subr.mxu0 0.0
      %851 = vmatpush1.msra.mxu0 %v827
      %852 = vmatprep.subr.mxu0 0.0
      %853 = vmatpush1.msra.mxu0 %v828
      %854 = vmatprep.subr.mxu0 0.0
      %855 = vmatpush1.msra.mxu0 %v829
      %856 = vmatprep.subr.mxu0 0.0
      %857 = vmatpush1.msra.mxu0 %v830
      %858 = vmatprep.subr.mxu0 0.0
      %859 = vmatpush1.msra.mxu0 %v831
      %860 = vmatprep.subr.mxu0 0.0
      %861 = vmatpush1.msra.mxu0 %v832
      %862 = vmatprep.subr.mxu0 0.0
      %863 = vmatpush1.msra.mxu0 %v833
      %864 = vmatprep.subr.mxu0 0.0
      %865 = vmatpush1.msra.mxu0 %v834
      %866 = vmatprep.subr.mxu0 0.0
      %867 = vmatpush1.msra.mxu0 %v835
      %868 = vmatprep.subr.mxu0 0.0
      %869 = vmatpush1.msra.mxu0 0.0
      %870 = vmatprep.subr.mxu0 0.0
      %871 = vmatpush1.msra.mxu0 0.0
      %872 = vmatprep.subr.mxu0 0.0
      %873 = vmatpush1.msra.mxu0 0.0
      %874 = vmatprep.subr.mxu0 0.0
      %875 = vmatpush1.msra.mxu0 0.0
      %876 = vmatprep.subr.mxu0 0.0
      %877 = vmatpush1.msra.mxu0 0.0
      %878 = vmatprep.subr.mxu0 0.0
      %879 = vmatpush1.msra.mxu0 0.0
      %880 = vmatprep.subr.mxu0 0.0
      %881 = vmatpush1.msra.mxu0 0.0
      %882 = vmatprep.subr.mxu0 0.0
      %883 = vmatpush1.msra.mxu0 0.0
      %884 = vmatprep.subr.mxu0 0.0
      %885 = vmatpush1.msra.mxu0 0.0
      %886 = vmatprep.subr.mxu0 0.0
      %887 = vmatpush1.msra.mxu0 0.0
      %888 = vmatprep.subr.mxu0 0.0
      %889 = vmatpush1.msra.mxu0 0.0
      %890 = vmatprep.subr.mxu0 0.0
      %891 = vmatpush1.msra.mxu0 0.0
      %892 = vmatprep.subr.mxu0 0.0
      %893 = vmatpush1.msra.mxu0 0.0
      %894 = vmatprep.subr.mxu0 0.0
      %895 = vmatpush1.msra.mxu0 0.0
      %896 = vmatprep.subr.mxu0 0.0
      %897 = vmatpush1.msra.mxu0 0.0
      %898 = vmatprep.subr.mxu0 0.0
      %899 = vmatpush1.msra.mxu0 0.0
      %900 = vmatprep.mubr.f32.mxu0 0.0
      %901 = vmatmul.mubr.f32.gmra.mrb[0].mxu0 %v309
      %v902 = vpop.f32.mrb[0].mxu0
      %v903 = vadd.f32 0.0, %v902
      %v904 = vpop.f32.mrb[0].mxu0
      %905 = vmatprep.mubr.f32.mxu0 0.0
      %906 = vmatmul.mubr.f32.gmra.mrb[0].mxu0 %v310
      %v907 = vpop.f32.mrb[0].mxu0
      %v908 = vadd.f32 0.0, %v907
      %v909 = vpop.f32.mrb[0].mxu0
      %910 = vmatprep.mubr.f32.mxu0 0.0
      %911 = vmatmul.mubr.f32.gmra.mrb[0].mxu0 %v311
      %v912 = vpop.f32.mrb[0].mxu0
      %v913 = vadd.f32 0.0, %v912
      %v914 = vpop.f32.mrb[0].mxu0
      %915 = vmatprep.mubr.f32.mxu0 0.0
      %916 = vmatmul.mubr.f32.gmra.mrb[0].mxu0 %v312
      %v917 = vpop.f32.mrb[0].mxu0
      %v918 = vadd.f32 0.0, %v917
      %v919 = vpop.f32.mrb[0].mxu0
      %920 = vmatprep.mubr.f32.mxu0 0.0
      %921 = vmatmul.mubr.f32.gmra.mrb[0].mxu0 %v313
      %v922 = vpop.f32.mrb[0].mxu0
      %v923 = vadd.f32 0.0, %v922
      %v924 = vpop.f32.mrb[0].mxu0
      %925 = vmatprep.mubr.f32.mxu0 0.0
      %926 = vmatmul.mubr.f32.gmra.mrb[0].mxu0 %v314
      %v927 = vpop.f32.mrb[0].mxu0
      %v928 = vadd.f32 0.0, %v927
      %v929 = vpop.f32.mrb[0].mxu0
      %930 = vmatprep.mubr.f32.mxu0 0.0
      %931 = vmatmul.mubr.f32.gmra.mrb[0].mxu0 %v315
      %v932 = vpop.f32.mrb[0].mxu0
      %v933 = vadd.f32 0.0, %v932
      %v934 = vpop.f32.mrb[0].mxu0
      %935 = vmatprep.mubr.f32.mxu0 0.0
      %936 = vmatmul.mubr.f32.gmra.mrb[0].mxu0 %v316
      %v937 = vpop.f32.mrb[0].mxu0
      %v938 = vadd.f32 0.0, %v937
      %v939 = vpop.f32.mrb[0].mxu0
      %940 = vmatprep.mubr.f32.mxu0 0.0
      %941 = vmatmul.mubr.f32.gmra.mrb[0].mxu0 %v317
      %v942 = vpop.f32.mrb[0].mxu0
      %v943 = vadd.f32 0.0, %v942
      %v944 = vpop.f32.mrb[0].mxu0
      %945 = vmatprep.mubr.f32.mxu0 0.0
      %946 = vmatmul.mubr.f32.gmra.mrb[0].mxu0 %v318
      %v947 = vpop.f32.mrb[0].mxu0
      %v948 = vadd.f32 0.0, %v947
      %v949 = vpop.f32.mrb[0].mxu0
      %950 = vmatprep.mubr.f32.mxu0 0.0
      %951 = vmatmul.mubr.f32.gmra.mrb[0].mxu0 %v319
      %v952 = vpop.f32.mrb[0].mxu0
      %v953 = vadd.f32 0.0, %v952
      %v954 = vpop.f32.mrb[0].mxu0
      %955 = vmatprep.mubr.f32.mxu0 0.0
      %956 = vmatmul.mubr.f32.gmra.mrb[0].mxu0 %v320
      %v957 = vpop.f32.mrb[0].mxu0
      %v958 = vadd.f32 0.0, %v957
      %v959 = vpop.f32.mrb[0].mxu0
      %960 = vmatprep.mubr.f32.mxu0 0.0
      %961 = vmatmul.mubr.f32.gmra.mrb[0].mxu0 %v321
      %v962 = vpop.f32.mrb[0].mxu0
      %v963 = vadd.f32 0.0, %v962
      %v964 = vpop.f32.mrb[0].mxu0
      %965 = vmatprep.mubr.f32.mxu0 0.0
      %966 = vmatmul.mubr.f32.gmra.mrb[0].mxu0 %v322
      %v967 = vpop.f32.mrb[0].mxu0
      %v968 = vadd.f32 0.0, %v967
      %v969 = vpop.f32.mrb[0].mxu0
      %970 = vmatprep.mubr.f32.mxu0 0.0
      %971 = vmatmul.mubr.f32.gmra.mrb[0].mxu0 %v323
      %v972 = vpop.f32.mrb[0].mxu0
      %v973 = vadd.f32 0.0, %v972
      %v974 = vpop.f32.mrb[0].mxu0
      %975 = vmatprep.mubr.f32.mxu0 0.0
      %976 = vmatmul.mubr.f32.gmra.mrb[0].mxu0 %v324
      %v977 = vpop.f32.mrb[0].mxu0
      %v978 = vadd.f32 0.0, %v977
      %v979 = vpop.f32.mrb[0].mxu0
      %980 = vmatprep.mubr.f32.mxu0 0.0
      %981 = vmatmul.mubr.f32.gmra.mrb[0].mxu0 %v325
      %v982 = vpop.f32.mrb[0].mxu0
      %v983 = vadd.f32 0.0, %v982
      %v984 = vpop.f32.mrb[0].mxu0
      %985 = vmatprep.mubr.f32.mxu0 0.0
      %986 = vmatmul.mubr.f32.gmra.mrb[0].mxu0 %v326
      %v987 = vpop.f32.mrb[0].mxu0
      %v988 = vadd.f32 0.0, %v987
      %v989 = vpop.f32.mrb[0].mxu0
      %990 = vmatprep.mubr.f32.mxu0 0.0
      %991 = vmatmul.mubr.f32.gmra.mrb[0].mxu0 %v327
      %v992 = vpop.f32.mrb[0].mxu0
      %v993 = vadd.f32 0.0, %v992
      %v994 = vpop.f32.mrb[0].mxu0
      %995 = vmatprep.mubr.f32.mxu0 0.0
      %996 = vmatmul.mubr.f32.gmra.mrb[0].mxu0 %v328
      %v997 = vpop.f32.mrb[0].mxu0
      %v998 = vadd.f32 0.0, %v997
      %v999 = vpop.f32.mrb[0].mxu0
      %1000 = vmatprep.mubr.f32.mxu0 0.0
      %1001 = vmatmul.mubr.f32.gmra.mrb[0].mxu0 %v329
      %v1002 = vpop.f32.mrb[0].mxu0
      %v1003 = vadd.f32 0.0, %v1002
      %v1004 = vpop.f32.mrb[0].mxu0
      %1005 = vmatprep.mubr.f32.mxu0 0.0
      %1006 = vmatmul.mubr.f32.gmra.mrb[0].mxu0 %v330
      %v1007 = vpop.f32.mrb[0].mxu0
      %v1008 = vadd.f32 0.0, %v1007
      %v1009 = vpop.f32.mrb[0].mxu0
      %1010 = vmatprep.mubr.f32.mxu0 0.0
      %1011 = vmatmul.mubr.f32.gmra.mrb[0].mxu0 %v331
      %v1012 = vpop.f32.mrb[0].mxu0
      %v1013 = vadd.f32 0.0, %v1012
      %v1014 = vpop.f32.mrb[0].mxu0
      %1015 = vmatprep.mubr.f32.mxu0 0.0
      %1016 = vmatmul.mubr.f32.gmra.mrb[0].mxu0 %v332
      %v1017 = vpop.f32.mrb[0].mxu0
      %v1018 = vadd.f32 0.0, %v1017
      %v1019 = vpop.f32.mrb[0].mxu0
      %1020 = vmatprep.mubr.f32.mxu0 0.0
      %1021 = vmatmul.mubr.f32.gmra.mrb[0].mxu0 %v333
      %v1022 = vpop.f32.mrb[0].mxu0
      %v1023 = vadd.f32 0.0, %v1022
      %v1024 = vpop.f32.mrb[0].mxu0
      %1025 = vmatprep.mubr.f32.mxu0 0.0
      %1026 = vmatmul.mubr.f32.gmra.mrb[0].mxu0 %v334
      %v1027 = vpop.f32.mrb[0].mxu0
      %v1028 = vadd.f32 0.0, %v1027
      %v1029 = vpop.f32.mrb[0].mxu0
      %1030 = vmatprep.mubr.f32.mxu0 0.0
      %1031 = vmatmul.mubr.f32.gmra.mrb[0].mxu0 %v335
      %v1032 = vpop.f32.mrb[0].mxu0
      %v1033 = vadd.f32 0.0, %v1032
      %v1034 = vpop.f32.mrb[0].mxu0
      %1035 = vmatprep.mubr.f32.mxu0 0.0
      %1036 = vmatmul.mubr.f32.gmra.mrb[0].mxu0 %v336
      %v1037 = vpop.f32.mrb[0].mxu0
      %v1038 = vadd.f32 0.0, %v1037
      %v1039 = vpop.f32.mrb[0].mxu0
      %1040 = vmatprep.mubr.f32.mxu0 0.0
      %1041 = vmatmul.mubr.f32.gmra.mrb[0].mxu0 %v337
      %v1042 = vpop.f32.mrb[0].mxu0
      %v1043 = vadd.f32 0.0, %v1042
      %v1044 = vpop.f32.mrb[0].mxu0
      %1045 = vmatprep.mubr.f32.mxu0 0.0
      %1046 = vmatmul.mubr.f32.gmra.mrb[0].mxu0 %v338
      %v1047 = vpop.f32.mrb[0].mxu0
      %v1048 = vadd.f32 0.0, %v1047
      %v1049 = vpop.f32.mrb[0].mxu0
      %1050 = vmatprep.mubr.f32.mxu0 0.0
      %1051 = vmatmul.mubr.f32.gmra.mrb[0].mxu0 %v339
      %v1052 = vpop.f32.mrb[0].mxu0
      %v1053 = vadd.f32 0.0, %v1052
      %v1054 = vpop.f32.mrb[0].mxu0
      %1055 = vmatprep.mubr.f32.mxu0 0.0
      %1056 = vmatmul.mubr.f32.gmra.mrb[0].mxu0 %v340
      %v1057 = vpop.f32.mrb[0].mxu0
      %v1058 = vadd.f32 0.0, %v1057
      %v1059 = vpop.f32.mrb[0].mxu0
      %1060 = vdwg.mxu0
      %v1061 = vld [vmem:[%s3] sm:$0xff]
      %v1062 = vld [vmem:[%s3 + $0x8] sm:$0xff]
      %v1063 = vld [vmem:[%s3 + $0x10] sm:$0xff]
      %v1064 = vld [vmem:[%s3 + $0x18] sm:$0xff]
      %v1065 = vld [vmem:[%s3 + $0x20] sm:$0xff]
      %v1066 = vld [vmem:[%s3 + $0x28] sm:$0xff]
      %v1067 = vld [vmem:[%s3 + $0x30] sm:$0xff]
      %v1068 = vld [vmem:[%s3 + $0x38] sm:$0xff]
      %v1069 = vld [vmem:[%s3 + $0x40] sm:$0xff]
      %v1070 = vld [vmem:[%s3 + $0x48] sm:$0xff]
      %v1071 = vld [vmem:[%s3 + $0x50] sm:$0xff]
      %v1072 = vld [vmem:[%s3 + $0x58] sm:$0xff]
      %v1073 = vld [vmem:[%s3 + $0x60] sm:$0xff]
      %v1074 = vld [vmem:[%s3 + $0x68] sm:$0xff]
      %v1075 = vld [vmem:[%s3 + $0x70] sm:$0xff]
      %v1076 = vld [vmem:[%s3 + $0x78] sm:$0xff]
      %v1077 = vld [vmem:[%s3 + $0x80] sm:$0xff]
      %v1078 = vld [vmem:[%s3 + $0x88] sm:$0xff]
      %v1079 = vld [vmem:[%s3 + $0x90] sm:$0xff]
      %v1080 = vld [vmem:[%s3 + $0x98] sm:$0xff]
      %v1081 = vld [vmem:[%s3 + $0xa0] sm:$0xff]
      %v1082 = vld [vmem:[%s3 + $0xa8] sm:$0xff]
      %v1083 = vld [vmem:[%s3 + $0xb0] sm:$0xff]
      %v1084 = vld [vmem:[%s3 + $0xb8] sm:$0xff]
      %v1085 = vld [vmem:[%s3 + $0xc0] sm:$0xff]
      %v1086 = vld [vmem:[%s3 + $0xc8] sm:$0xff]
      %v1087 = vld [vmem:[%s3 + $0xd0] sm:$0xff]
      %v1088 = vld [vmem:[%s3 + $0xd8] sm:$0xff]
      %v1089 = vld [vmem:[%s3 + $0xe0] sm:$0xff]
      %v1090 = vld [vmem:[%s3 + $0xe8] sm:$0xff]
      %v1091 = vld [vmem:[%s3 + $0xf0] sm:$0xff]
      %v1092 = vld [vmem:[%s3 + $0xf8] sm:$0xff]
      %v1093 = vmul.f32 %v903, %v1061
      %v1094 = vmul.f32 %v908, %v1062
      %v1095 = vmul.f32 %v913, %v1063
      %v1096 = vmul.f32 %v918, %v1064
      %v1097 = vmul.f32 %v923, %v1065
      %v1098 = vmul.f32 %v928, %v1066
      %v1099 = vmul.f32 %v933, %v1067
      %v1100 = vmul.f32 %v938, %v1068
      %v1101 = vmul.f32 %v943, %v1069
      %v1102 = vmul.f32 %v948, %v1070
      %v1103 = vmul.f32 %v953, %v1071
      %v1104 = vmul.f32 %v958, %v1072
      %v1105 = vmul.f32 %v963, %v1073
      %v1106 = vmul.f32 %v968, %v1074
      %v1107 = vmul.f32 %v973, %v1075
      %v1108 = vmul.f32 %v978, %v1076
      %v1109 = vmul.f32 %v983, %v1077
      %v1110 = vmul.f32 %v988, %v1078
      %v1111 = vmul.f32 %v993, %v1079
      %v1112 = vmul.f32 %v998, %v1080
      %v1113 = vmul.f32 %v1003, %v1081
      %v1114 = vmul.f32 %v1008, %v1082
      %v1115 = vmul.f32 %v1013, %v1083
      %v1116 = vmul.f32 %v1018, %v1084
      %v1117 = vmul.f32 %v1023, %v1085
      %v1118 = vmul.f32 %v1028, %v1086
      %v1119 = vmul.f32 %v1033, %v1087
      %v1120 = vmul.f32 %v1038, %v1088
      %v1121 = vmul.f32 %v1043, %v1089
      %v1122 = vmul.f32 %v1048, %v1090
      %v1123 = vmul.f32 %v1053, %v1091
      %v1124 = vmul.f32 %v1058, %v1092
      %vm1125 = vcmask 64512
      %1126 = vst.msk [vmem:[%s301] sm:$0xff] %vm1125, %v1093
      %1127 = vst.msk [vmem:[%s301 + $0x8] sm:$0xff] %vm1125, %v1094
      %1128 = vst.msk [vmem:[%s301 + $0x10] sm:$0xff] %vm1125, %v1095
      %1129 = vst.msk [vmem:[%s301 + $0x18] sm:$0xff] %vm1125, %v1096
      %1130 = vst.msk [vmem:[%s301 + $0x20] sm:$0xff] %vm1125, %v1097
      %1131 = vst.msk [vmem:[%s301 + $0x28] sm:$0xff] %vm1125, %v1098
      %1132 = vst.msk [vmem:[%s301 + $0x30] sm:$0xff] %vm1125, %v1099
      %1133 = vst.msk [vmem:[%s301 + $0x38] sm:$0xff] %vm1125, %v1100
      %1134 = vst.msk [vmem:[%s301 + $0x40] sm:$0xff] %vm1125, %v1101
      %1135 = vst.msk [vmem:[%s301 + $0x48] sm:$0xff] %vm1125, %v1102
      %1136 = vst.msk [vmem:[%s301 + $0x50] sm:$0xff] %vm1125, %v1103
      %1137 = vst.msk [vmem:[%s301 + $0x58] sm:$0xff] %vm1125, %v1104
      %1138 = vst.msk [vmem:[%s301 + $0x60] sm:$0xff] %vm1125, %v1105
      %1139 = vst.msk [vmem:[%s301 + $0x68] sm:$0xff] %vm1125, %v1106
      %1140 = vst.msk [vmem:[%s301 + $0x70] sm:$0xff] %vm1125, %v1107
      %1141 = vst.msk [vmem:[%s301 + $0x78] sm:$0xff] %vm1125, %v1108
      %1142 = vst.msk [vmem:[%s301 + $0x80] sm:$0xff] %vm1125, %v1109
      %1143 = vst.msk [vmem:[%s301 + $0x88] sm:$0xff] %vm1125, %v1110
      %1144 = vst.msk [vmem:[%s301 + $0x90] sm:$0xff] %vm1125, %v1111
      %1145 = vst.msk [vmem:[%s301 + $0x98] sm:$0xff] %vm1125, %v1112
      %1146 = vst.msk [vmem:[%s301 + $0xa0] sm:$0xff] %vm1125, %v1113
      %1147 = vst.msk [vmem:[%s301 + $0xa8] sm:$0xff] %vm1125, %v1114
      %1148 = vst.msk [vmem:[%s301 + $0xb0] sm:$0xff] %vm1125, %v1115
      %1149 = vst.msk [vmem:[%s301 + $0xb8] sm:$0xff] %vm1125, %v1116
      %1150 = vst.msk [vmem:[%s301 + $0xc0] sm:$0xff] %vm1125, %v1117
      %1151 = vst.msk [vmem:[%s301 + $0xc8] sm:$0xff] %vm1125, %v1118
      %1152 = vst.msk [vmem:[%s301 + $0xd0] sm:$0xff] %vm1125, %v1119
      %1153 = vst.msk [vmem:[%s301 + $0xd8] sm:$0xff] %vm1125, %v1120
      %1154 = vst.msk [vmem:[%s301 + $0xe0] sm:$0xff] %vm1125, %v1121
      %1155 = vst.msk [vmem:[%s301 + $0xe8] sm:$0xff] %vm1125, %v1122
      %1156 = vst.msk [vmem:[%s301 + $0xf0] sm:$0xff] %vm1125, %v1123
      %1157 = vst.msk [vmem:[%s301 + $0xf8] sm:$0xff] %vm1125, %v1124
      %p1158 = scmp.lt.s32.totalorder %s19, 1
      %s1159 = scalar_select %p1158, %s19, 1
      %s1160 = smul.addr %s1159, 32
      %s1161 = smul.addr %s1160, 8
      %s1162 = scalar_lea.vmem %s4, %s1161
      %p1163 = scmp.lt.s32.totalorder %s19, 1
      %s1164 = scalar_select %p1163, %s19, 1
      %s1165 = smul.addr %s1164, 32
      %s1166 = smul.addr %s1165, 8
      %s1167 = scalar_lea.vmem %s5, %s1166
      %p1168 = scmp.lt.s32.totalorder %s19, 1
      %s1169 = scalar_select %p1168, %s19, 1
      %s1170 = scalar_lea.vmem %s6, %s1169
      %p1171 = scmp.lt.s32.totalorder %s19, 1
      %s1172 = scalar_select %p1171, %s19, 1
      %s1173 = scalar_lea.vmem %s7, %s1172
      // Predicated region
      $region37: #{_lambda_.4} parent=35 // pred_check
        %p1174 = pneg %p126
      $region38: #{_lambda_.4} parent=35 // pred_check_branch
        %1176 = sbr.rel (%p1174) target = $region40
      $region39: #{_lambda_.4} parent=35 // pred_region
        _
      $region40: #{_lambda_.4} parent=35 // pred_fallthru
        _
      // Predicated region
      $region41: #{_lambda_.4} parent=35 // pred_check
        %p1177 = pneg %p152
      $region42: #{_lambda_.4} parent=35 // pred_check_branch
        %1179 = sbr.rel (%p1177) target = $region44
      $region43: #{_lambda_.4} parent=35 // pred_region
        _
      $region44: #{_lambda_.4} parent=35 // pred_fallthru
        _
      // Predicated region
      $region45: #{_lambda_.4} parent=35 // pred_check
        %p1180 = pneg %p178
      $region46: #{_lambda_.4} parent=35 // pred_check_branch
        %1182 = sbr.rel (%p1180) target = $region48
      $region47: #{_lambda_.4} parent=35 // pred_region
        _
      $region48: #{_lambda_.4} parent=35 // pred_fallthru
        _
      // Predicated region
      $region49: #{_lambda_.4} parent=35 // pred_check
        %p1183 = pneg %p204
      $region50: #{_lambda_.4} parent=35 // pred_check_branch
        %1185 = sbr.rel (%p1183) target = $region52
      $region51: #{_lambda_.4} parent=35 // pred_region
        _
      $region52: #{_lambda_.4} parent=35 // pred_fallthru
        _
    $region36: #{_lambda_.4} parent=5 // pred_fallthru
      _
    %p1186 = scmp.le.s32.totalorder 2, %s14
    // Predicated region
    $region53: #{_lambda_.4} parent=5 // pred_check
      %p1187 = pneg %p1186
    $region54: #{_lambda_.4} parent=5 // pred_check_branch
      %1189 = sbr.rel (%p1187) target = $region56
    $region55: #{_lambda_.4} parent=5 // pred_region
      %s1190 = ssub.s32 %s14, 2
      // Predicated region
      $region57: #{_lambda_.4} parent=55 // pred_check
        %p1191 = pneg %p132
      $region58: #{_lambda_.4} parent=55 // pred_check_branch
        %1193 = sbr.rel (%p1191) target = $region60
      $region59: #{_lambda_.4} parent=55 // pred_region
        %p1194 = scmp.lt.s32.totalorder %s20, 1
        %s1195 = scalar_select %p1194, %s20, 1
        %s1196 = smul.addr %s1195, 32
        %s1197 = smul.addr %s1196, 8
        %s1198 = scalar_lea.vmem %s4, %s1197
      $region60: #{_lambda_.4} parent=55 // pred_fallthru
        _
      // Predicated region
      $region61: #{_lambda_.4} parent=55 // pred_check
        %p1199 = pneg %p158
      $region62: #{_lambda_.4} parent=55 // pred_check_branch
        %1201 = sbr.rel (%p1199) target = $region64
      $region63: #{_lambda_.4} parent=55 // pred_region
        %p1202 = scmp.lt.s32.totalorder %s20, 1
        %s1203 = scalar_select %p1202, %s20, 1
        %s1204 = smul.addr %s1203, 32
        %s1205 = smul.addr %s1204, 8
        %s1206 = scalar_lea.vmem %s5, %s1205
      $region64: #{_lambda_.4} parent=55 // pred_fallthru
        _
      // Predicated region
      $region65: #{_lambda_.4} parent=55 // pred_check
        %p1207 = pneg %p184
      $region66: #{_lambda_.4} parent=55 // pred_check_branch
        %1209 = sbr.rel (%p1207) target = $region68
      $region67: #{_lambda_.4} parent=55 // pred_region
        %p1210 = scmp.lt.s32.totalorder %s20, 1
        %s1211 = scalar_select %p1210, %s20, 1
        %s1212 = scalar_lea.vmem %s6, %s1211
      $region68: #{_lambda_.4} parent=55 // pred_fallthru
        _
      // Predicated region
      $region69: #{_lambda_.4} parent=55 // pred_check
        %p1213 = pneg %p210
      $region70: #{_lambda_.4} parent=55 // pred_check_branch
        %1215 = sbr.rel (%p1213) target = $region72
      $region71: #{_lambda_.4} parent=55 // pred_region
        %p1216 = scmp.lt.s32.totalorder %s20, 1
        %s1217 = scalar_select %p1216, %s20, 1
        %s1218 = scalar_lea.vmem %s7, %s1217
      $region72: #{_lambda_.4} parent=55 // pred_fallthru
        _
    $region56: #{_lambda_.4} parent=5 // pred_fallthru
      _
  $region6: #{_lambda_.4} parent=0 // loop_footer
    %s18 = sadd.s32 1, %s14
  $region7: #{_lambda_.4} parent=0 // loop_footer_branch
    %13 = sbr.rel target = $region3
  $region8: #{_lambda_.4} parent=0 // loop_exit
    _

// kernel: _lambda_.3
$region0: #{_lambda_.3}
  #allocation0 [shape = 'u32[]', space=smem, size = 0x4, offset = 0x4, fixed_abs, tag = 'smem constant byte address 0x4 - core index']
  #allocation1 [shape = 'u32[144,128]{1,0:T(1,128)}', space=vmem, size = 0x12000, scoped, tag = 'internal scratch']
  %s0 = inlined_call_operand.vmem [shape: f32[2,256,128], index: 0, kind: input, shape index: {}]
  %s1 = inlined_call_operand.vmem [shape: bf16[128,48], index: 1, kind: input, shape index: {}]
  %s2 = inlined_call_operand.vmem [shape: f32[128,8], index: 2, kind: input, shape index: {}]
  %s3 = inlined_call_operand.vmem [shape: f32[256,8], index: 3, kind: input, shape index: {}]
  %s4 = inlined_call_operand.vmem [shape: f32[2,256,48], index: 4, kind: output, shape index: {0}]
  %s5 = inlined_call_operand.vmem [shape: f32[2,256,8], index: 5, kind: output, shape index: {1}]
  %s6 = inlined_call_operand.vmem [shape: f32[2,1,48], index: 6, kind: output, shape index: {2}]
  %s7 = inlined_call_operand.vmem [shape: f32[2,1,48], index: 7, kind: output, shape index: {3}]
  %8 = xla_tuple %s4, %s5, %s6, %s7
  %s9 = sld [smem:[#allocation0]]
  $region73: #{_lambda_.3} parent=0
    _
  %s11 = ssub.s32 1, %s9
  %s12 = scalar_select 0, %s11, %s9
  loop: start=0, step=1, limit=4
  $region2: #{_lambda_.3} parent=0 // loop_pre_header
    _
  $region3: #{_lambda_.3} parent=0 // loop_header
    %s14 = sphi 0, %s18
    %p15 = scmp.ge.s32.totalorder %s14, 4
    %s24 = sphi 0, %s26
    %s27 = sphi 0, %s24
    %s28 = sphi 0, %s27
    %s44 = sphi 0, %s28
    %s48 = sphi 0, %s48
    %s50 = sphi 0, %s48
    %s51 = sphi 0, %s50
    %s65 = sphi 0, %s51
    %s69 = sphi 0, %s69
    %s71 = sphi 0, %s69
    %s72 = sphi 0, %s71
    %s86 = sphi 0, %s72
    %s90 = sphi 0, %s90
    %s92 = sphi 0, %s90
    %s93 = sphi 0, %s92
    %s107 = sphi 0, %s93
    %s113 = sphi 0, %s115
    %s116 = sphi 0, %s113
    %s117 = sphi 0, %s116
    %s133 = sphi 0, %s117
    %s139 = sphi 0, %s141
    %s142 = sphi 0, %s139
    %s143 = sphi 0, %s142
    %s159 = sphi 0, %s143
    %s165 = sphi 0, %s167
    %s168 = sphi 0, %s165
    %s169 = sphi 0, %s168
    %s185 = sphi 0, %s169
    %s191 = sphi 0, %s193
    %s194 = sphi 0, %s191
    %s195 = sphi 0, %s194
    %s211 = sphi 0, %s195
  $region4: #{_lambda_.3} parent=0 // loop_header_branch
    %17 = sbr.rel (%p15) target = $region8
  $region5: #{_lambda_.3} parent=0 // loop_body
    %s19 = ssub.s32 %s14, 1
    %s20 = ssub.s32 %s14, 2
    %s21 = sadd.s32 %s14, 1
    %s22 = ssub.s32 %s14, %s21
    %p23 = scmp.eq.s32.totalorder %s22, 0
    %s25 = sadd.s32 %s24, 1
    %s26 = scalar_select %p23, %s24, %s25
    %p29 = pneg %p23
    %p30 = scmp.eq.s32.totalorder %s14, 1
    %p31 = por %p29, %p30
    %p32 = scmp.ne.s32.totalorder %s24, %s27
    %p33 = scmp.eq.s32.totalorder %s14, 0
    %p34 = por %p32, %p33
    %p35 = scmp.ne.s32.totalorder %s24, %s27
    %p36 = scmp.eq.s32.totalorder %s19, 1
    %p37 = por %p35, %p36
    %p38 = scmp.ne.s32.totalorder %s27, %s28
    %p39 = scmp.eq.s32.totalorder %s19, 0
    %p40 = por %p38, %p39
    %p41 = scmp.ne.s32.totalorder %s27, %s28
    %p42 = scmp.eq.s32.totalorder %s20, 1
    %p43 = por %p41, %p42
    %p45 = scmp.ne.s32.totalorder %s28, %s44
    %p46 = scmp.eq.s32.totalorder %s20, 0
    %p47 = por %p45, %p46
    %s49 = sadd.s32 %s48, 1
    %p52 = scmp.eq.s32.totalorder %s14, 1
    %p53 = scmp.ne.s32.totalorder %s48, %s50
    %p54 = scmp.eq.s32.totalorder %s14, 0
    %p55 = por %p53, %p54
    %p56 = scmp.ne.s32.totalorder %s48, %s50
    %p57 = scmp.eq.s32.totalorder %s19, 1
    %p58 = por %p56, %p57
    %p59 = scmp.ne.s32.totalorder %s50, %s51
    %p60 = scmp.eq.s32.totalorder %s19, 0
    %p61 = por %p59, %p60
    %p62 = scmp.ne.s32.totalorder %s50, %s51
    %p63 = scmp.eq.s32.totalorder %s20, 1
    %p64 = por %p62, %p63
    %p66 = scmp.ne.s32.totalorder %s51, %s65
    %p67 = scmp.eq.s32.totalorder %s20, 0
    %p68 = por %p66, %p67
    %s70 = sadd.s32 %s69, 1
    %p73 = scmp.eq.s32.totalorder %s14, 1
    %p74 = scmp.ne.s32.totalorder %s69, %s71
    %p75 = scmp.eq.s32.totalorder %s14, 0
    %p76 = por %p74, %p75
    %p77 = scmp.ne.s32.totalorder %s69, %s71
    %p78 = scmp.eq.s32.totalorder %s19, 1
    %p79 = por %p77, %p78
    %p80 = scmp.ne.s32.totalorder %s71, %s72
    %p81 = scmp.eq.s32.totalorder %s19, 0
    %p82 = por %p80, %p81
    %p83 = scmp.ne.s32.totalorder %s71, %s72
    %p84 = scmp.eq.s32.totalorder %s20, 1
    %p85 = por %p83, %p84
    %p87 = scmp.ne.s32.totalorder %s72, %s86
    %p88 = scmp.eq.s32.totalorder %s20, 0
    %p89 = por %p87, %p88
    %s91 = sadd.s32 %s90, 1
    %p94 = scmp.eq.s32.totalorder %s14, 1
    %p95 = scmp.ne.s32.totalorder %s90, %s92
    %p96 = scmp.eq.s32.totalorder %s14, 0
    %p97 = por %p95, %p96
    %p98 = scmp.ne.s32.totalorder %s90, %s92
    %p99 = scmp.eq.s32.totalorder %s19, 1
    %p100 = por %p98, %p99
    %p101 = scmp.ne.s32.totalorder %s92, %s93
    %p102 = scmp.eq.s32.totalorder %s19, 0
    %p103 = por %p101, %p102
    %p104 = scmp.ne.s32.totalorder %s92, %s93
    %p105 = scmp.eq.s32.totalorder %s20, 1
    %p106 = por %p104, %p105
    %p108 = scmp.ne.s32.totalorder %s93, %s107
    %p109 = scmp.eq.s32.totalorder %s20, 0
    %p110 = por %p108, %p109
    %s111 = ssub.s32 %s14, %s21
    %p112 = scmp.eq.s32.totalorder %s111, 0
    %s114 = sadd.s32 %s113, 1
    %s115 = scalar_select %p112, %s113, %s114
    %p118 = pneg %p112
    %p119 = scmp.eq.s32.totalorder %s14, 1
    %p120 = por %p118, %p119
    %p121 = scmp.ne.s32.totalorder %s113, %s116
    %p122 = scmp.eq.s32.totalorder %s14, 0
    %p123 = por %p121, %p122
    %p124 = scmp.ne.s32.totalorder %s113, %s116
    %p125 = scmp.eq.s32.totalorder %s19, 1
    %p126 = por %p124, %p125
    %p127 = scmp.ne.s32.totalorder %s116, %s117
    %p128 = scmp.eq.s32.totalorder %s19, 0
    %p129 = por %p127, %p128
    %p130 = scmp.ne.s32.totalorder %s116, %s117
    %p131 = scmp.eq.s32.totalorder %s20, 1
    %p132 = por %p130, %p131
    %p134 = scmp.ne.s32.totalorder %s117, %s133
    %p135 = scmp.eq.s32.totalorder %s20, 0
    %p136 = por %p134, %p135
    %s137 = ssub.s32 %s14, %s21
    %p138 = scmp.eq.s32.totalorder %s137, 0
    %s140 = sadd.s32 %s139, 1
    %s141 = scalar_select %p138, %s139, %s140
    %p144 = pneg %p138
    %p145 = scmp.eq.s32.totalorder %s14, 1
    %p146 = por %p144, %p145
    %p147 = scmp.ne.s32.totalorder %s139, %s142
    %p148 = scmp.eq.s32.totalorder %s14, 0
    %p149 = por %p147, %p148
    %p150 = scmp.ne.s32.totalorder %s139, %s142
    %p151 = scmp.eq.s32.totalorder %s19, 1
    %p152 = por %p150, %p151
    %p153 = scmp.ne.s32.totalorder %s142, %s143
    %p154 = scmp.eq.s32.totalorder %s19, 0
    %p155 = por %p153, %p154
    %p156 = scmp.ne.s32.totalorder %s142, %s143
    %p157 = scmp.eq.s32.totalorder %s20, 1
    %p158 = por %p156, %p157
    %p160 = scmp.ne.s32.totalorder %s143, %s159
    %p161 = scmp.eq.s32.totalorder %s20, 0
    %p162 = por %p160, %p161
    %s163 = ssub.s32 %s14, %s21
    %p164 = scmp.eq.s32.totalorder %s163, 0
    %s166 = sadd.s32 %s165, 1
    %s167 = scalar_select %p164, %s165, %s166
    %p170 = pneg %p164
    %p171 = scmp.eq.s32.totalorder %s14, 1
    %p172 = por %p170, %p171
    %p173 = scmp.ne.s32.totalorder %s165, %s168
    %p174 = scmp.eq.s32.totalorder %s14, 0
    %p175 = por %p173, %p174
    %p176 = scmp.ne.s32.totalorder %s165, %s168
    %p177 = scmp.eq.s32.totalorder %s19, 1
    %p178 = por %p176, %p177
    %p179 = scmp.ne.s32.totalorder %s168, %s169
    %p180 = scmp.eq.s32.totalorder %s19, 0
    %p181 = por %p179, %p180
    %p182 = scmp.ne.s32.totalorder %s168, %s169
    %p183 = scmp.eq.s32.totalorder %s20, 1
    %p184 = por %p182, %p183
    %p186 = scmp.ne.s32.totalorder %s169, %s185
    %p187 = scmp.eq.s32.totalorder %s20, 0
    %p188 = por %p186, %p187
    %s189 = ssub.s32 %s14, %s21
    %p190 = scmp.eq.s32.totalorder %s189, 0
    %s192 = sadd.s32 %s191, 1
    %s193 = scalar_select %p190, %s191, %s192
    %p196 = pneg %p190
    %p197 = scmp.eq.s32.totalorder %s14, 1
    %p198 = por %p196, %p197
    %p199 = scmp.ne.s32.totalorder %s191, %s194
    %p200 = scmp.eq.s32.totalorder %s14, 0
    %p201 = por %p199, %p200
    %p202 = scmp.ne.s32.totalorder %s191, %s194
    %p203 = scmp.eq.s32.totalorder %s19, 1
    %p204 = por %p202, %p203
    %p205 = scmp.ne.s32.totalorder %s194, %s195
    %p206 = scmp.eq.s32.totalorder %s19, 0
    %p207 = por %p205, %p206
    %p208 = scmp.ne.s32.totalorder %s194, %s195
    %p209 = scmp.eq.s32.totalorder %s20, 1
    %p210 = por %p208, %p209
    %p212 = scmp.ne.s32.totalorder %s195, %s211
    %p213 = scmp.eq.s32.totalorder %s20, 0
    %p214 = por %p212, %p213
    %p215 = scmp.le.s32.totalorder 1, %s14
    %p216 = scmp.lt.s32.totalorder %s14, 3
    %p217 = pnand %p215, %p216
    %p218 = pneg %p217
    // Predicated region
    $region9: #{_lambda_.3} parent=5 // pred_check
      _
    $region10: #{_lambda_.3} parent=5 // pred_check_branch
      %220 = sbr.rel (%p217) target = $region12
    $region11: #{_lambda_.3} parent=5 // pred_region
      %s221 = ssub.s32 %s14, 1
      // Predicated region
      $region13: #{_lambda_.3} parent=11 // pred_check
        %p222 = pneg %p61
      $region14: #{_lambda_.3} parent=11 // pred_check_branch
        %224 = sbr.rel (%p222) target = $region16
      $region15: #{_lambda_.3} parent=11 // pred_region
        _
      $region16: #{_lambda_.3} parent=11 // pred_fallthru
        _
      // Predicated region
      $region17: #{_lambda_.3} parent=11 // pred_check
        %p225 = pneg %p82
      $region18: #{_lambda_.3} parent=11 // pred_check_branch
        %227 = sbr.rel (%p225) target = $region20
      $region19: #{_lambda_.3} parent=11 // pred_region
        _
      $region20: #{_lambda_.3} parent=11 // pred_fallthru
        _
      // Predicated region
      $region21: #{_lambda_.3} parent=11 // pred_check
        %p228 = pneg %p103
      $region22: #{_lambda_.3} parent=11 // pred_check_branch
        %230 = sbr.rel (%p228) target = $region24
      $region23: #{_lambda_.3} parent=11 // pred_region
        _
      $region24: #{_lambda_.3} parent=11 // pred_fallthru
        _
    $region12: #{_lambda_.3} parent=5 // pred_fallthru
      _
    %p231 = scmp.lt.s32.totalorder %s14, 2
    // Predicated region
    $region25: #{_lambda_.3} parent=5 // pred_check
      %p232 = pneg %p231
    $region26: #{_lambda_.3} parent=5 // pred_check_branch
      %234 = sbr.rel (%p232) target = $region28
    $region27: #{_lambda_.3} parent=5 // pred_region
      // Predicated region
      $region29: #{_lambda_.3} parent=27 // pred_check
        %p235 = pneg %p34
      $region30: #{_lambda_.3} parent=27 // pred_check_branch
        %237 = sbr.rel (%p235) target = $region32
      $region31: #{_lambda_.3} parent=27 // pred_region
        %p238 = scmp.lt.s32.totalorder %s14, 1
        %s239 = scalar_select %p238, %s14, 1
        %s240 = smul.addr %s239, 32
        %s241 = smul.addr %s240, 8
        %s242 = scalar_lea.vmem %s0, %s241
      $region32: #{_lambda_.3} parent=27 // pred_fallthru
        _
    $region28: #{_lambda_.3} parent=5 // pred_fallthru
      _
    %p243 = scmp.le.s32.totalorder 1, %s14
    %p244 = scmp.lt.s32.totalorder %s14, 3
    %p245 = pnand %p243, %p244
    %p246 = pneg %p245
    // Predicated region
    $region33: #{_lambda_.3} parent=5 // pred_check
      _
    $region34: #{_lambda_.3} parent=5 // pred_check_branch
      %248 = sbr.rel (%p245) target = $region36
    $region35: #{_lambda_.3} parent=5 // pred_region
      %s249 = ssub.s32 %s14, 1
      %p250 = scmp.lt.s32.totalorder %s19, 1
      %s251 = scalar_select %p250, %s19, 1
      %s252 = smul.addr %s251, 32
      %s253 = smul.addr %s252, 8
      %s254 = scalar_lea.vmem %s0, %s253
      %p255 = pneg %p40
      %p256 = pneg %p37
      %p257 = pneg %p61
      %p258 = pneg %p58
      %p259 = pneg %p82
      %p260 = pneg %p79
      %p261 = pneg %p103
      %p262 = pneg %p100
      %p263 = pneg %p129
      %p264 = pneg %p126
      %p265 = scmp.lt.s32.totalorder %s19, 1
      %s266 = scalar_select %p265, %s19, 1
      %s267 = smul.addr %s266, 32
      %s268 = smul.addr %s267, 8
      %s269 = scalar_lea.vmem %s4, %s268
      %p270 = pneg %p155
      %p271 = pneg %p152
      %p272 = scmp.lt.s32.totalorder %s19, 1
      %s273 = scalar_select %p272, %s19, 1
      %s274 = smul.addr %s273, 32
      %s275 = smul.addr %s274, 8
      %s276 = scalar_lea.vmem %s5, %s275
      %p277 = pneg %p181
      %p278 = pneg %p178
      %p279 = scmp.lt.s32.totalorder %s19, 1
      %s280 = scalar_select %p279, %s19, 1
      %s281 = scalar_lea.vmem %s6, %s280
      %p282 = pneg %p207
      %p283 = pneg %p204
      %p284 = scmp.lt.s32.totalorder %s19, 1
      %s285 = scalar_select %p284, %s19, 1
      %s286 = scalar_lea.vmem %s7, %s285
      %p287 = scmp.lt.s32.totalorder %s19, 1
      %s288 = scalar_select %p287, %s19, 1
      %s289 = smul.addr %s288, 32
      %s290 = smul.addr %s289, 8
      %s291 = scalar_lea.vmem %s0, %s290
      %p292 = scmp.lt.s32.totalorder %s19, 1
      %s293 = scalar_select %p292, %s19, 1
      %s294 = smul.addr %s293, 32
      %s295 = smul.addr %s294, 8
      %s296 = scalar_lea.vmem %s4, %s295
      %p297 = scmp.lt.s32.totalorder %s19, 1
      %s298 = scalar_select %p297, %s19, 1
      %s299 = smul.addr %s298, 32
      %s300 = smul.addr %s299, 8
      %s301 = scalar_lea.vmem %s5, %s300
      %p302 = scmp.lt.s32.totalorder %s19, 1
      %s303 = scalar_select %p302, %s19, 1
      %s304 = scalar_lea.vmem %s6, %s303
      %p305 = scmp.lt.s32.totalorder %s19, 1
      %s306 = scalar_select %p305, %s19, 1
      %s307 = scalar_lea.vmem %s7, %s306
      %v309 = vld [vmem:[%s291] sm:$0xff]
      %v310 = vld [vmem:[%s291 + $0x8] sm:$0xff]
      %v311 = vld [vmem:[%s291 + $0x10] sm:$0xff]
      %v312 = vld [vmem:[%s291 + $0x18] sm:$0xff]
      %v313 = vld [vmem:[%s291 + $0x20] sm:$0xff]
      %v314 = vld [vmem:[%s291 + $0x28] sm:$0xff]
      %v315 = vld [vmem:[%s291 + $0x30] sm:$0xff]
      %v316 = vld [vmem:[%s291 + $0x38] sm:$0xff]
      %v317 = vld [vmem:[%s291 + $0x40] sm:$0xff]
      %v318 = vld [vmem:[%s291 + $0x48] sm:$0xff]
      %v319 = vld [vmem:[%s291 + $0x50] sm:$0xff]
      %v320 = vld [vmem:[%s291 + $0x58] sm:$0xff]
      %v321 = vld [vmem:[%s291 + $0x60] sm:$0xff]
      %v322 = vld [vmem:[%s291 + $0x68] sm:$0xff]
      %v323 = vld [vmem:[%s291 + $0x70] sm:$0xff]
      %v324 = vld [vmem:[%s291 + $0x78] sm:$0xff]
      %v325 = vld [vmem:[%s291 + $0x80] sm:$0xff]
      %v326 = vld [vmem:[%s291 + $0x88] sm:$0xff]
      %v327 = vld [vmem:[%s291 + $0x90] sm:$0xff]
      %v328 = vld [vmem:[%s291 + $0x98] sm:$0xff]
      %v329 = vld [vmem:[%s291 + $0xa0] sm:$0xff]
      %v330 = vld [vmem:[%s291 + $0xa8] sm:$0xff]
      %v331 = vld [vmem:[%s291 + $0xb0] sm:$0xff]
      %v332 = vld [vmem:[%s291 + $0xb8] sm:$0xff]
      %v333 = vld [vmem:[%s291 + $0xc0] sm:$0xff]
      %v334 = vld [vmem:[%s291 + $0xc8] sm:$0xff]
      %v335 = vld [vmem:[%s291 + $0xd0] sm:$0xff]
      %v336 = vld [vmem:[%s291 + $0xd8] sm:$0xff]
      %v337 = vld [vmem:[%s291 + $0xe0] sm:$0xff]
      %v338 = vld [vmem:[%s291 + $0xe8] sm:$0xff]
      %v339 = vld [vmem:[%s291 + $0xf0] sm:$0xff]
      %v340 = vld [vmem:[%s291 + $0xf8] sm:$0xff]
      %v341 = vmax.f32 %v309, 0.0
      %v342 = vmax.f32 %v310, 0.0
      %v343 = vmax.f32 %v311, 0.0
      %v344 = vmax.f32 %v312, 0.0
      %v345 = vmax.f32 %v313, 0.0
      %v346 = vmax.f32 %v314, 0.0
      %v347 = vmax.f32 %v315, 0.0
      %v348 = vmax.f32 %v316, 0.0
      %v349 = vmax.f32 %v317, 0.0
      %v350 = vmax.f32 %v318, 0.0
      %v351 = vmax.f32 %v319, 0.0
      %v352 = vmax.f32 %v320, 0.0
      %v353 = vmax.f32 %v321, 0.0
      %v354 = vmax.f32 %v322, 0.0
      %v355 = vmax.f32 %v323, 0.0
      %v356 = vmax.f32 %v324, 0.0
      %v357 = vmax.f32 %v325, 0.0
      %v358 = vmax.f32 %v326, 0.0
      %v359 = vmax.f32 %v327, 0.0
      %v360 = vmax.f32 %v328, 0.0
      %v361 = vmax.f32 %v329, 0.0
      %v362 = vmax.f32 %v330, 0.0
      %v363 = vmax.f32 %v331, 0.0
      %v364 = vmax.f32 %v332, 0.0
      %v365 = vmax.f32 %v333, 0.0
      %v366 = vmax.f32 %v334, 0.0
      %v367 = vmax.f32 %v335, 0.0
      %v368 = vmax.f32 %v336, 0.0
      %v369 = vmax.f32 %v337, 0.0
      %v370 = vmax.f32 %v338, 0.0
      %v371 = vmax.f32 %v339, 0.0
      %v372 = vmax.f32 %v340, 0.0
      %v373 = vpack.c.bf16 %v342, %v341
      %v374 = vpack.c.bf16 %v344, %v343
      %v375 = vpack.c.bf16 %v346, %v345
      %v376 = vpack.c.bf16 %v348, %v347
      %v377 = vpack.c.bf16 %v350, %v349
      %v378 = vpack.c.bf16 %v352, %v351
      %v379 = vpack.c.bf16 %v354, %v353
      %v380 = vpack.c.bf16 %v356, %v355
      %v381 = vpack.c.bf16 %v358, %v357
      %v382 = vpack.c.bf16 %v360, %v359
      %v383 = vpack.c.bf16 %v362, %v361
      %v384 = vpack.c.bf16 %v364, %v363
      %v385 = vpack.c.bf16 %v366, %v365
      %v386 = vpack.c.bf16 %v368, %v367
      %v387 = vpack.c.bf16 %v370, %v369
      %v388 = vpack.c.bf16 %v372, %v371
      %v389 = vld [vmem:[%s1] sm:$0xf]
      %v390 = vld [vmem:[%s1 + $0x4] sm:$0xf]
      %v391 = vld [vmem:[%s1 + $0x8] sm:$0xf]
      %v392 = vld [vmem:[%s1 + $0xc] sm:$0xf]
      %v393 = vld [vmem:[%s1 + $0x10] sm:$0xf]
      %v394 = vld [vmem:[%s1 + $0x14] sm:$0xf]
      %v395 = vld [vmem:[%s1 + $0x18] sm:$0xf]
      %v396 = vld [vmem:[%s1 + $0x1c] sm:$0xf]
      %v397 = vld [vmem:[%s1 + $0x20] sm:$0xf]
      %v398 = vld [vmem:[%s1 + $0x24] sm:$0xf]
      %v399 = vld [vmem:[%s1 + $0x28] sm:$0xf]
      %v400 = vld [vmem:[%s1 + $0x2c] sm:$0xf]
      %v401 = vld [vmem:[%s1 + $0x30] sm:$0xf]
      %v402 = vld [vmem:[%s1 + $0x34] sm:$0xf]
      %v403 = vld [vmem:[%s1 + $0x38] sm:$0xf]
      %v404 = vld [vmem:[%s1 + $0x3c] sm:$0xf]
      %v421 = vunpack.c.l.b16 %v389
      %v422 = vunpack.c.l.b16 %v390
      %v423 = vunpack.c.l.b16 %v391
      %v424 = vunpack.c.l.b16 %v392
      %v425 = vunpack.c.l.b16 %v393
      %v426 = vunpack.c.l.b16 %v394
      %v427 = vunpack.c.l.b16 %v395
      %v428 = vunpack.c.l.b16 %v396
      %v429 = vunpack.c.l.b16 %v397
      %v430 = vunpack.c.l.b16 %v398
      %v431 = vunpack.c.l.b16 %v399
      %v432 = vunpack.c.l.b16 %v400
      %v433 = vunpack.c.l.b16 %v401
      %v434 = vunpack.c.l.b16 %v402
      %v435 = vunpack.c.l.b16 %v403
      %v436 = vunpack.c.l.b16 %v404
      %v437 = vpack.c.b16 %v422, %v421
      %v438 = vpack.c.b16 %v424, %v423
      %v439 = vpack.c.b16 %v426, %v425
      %v440 = vpack.c.b16 %v428, %v427
      %v441 = vpack.c.b16 %v430, %v429
      %v442 = vpack.c.b16 %v432, %v431
      %v443 = vpack.c.b16 %v434, %v433
      %v444 = vpack.c.b16 %v436, %v435
      %453 = vmatprep.subr.bf16.mxu0 0
      %454 = vmatpush1.bf16.msra.mxu0 %v437
      %455 = vmatprep.subr.bf16.mxu0 0
      %456 = vmatpush1.bf16.msra.mxu0 %v438
      %457 = vmatprep.subr.bf16.mxu0 0
      %458 = vmatpush1.bf16.msra.mxu0 %v439
      %459 = vmatprep.subr.bf16.mxu0 0
      %460 = vmatpush1.bf16.msra.mxu0 %v440
      %461 = vmatprep.subr.bf16.mxu0 0
      %462 = vmatpush1.bf16.msra.mxu0 %v441
      %463 = vmatprep.subr.bf16.mxu0 0
      %464 = vmatpush1.bf16.msra.mxu0 %v442
      %465 = vmatprep.subr.bf16.mxu0 0
      %466 = vmatpush1.bf16.msra.mxu0 %v443
      %467 = vmatprep.subr.bf16.mxu0 0
      %468 = vmatpush1.bf16.msra.mxu0 %v444
      %469 = vmatprep.subr.bf16.mxu0 0
      %470 = vmatpush1.bf16.msra.mxu0 0
      %471 = vmatprep.subr.bf16.mxu0 0
      %472 = vmatpush1.bf16.msra.mxu0 0
      %473 = vmatprep.subr.bf16.mxu0 0
      %474 = vmatpush1.bf16.msra.mxu0 0
      %475 = vmatprep.subr.bf16.mxu0 0
      %476 = vmatpush1.bf16.msra.mxu0 0
      %477 = vmatprep.subr.bf16.mxu0 0
      %478 = vmatpush1.bf16.msra.mxu0 0
      %479 = vmatprep.subr.bf16.mxu0 0
      %480 = vmatpush1.bf16.msra.mxu0 0
      %481 = vmatprep.subr.bf16.mxu0 0
      %482 = vmatpush1.bf16.msra.mxu0 0
      %483 = vmatprep.subr.bf16.mxu0 0
      %484 = vmatpush1.bf16.msra.mxu0 0
      %485 = vmatprep.mubr.bf16.mxu0 0
      %486 = vmatmul.mubr.bf16.gmra.mrb[0].mxu0 %v373
      %v487 = vpop.f32.mrb[0].mxu0
      %v488 = vadd.f32 0.0, %v487
      %v489 = vpop.f32.mrb[0].mxu0
      %v490 = vpop.f32.mrb[0].mxu0
      %v491 = vadd.f32 0.0, %v490
      %v492 = vpop.f32.mrb[0].mxu0
      %493 = vmatprep.mubr.bf16.mxu0 0
      %494 = vmatmul.mubr.bf16.gmra.mrb[0].mxu0 %v374
      %v495 = vpop.f32.mrb[0].mxu0
      %v496 = vadd.f32 0.0, %v495
      %v497 = vpop.f32.mrb[0].mxu0
      %v498 = vpop.f32.mrb[0].mxu0
      %v499 = vadd.f32 0.0, %v498
      %v500 = vpop.f32.mrb[0].mxu0
      %501 = vmatprep.mubr.bf16.mxu0 0
      %502 = vmatmul.mubr.bf16.gmra.mrb[0].mxu0 %v375
      %v503 = vpop.f32.mrb[0].mxu0
      %v504 = vadd.f32 0.0, %v503
      %v505 = vpop.f32.mrb[0].mxu0
      %v506 = vpop.f32.mrb[0].mxu0
      %v507 = vadd.f32 0.0, %v506
      %v508 = vpop.f32.mrb[0].mxu0
      %509 = vmatprep.mubr.bf16.mxu0 0
      %510 = vmatmul.mubr.bf16.gmra.mrb[0].mxu0 %v376
      %v511 = vpop.f32.mrb[0].mxu0
      %v512 = vadd.f32 0.0, %v511
      %v513 = vpop.f32.mrb[0].mxu0
      %v514 = vpop.f32.mrb[0].mxu0
      %v515 = vadd.f32 0.0, %v514
      %v516 = vpop.f32.mrb[0].mxu0
      %517 = vmatprep.mubr.bf16.mxu0 0
      %518 = vmatmul.mubr.bf16.gmra.mrb[0].mxu0 %v377
      %v519 = vpop.f32.mrb[0].mxu0
      %v520 = vadd.f32 0.0, %v519
      %v521 = vpop.f32.mrb[0].mxu0
      %v522 = vpop.f32.mrb[0].mxu0
      %v523 = vadd.f32 0.0, %v522
      %v524 = vpop.f32.mrb[0].mxu0
      %525 = vmatprep.mubr.bf16.mxu0 0
      %526 = vmatmul.mubr.bf16.gmra.mrb[0].mxu0 %v378
      %v527 = vpop.f32.mrb[0].mxu0
      %v528 = vadd.f32 0.0, %v527
      %v529 = vpop.f32.mrb[0].mxu0
      %v530 = vpop.f32.mrb[0].mxu0
      %v531 = vadd.f32 0.0, %v530
      %v532 = vpop.f32.mrb[0].mxu0
      %533 = vmatprep.mubr.bf16.mxu0 0
      %534 = vmatmul.mubr.bf16.gmra.mrb[0].mxu0 %v379
      %v535 = vpop.f32.mrb[0].mxu0
      %v536 = vadd.f32 0.0, %v535
      %v537 = vpop.f32.mrb[0].mxu0
      %v538 = vpop.f32.mrb[0].mxu0
      %v539 = vadd.f32 0.0, %v538
      %v540 = vpop.f32.mrb[0].mxu0
      %541 = vmatprep.mubr.bf16.mxu0 0
      %542 = vmatmul.mubr.bf16.gmra.mrb[0].mxu0 %v380
      %v543 = vpop.f32.mrb[0].mxu0
      %v544 = vadd.f32 0.0, %v543
      %v545 = vpop.f32.mrb[0].mxu0
      %v546 = vpop.f32.mrb[0].mxu0
      %v547 = vadd.f32 0.0, %v546
      %v548 = vpop.f32.mrb[0].mxu0
      %549 = vmatprep.mubr.bf16.mxu0 0
      %550 = vmatmul.mubr.bf16.gmra.mrb[0].mxu0 %v381
      %v551 = vpop.f32.mrb[0].mxu0
      %v552 = vadd.f32 0.0, %v551
      %v553 = vpop.f32.mrb[0].mxu0
      %v554 = vpop.f32.mrb[0].mxu0
      %v555 = vadd.f32 0.0, %v554
      %v556 = vpop.f32.mrb[0].mxu0
      %557 = vmatprep.mubr.bf16.mxu0 0
      %558 = vmatmul.mubr.bf16.gmra.mrb[0].mxu0 %v382
      %v559 = vpop.f32.mrb[0].mxu0
      %v560 = vadd.f32 0.0, %v559
      %v561 = vpop.f32.mrb[0].mxu0
      %v562 = vpop.f32.mrb[0].mxu0
      %v563 = vadd.f32 0.0, %v562
      %v564 = vpop.f32.mrb[0].mxu0
      %565 = vmatprep.mubr.bf16.mxu0 0
      %566 = vmatmul.mubr.bf16.gmra.mrb[0].mxu0 %v383
      %v567 = vpop.f32.mrb[0].mxu0
      %v568 = vadd.f32 0.0, %v567
      %v569 = vpop.f32.mrb[0].mxu0
      %v570 = vpop.f32.mrb[0].mxu0
      %v571 = vadd.f32 0.0, %v570
      %v572 = vpop.f32.mrb[0].mxu0
      %573 = vmatprep.mubr.bf16.mxu0 0
      %574 = vmatmul.mubr.bf16.gmra.mrb[0].mxu0 %v384
      %v575 = vpop.f32.mrb[0].mxu0
      %v576 = vadd.f32 0.0, %v575
      %v577 = vpop.f32.mrb[0].mxu0
      %v578 = vpop.f32.mrb[0].mxu0
      %v579 = vadd.f32 0.0, %v578
      %v580 = vpop.f32.mrb[0].mxu0
      %581 = vmatprep.mubr.bf16.mxu0 0
      %582 = vmatmul.mubr.bf16.gmra.mrb[0].mxu0 %v385
      %v583 = vpop.f32.mrb[0].mxu0
      %v584 = vadd.f32 0.0, %v583
      %v585 = vpop.f32.mrb[0].mxu0
      %v586 = vpop.f32.mrb[0].mxu0
      %v587 = vadd.f32 0.0, %v586
      %v588 = vpop.f32.mrb[0].mxu0
      %589 = vmatprep.mubr.bf16.mxu0 0
      %590 = vmatmul.mubr.bf16.gmra.mrb[0].mxu0 %v386
      %v591 = vpop.f32.mrb[0].mxu0
      %v592 = vadd.f32 0.0, %v591
      %v593 = vpop.f32.mrb[0].mxu0
      %v594 = vpop.f32.mrb[0].mxu0
      %v595 = vadd.f32 0.0, %v594
      %v596 = vpop.f32.mrb[0].mxu0
      %597 = vmatprep.mubr.bf16.mxu0 0
      %598 = vmatmul.mubr.bf16.gmra.mrb[0].mxu0 %v387
      %v599 = vpop.f32.mrb[0].mxu0
      %v600 = vadd.f32 0.0, %v599
      %v601 = vpop.f32.mrb[0].mxu0
      %v602 = vpop.f32.mrb[0].mxu0
      %v603 = vadd.f32 0.0, %v602
      %v604 = vpop.f32.mrb[0].mxu0
      %605 = vmatprep.mubr.bf16.mxu0 0
      %606 = vmatmul.mubr.bf16.gmra.mrb[0].mxu0 %v388
      %v607 = vpop.f32.mrb[0].mxu0
      %v608 = vadd.f32 0.0, %v607
      %v609 = vpop.f32.mrb[0].mxu0
      %v610 = vpop.f32.mrb[0].mxu0
      %v611 = vadd.f32 0.0, %v610
      %v612 = vpop.f32.mrb[0].mxu0
      %613 = vdwg.mxu0
      %vm614 = vcmask 392192
      %615 = vst.msk [vmem:[%s296] sm:$0xff] %vm614, %v488
      %616 = vst.msk [vmem:[%s296 + $0x8] sm:$0xff] %vm614, %v491
      %617 = vst.msk [vmem:[%s296 + $0x10] sm:$0xff] %vm614, %v496
      %618 = vst.msk [vmem:[%s296 + $0x18] sm:$0xff] %vm614, %v499
      %619 = vst.msk [vmem:[%s296 + $0x20] sm:$0xff] %vm614, %v504
      %620 = vst.msk [vmem:[%s296 + $0x28] sm:$0xff] %vm614, %v507
      %621 = vst.msk [vmem:[%s296 + $0x30] sm:$0xff] %vm614, %v512
      %622 = vst.msk [vmem:[%s296 + $0x38] sm:$0xff] %vm614, %v515
      %623 = vst.msk [vmem:[%s296 + $0x40] sm:$0xff] %vm614, %v520
      %624 = vst.msk [vmem:[%s296 + $0x48] sm:$0xff] %vm614, %v523
      %625 = vst.msk [vmem:[%s296 + $0x50] sm:$0xff] %vm614, %v528
      %626 = vst.msk [vmem:[%s296 + $0x58] sm:$0xff] %vm614, %v531
      %627 = vst.msk [vmem:[%s296 + $0x60] sm:$0xff] %vm614, %v536
      %628 = vst.msk [vmem:[%s296 + $0x68] sm:$0xff] %vm614, %v539
      %629 = vst.msk [vmem:[%s296 + $0x70] sm:$0xff] %vm614, %v544
      %630 = vst.msk [vmem:[%s296 + $0x78] sm:$0xff] %vm614, %v547
      %631 = vst.msk [vmem:[%s296 + $0x80] sm:$0xff] %vm614, %v552
      %632 = vst.msk [vmem:[%s296 + $0x88] sm:$0xff] %vm614, %v555
      %633 = vst.msk [vmem:[%s296 + $0x90] sm:$0xff] %vm614, %v560
      %634 = vst.msk [vmem:[%s296 + $0x98] sm:$0xff] %vm614, %v563
      %635 = vst.msk [vmem:[%s296 + $0xa0] sm:$0xff] %vm614, %v568
      %636 = vst.msk [vmem:[%s296 + $0xa8] sm:$0xff] %vm614, %v571
      %637 = vst.msk [vmem:[%s296 + $0xb0] sm:$0xff] %vm614, %v576
      %638 = vst.msk [vmem:[%s296 + $0xb8] sm:$0xff] %vm614, %v579
      %639 = vst.msk [vmem:[%s296 + $0xc0] sm:$0xff] %vm614, %v584
      %640 = vst.msk [vmem:[%s296 + $0xc8] sm:$0xff] %vm614, %v587
      %641 = vst.msk [vmem:[%s296 + $0xd0] sm:$0xff] %vm614, %v592
      %642 = vst.msk [vmem:[%s296 + $0xd8] sm:$0xff] %vm614, %v595
      %643 = vst.msk [vmem:[%s296 + $0xe0] sm:$0xff] %vm614, %v600
      %644 = vst.msk [vmem:[%s296 + $0xe8] sm:$0xff] %vm614, %v603
      %645 = vst.msk [vmem:[%s296 + $0xf0] sm:$0xff] %vm614, %v608
      %646 = vst.msk [vmem:[%s296 + $0xf8] sm:$0xff] %vm614, %v611
      %v647 = vsel %vm614, %v488, 0.0
      %v648 = vsel %vm614, %v491, 0.0
      %v649 = vadd.f32 %v647, %v648
      %v650 = vsel %vm614, %v496, 0.0
      %v651 = vadd.f32 %v649, %v650
      %v652 = vsel %vm614, %v499, 0.0
      %v653 = vadd.f32 %v651, %v652
      %v654 = vsel %vm614, %v504, 0.0
      %v655 = vadd.f32 %v653, %v654
      %v656 = vsel %vm614, %v507, 0.0
      %v657 = vadd.f32 %v655, %v656
      %v658 = vsel %vm614, %v512, 0.0
      %v659 = vadd.f32 %v657, %v658
      %v660 = vsel %vm614, %v515, 0.0
      %v661 = vadd.f32 %v659, %v660
      %v662 = vsel %vm614, %v520, 0.0
      %v663 = vadd.f32 %v661, %v662
      %v664 = vsel %vm614, %v523, 0.0
      %v665 = vadd.f32 %v663, %v664
      %v666 = vsel %vm614, %v528, 0.0
      %v667 = vadd.f32 %v665, %v666
      %v668 = vsel %vm614, %v531, 0.0
      %v669 = vadd.f32 %v667, %v668
      %v670 = vsel %vm614, %v536, 0.0
      %v671 = vadd.f32 %v669, %v670
      %v672 = vsel %vm614, %v539, 0.0
      %v673 = vadd.f32 %v671, %v672
      %v674 = vsel %vm614, %v544, 0.0
      %v675 = vadd.f32 %v673, %v674
      %v676 = vsel %vm614, %v547, 0.0
      %v677 = vadd.f32 %v675, %v676
      %v678 = vsel %vm614, %v552, 0.0
      %v679 = vadd.f32 %v677, %v678
      %v680 = vsel %vm614, %v555, 0.0
      %v681 = vadd.f32 %v679, %v680
      %v682 = vsel %vm614, %v560, 0.0
      %v683 = vadd.f32 %v681, %v682
      %v684 = vsel %vm614, %v563, 0.0
      %v685 = vadd.f32 %v683, %v684
      %v686 = vsel %vm614, %v568, 0.0
      %v687 = vadd.f32 %v685, %v686
      %v688 = vsel %vm614, %v571, 0.0
      %v689 = vadd.f32 %v687, %v688
      %v690 = vsel %vm614, %v576, 0.0
      %v691 = vadd.f32 %v689, %v690
      %v692 = vsel %vm614, %v579, 0.0
      %v693 = vadd.f32 %v691, %v692
      %v694 = vsel %vm614, %v584, 0.0
      %v695 = vadd.f32 %v693, %v694
      %v696 = vsel %vm614, %v587, 0.0
      %v697 = vadd.f32 %v695, %v696
      %v698 = vsel %vm614, %v592, 0.0
      %v699 = vadd.f32 %v697, %v698
      %v700 = vsel %vm614, %v595, 0.0
      %v701 = vadd.f32 %v699, %v700
      %v702 = vsel %vm614, %v600, 0.0
      %v703 = vadd.f32 %v701, %v702
      %v704 = vsel %vm614, %v603, 0.0
      %v705 = vadd.f32 %v703, %v704
      %v706 = vsel %vm614, %v608, 0.0
      %v707 = vadd.f32 %v705, %v706
      %v708 = vsel %vm614, %v611, 0.0
      %v709 = vadd.f32 %v707, %v708
      %v710 = vrot.slane %v709, 4
      %v711 = vadd.f32 %v709, %v710
      %v712 = vrot.slane %v711, 2
      %v713 = vadd.f32 %v711, %v712
      %v714 = vrot.slane %v713, 1
      %v715 = vadd.f32 %v713, %v714
      %vm716 = vcmask 385024
      %717 = vst.msk [vmem:[%s304] sm:$0x1] %vm716, %v715
      %v718 = vmul.f32 %v488, %v488
      %v719 = vmul.f32 %v491, %v491
      %v720 = vmul.f32 %v496, %v496
      %v721 = vmul.f32 %v499, %v499
      %v722 = vmul.f32 %v504, %v504
      %v723 = vmul.f32 %v507, %v507
      %v724 = vmul.f32 %v512, %v512
      %v725 = vmul.f32 %v515, %v515
      %v726 = vmul.f32 %v520, %v520
      %v727 = vmul.f32 %v523, %v523
      %v728 = vmul.f32 %v528, %v528
      %v729 = vmul.f32 %v531, %v531
      %v730 = vmul.f32 %v536, %v536
      %v731 = vmul.f32 %v539, %v539
      %v732 = vmul.f32 %v544, %v544
      %v733 = vmul.f32 %v547, %v547
      %v734 = vmul.f32 %v552, %v552
      %v735 = vmul.f32 %v555, %v555
      %v736 = vmul.f32 %v560, %v560
      %v737 = vmul.f32 %v563, %v563
      %v738 = vmul.f32 %v568, %v568
      %v739 = vmul.f32 %v571, %v571
      %v740 = vmul.f32 %v576, %v576
      %v741 = vmul.f32 %v579, %v579
      %v742 = vmul.f32 %v584, %v584
      %v743 = vmul.f32 %v587, %v587
      %v744 = vmul.f32 %v592, %v592
      %v745 = vmul.f32 %v595, %v595
      %v746 = vmul.f32 %v600, %v600
      %v747 = vmul.f32 %v603, %v603
      %v748 = vmul.f32 %v608, %v608
      %v749 = vmul.f32 %v611, %v611
      %v750 = vsel %vm614, %v718, 0.0
      %v751 = vsel %vm614, %v719, 0.0
      %v752 = vadd.f32 %v750, %v751
      %v753 = vsel %vm614, %v720, 0.0
      %v754 = vadd.f32 %v752, %v753
      %v755 = vsel %vm614, %v721, 0.0
      %v756 = vadd.f32 %v754, %v755
      %v757 = vsel %vm614, %v722, 0.0
      %v758 = vadd.f32 %v756, %v757
      %v759 = vsel %vm614, %v723, 0.0
      %v760 = vadd.f32 %v758, %v759
      %v761 = vsel %vm614, %v724, 0.0
      %v762 = vadd.f32 %v760, %v761
      %v763 = vsel %vm614, %v725, 0.0
      %v764 = vadd.f32 %v762, %v763
      %v765 = vsel %vm614, %v726, 0.0
      %v766 = vadd.f32 %v764, %v765
      %v767 = vsel %vm614, %v727, 0.0
      %v768 = vadd.f32 %v766, %v767
      %v769 = vsel %vm614, %v728, 0.0
      %v770 = vadd.f32 %v768, %v769
      %v771 = vsel %vm614, %v729, 0.0
      %v772 = vadd.f32 %v770, %v771
      %v773 = vsel %vm614, %v730, 0.0
      %v774 = vadd.f32 %v772, %v773
      %v775 = vsel %vm614, %v731, 0.0
      %v776 = vadd.f32 %v774, %v775
      %v777 = vsel %vm614, %v732, 0.0
      %v778 = vadd.f32 %v776, %v777
      %v779 = vsel %vm614, %v733, 0.0
      %v780 = vadd.f32 %v778, %v779
      %v781 = vsel %vm614, %v734, 0.0
      %v782 = vadd.f32 %v780, %v781
      %v783 = vsel %vm614, %v735, 0.0
      %v784 = vadd.f32 %v782, %v783
      %v785 = vsel %vm614, %v736, 0.0
      %v786 = vadd.f32 %v784, %v785
      %v787 = vsel %vm614, %v737, 0.0
      %v788 = vadd.f32 %v786, %v787
      %v789 = vsel %vm614, %v738, 0.0
      %v790 = vadd.f32 %v788, %v789
      %v791 = vsel %vm614, %v739, 0.0
      %v792 = vadd.f32 %v790, %v791
      %v793 = vsel %vm614, %v740, 0.0
      %v794 = vadd.f32 %v792, %v793
      %v795 = vsel %vm614, %v741, 0.0
      %v796 = vadd.f32 %v794, %v795
      %v797 = vsel %vm614, %v742, 0.0
      %v798 = vadd.f32 %v796, %v797
      %v799 = vsel %vm614, %v743, 0.0
      %v800 = vadd.f32 %v798, %v799
      %v801 = vsel %vm614, %v744, 0.0
      %v802 = vadd.f32 %v800, %v801
      %v803 = vsel %vm614, %v745, 0.0
      %v804 = vadd.f32 %v802, %v803
      %v805 = vsel %vm614, %v746, 0.0
      %v806 = vadd.f32 %v804, %v805
      %v807 = vsel %vm614, %v747, 0.0
      %v808 = vadd.f32 %v806, %v807
      %v809 = vsel %vm614, %v748, 0.0
      %v810 = vadd.f32 %v808, %v809
      %v811 = vsel %vm614, %v749, 0.0
      %v812 = vadd.f32 %v810, %v811
      %v813 = vrot.slane %v812, 4
      %v814 = vadd.f32 %v812, %v813
      %v815 = vrot.slane %v814, 2
      %v816 = vadd.f32 %v814, %v815
      %v817 = vrot.slane %v816, 1
      %v818 = vadd.f32 %v816, %v817
      %819 = vst.msk [vmem:[%s307] sm:$0x1] %vm716, %v818
      %v820 = vld [vmem:[%s2] sm:$0xff]
      %v821 = vld [vmem:[%s2 + $0x8] sm:$0xff]
      %v822 = vld [vmem:[%s2 + $0x10] sm:$0xff]
      %v823 = vld [vmem:[%s2 + $0x18] sm:$0xff]
      %v824 = vld [vmem:[%s2 + $0x20] sm:$0xff]
      %v825 = vld [vmem:[%s2 + $0x28] sm:$0xff]
      %v826 = vld [vmem:[%s2 + $0x30] sm:$0xff]
      %v827 = vld [vmem:[%s2 + $0x38] sm:$0xff]
      %v828 = vld [vmem:[%s2 + $0x40] sm:$0xff]
      %v829 = vld [vmem:[%s2 + $0x48] sm:$0xff]
      %v830 = vld [vmem:[%s2 + $0x50] sm:$0xff]
      %v831 = vld [vmem:[%s2 + $0x58] sm:$0xff]
      %v832 = vld [vmem:[%s2 + $0x60] sm:$0xff]
      %v833 = vld [vmem:[%s2 + $0x68] sm:$0xff]
      %v834 = vld [vmem:[%s2 + $0x70] sm:$0xff]
      %v835 = vld [vmem:[%s2 + $0x78] sm:$0xff]
      %836 = vmatprep.subr.mxu0 0.0
      %837 = vmatpush1.msra.mxu0 %v820
      %838 = vmatprep.subr.mxu0 0.0
      %839 = vmatpush1.msra.mxu0 %v821
      %840 = vmatprep.subr.mxu0 0.0
      %841 = vmatpush1.msra.mxu0 %v822
      %842 = vmatprep.subr.mxu0 0.0
      %843 = vmatpush1.msra.mxu0 %v823
      %844 = vmatprep.subr.mxu0 0.0
      %845 = vmatpush1.msra.mxu0 %v824
      %846 = vmatprep.subr.mxu0 0.0
      %847 = vmatpush1.msra.mxu0 %v825
      %848 = vmatprep.subr.mxu0 0.0
      %849 = vmatpush1.msra.mxu0 %v826
      %850 = vmatprep.subr.mxu0 0.0
      %851 = vmatpush1.msra.mxu0 %v827
      %852 = vmatprep.subr.mxu0 0.0
      %853 = vmatpush1.msra.mxu0 %v828
      %854 = vmatprep.subr.mxu0 0.0
      %855 = vmatpush1.msra.mxu0 %v829
      %856 = vmatprep.subr.mxu0 0.0
      %857 = vmatpush1.msra.mxu0 %v830
      %858 = vmatprep.subr.mxu0 0.0
      %859 = vmatpush1.msra.mxu0 %v831
      %860 = vmatprep.subr.mxu0 0.0
      %861 = vmatpush1.msra.mxu0 %v832
      %862 = vmatprep.subr.mxu0 0.0
      %863 = vmatpush1.msra.mxu0 %v833
      %864 = vmatprep.subr.mxu0 0.0
      %865 = vmatpush1.msra.mxu0 %v834
      %866 = vmatprep.subr.mxu0 0.0
      %867 = vmatpush1.msra.mxu0 %v835
      %868 = vmatprep.subr.mxu0 0.0
      %869 = vmatpush1.msra.mxu0 0.0
      %870 = vmatprep.subr.mxu0 0.0
      %871 = vmatpush1.msra.mxu0 0.0
      %872 = vmatprep.subr.mxu0 0.0
      %873 = vmatpush1.msra.mxu0 0.0
      %874 = vmatprep.subr.mxu0 0.0
      %875 = vmatpush1.msra.mxu0 0.0
      %876 = vmatprep.subr.mxu0 0.0
      %877 = vmatpush1.msra.mxu0 0.0
      %878 = vmatprep.subr.mxu0 0.0
      %879 = vmatpush1.msra.mxu0 0.0
      %880 = vmatprep.subr.mxu0 0.0
      %881 = vmatpush1.msra.mxu0 0.0
      %882 = vmatprep.subr.mxu0 0.0
      %883 = vmatpush1.msra.mxu0 0.0
      %884 = vmatprep.subr.mxu0 0.0
      %885 = vmatpush1.msra.mxu0 0.0
      %886 = vmatprep.subr.mxu0 0.0
      %887 = vmatpush1.msra.mxu0 0.0
      %888 = vmatprep.subr.mxu0 0.0
      %889 = vmatpush1.msra.mxu0 0.0
      %890 = vmatprep.subr.mxu0 0.0
      %891 = vmatpush1.msra.mxu0 0.0
      %892 = vmatprep.subr.mxu0 0.0
      %893 = vmatpush1.msra.mxu0 0.0
      %894 = vmatprep.subr.mxu0 0.0
      %895 = vmatpush1.msra.mxu0 0.0
      %896 = vmatprep.subr.mxu0 0.0
      %897 = vmatpush1.msra.mxu0 0.0
      %898 = vmatprep.subr.mxu0 0.0
      %899 = vmatpush1.msra.mxu0 0.0
      %900 = vmatprep.mubr.f32.mxu0 0.0
      %901 = vmatmul.mubr.f32.gmra.mrb[0].mxu0 %v309
      %v902 = vpop.f32.mrb[0].mxu0
      %v903 = vadd.f32 0.0, %v902
      %v904 = vpop.f32.mrb[0].mxu0
      %905 = vmatprep.mubr.f32.mxu0 0.0
      %906 = vmatmul.mubr.f32.gmra.mrb[0].mxu0 %v310
      %v907 = vpop.f32.mrb[0].mxu0
      %v908 = vadd.f32 0.0, %v907
      %v909 = vpop.f32.mrb[0].mxu0
      %910 = vmatprep.mubr.f32.mxu0 0.0
      %911 = vmatmul.mubr.f32.gmra.mrb[0].mxu0 %v311
      %v912 = vpop.f32.mrb[0].mxu0
      %v913 = vadd.f32 0.0, %v912
      %v914 = vpop.f32.mrb[0].mxu0
      %915 = vmatprep.mubr.f32.mxu0 0.0
      %916 = vmatmul.mubr.f32.gmra.mrb[0].mxu0 %v312
      %v917 = vpop.f32.mrb[0].mxu0
      %v918 = vadd.f32 0.0, %v917
      %v919 = vpop.f32.mrb[0].mxu0
      %920 = vmatprep.mubr.f32.mxu0 0.0
      %921 = vmatmul.mubr.f32.gmra.mrb[0].mxu0 %v313
      %v922 = vpop.f32.mrb[0].mxu0
      %v923 = vadd.f32 0.0, %v922
      %v924 = vpop.f32.mrb[0].mxu0
      %925 = vmatprep.mubr.f32.mxu0 0.0
      %926 = vmatmul.mubr.f32.gmra.mrb[0].mxu0 %v314
      %v927 = vpop.f32.mrb[0].mxu0
      %v928 = vadd.f32 0.0, %v927
      %v929 = vpop.f32.mrb[0].mxu0
      %930 = vmatprep.mubr.f32.mxu0 0.0
      %931 = vmatmul.mubr.f32.gmra.mrb[0].mxu0 %v315
      %v932 = vpop.f32.mrb[0].mxu0
      %v933 = vadd.f32 0.0, %v932
      %v934 = vpop.f32.mrb[0].mxu0
      %935 = vmatprep.mubr.f32.mxu0 0.0
      %936 = vmatmul.mubr.f32.gmra.mrb[0].mxu0 %v316
      %v937 = vpop.f32.mrb[0].mxu0
      %v938 = vadd.f32 0.0, %v937
      %v939 = vpop.f32.mrb[0].mxu0
      %940 = vmatprep.mubr.f32.mxu0 0.0
      %941 = vmatmul.mubr.f32.gmra.mrb[0].mxu0 %v317
      %v942 = vpop.f32.mrb[0].mxu0
      %v943 = vadd.f32 0.0, %v942
      %v944 = vpop.f32.mrb[0].mxu0
      %945 = vmatprep.mubr.f32.mxu0 0.0
      %946 = vmatmul.mubr.f32.gmra.mrb[0].mxu0 %v318
      %v947 = vpop.f32.mrb[0].mxu0
      %v948 = vadd.f32 0.0, %v947
      %v949 = vpop.f32.mrb[0].mxu0
      %950 = vmatprep.mubr.f32.mxu0 0.0
      %951 = vmatmul.mubr.f32.gmra.mrb[0].mxu0 %v319
      %v952 = vpop.f32.mrb[0].mxu0
      %v953 = vadd.f32 0.0, %v952
      %v954 = vpop.f32.mrb[0].mxu0
      %955 = vmatprep.mubr.f32.mxu0 0.0
      %956 = vmatmul.mubr.f32.gmra.mrb[0].mxu0 %v320
      %v957 = vpop.f32.mrb[0].mxu0
      %v958 = vadd.f32 0.0, %v957
      %v959 = vpop.f32.mrb[0].mxu0
      %960 = vmatprep.mubr.f32.mxu0 0.0
      %961 = vmatmul.mubr.f32.gmra.mrb[0].mxu0 %v321
      %v962 = vpop.f32.mrb[0].mxu0
      %v963 = vadd.f32 0.0, %v962
      %v964 = vpop.f32.mrb[0].mxu0
      %965 = vmatprep.mubr.f32.mxu0 0.0
      %966 = vmatmul.mubr.f32.gmra.mrb[0].mxu0 %v322
      %v967 = vpop.f32.mrb[0].mxu0
      %v968 = vadd.f32 0.0, %v967
      %v969 = vpop.f32.mrb[0].mxu0
      %970 = vmatprep.mubr.f32.mxu0 0.0
      %971 = vmatmul.mubr.f32.gmra.mrb[0].mxu0 %v323
      %v972 = vpop.f32.mrb[0].mxu0
      %v973 = vadd.f32 0.0, %v972
      %v974 = vpop.f32.mrb[0].mxu0
      %975 = vmatprep.mubr.f32.mxu0 0.0
      %976 = vmatmul.mubr.f32.gmra.mrb[0].mxu0 %v324
      %v977 = vpop.f32.mrb[0].mxu0
      %v978 = vadd.f32 0.0, %v977
      %v979 = vpop.f32.mrb[0].mxu0
      %980 = vmatprep.mubr.f32.mxu0 0.0
      %981 = vmatmul.mubr.f32.gmra.mrb[0].mxu0 %v325
      %v982 = vpop.f32.mrb[0].mxu0
      %v983 = vadd.f32 0.0, %v982
      %v984 = vpop.f32.mrb[0].mxu0
      %985 = vmatprep.mubr.f32.mxu0 0.0
      %986 = vmatmul.mubr.f32.gmra.mrb[0].mxu0 %v326
      %v987 = vpop.f32.mrb[0].mxu0
      %v988 = vadd.f32 0.0, %v987
      %v989 = vpop.f32.mrb[0].mxu0
      %990 = vmatprep.mubr.f32.mxu0 0.0
      %991 = vmatmul.mubr.f32.gmra.mrb[0].mxu0 %v327
      %v992 = vpop.f32.mrb[0].mxu0
      %v993 = vadd.f32 0.0, %v992
      %v994 = vpop.f32.mrb[0].mxu0
      %995 = vmatprep.mubr.f32.mxu0 0.0
      %996 = vmatmul.mubr.f32.gmra.mrb[0].mxu0 %v328
      %v997 = vpop.f32.mrb[0].mxu0
      %v998 = vadd.f32 0.0, %v997
      %v999 = vpop.f32.mrb[0].mxu0
      %1000 = vmatprep.mubr.f32.mxu0 0.0
      %1001 = vmatmul.mubr.f32.gmra.mrb[0].mxu0 %v329
      %v1002 = vpop.f32.mrb[0].mxu0
      %v1003 = vadd.f32 0.0, %v1002
      %v1004 = vpop.f32.mrb[0].mxu0
      %1005 = vmatprep.mubr.f32.mxu0 0.0
      %1006 = vmatmul.mubr.f32.gmra.mrb[0].mxu0 %v330
      %v1007 = vpop.f32.mrb[0].mxu0
      %v1008 = vadd.f32 0.0, %v1007
      %v1009 = vpop.f32.mrb[0].mxu0
      %1010 = vmatprep.mubr.f32.mxu0 0.0
      %1011 = vmatmul.mubr.f32.gmra.mrb[0].mxu0 %v331
      %v1012 = vpop.f32.mrb[0].mxu0
      %v1013 = vadd.f32 0.0, %v1012
      %v1014 = vpop.f32.mrb[0].mxu0
      %1015 = vmatprep.mubr.f32.mxu0 0.0
      %1016 = vmatmul.mubr.f32.gmra.mrb[0].mxu0 %v332
      %v1017 = vpop.f32.mrb[0].mxu0
      %v1018 = vadd.f32 0.0, %v1017
      %v1019 = vpop.f32.mrb[0].mxu0
      %1020 = vmatprep.mubr.f32.mxu0 0.0
      %1021 = vmatmul.mubr.f32.gmra.mrb[0].mxu0 %v333
      %v1022 = vpop.f32.mrb[0].mxu0
      %v1023 = vadd.f32 0.0, %v1022
      %v1024 = vpop.f32.mrb[0].mxu0
      %1025 = vmatprep.mubr.f32.mxu0 0.0
      %1026 = vmatmul.mubr.f32.gmra.mrb[0].mxu0 %v334
      %v1027 = vpop.f32.mrb[0].mxu0
      %v1028 = vadd.f32 0.0, %v1027
      %v1029 = vpop.f32.mrb[0].mxu0
      %1030 = vmatprep.mubr.f32.mxu0 0.0
      %1031 = vmatmul.mubr.f32.gmra.mrb[0].mxu0 %v335
      %v1032 = vpop.f32.mrb[0].mxu0
      %v1033 = vadd.f32 0.0, %v1032
      %v1034 = vpop.f32.mrb[0].mxu0
      %1035 = vmatprep.mubr.f32.mxu0 0.0
      %1036 = vmatmul.mubr.f32.gmra.mrb[0].mxu0 %v336
      %v1037 = vpop.f32.mrb[0].mxu0
      %v1038 = vadd.f32 0.0, %v1037
      %v1039 = vpop.f32.mrb[0].mxu0
      %1040 = vmatprep.mubr.f32.mxu0 0.0
      %1041 = vmatmul.mubr.f32.gmra.mrb[0].mxu0 %v337
      %v1042 = vpop.f32.mrb[0].mxu0
      %v1043 = vadd.f32 0.0, %v1042
      %v1044 = vpop.f32.mrb[0].mxu0
      %1045 = vmatprep.mubr.f32.mxu0 0.0
      %1046 = vmatmul.mubr.f32.gmra.mrb[0].mxu0 %v338
      %v1047 = vpop.f32.mrb[0].mxu0
      %v1048 = vadd.f32 0.0, %v1047
      %v1049 = vpop.f32.mrb[0].mxu0
      %1050 = vmatprep.mubr.f32.mxu0 0.0
      %1051 = vmatmul.mubr.f32.gmra.mrb[0].mxu0 %v339
      %v1052 = vpop.f32.mrb[0].mxu0
      %v1053 = vadd.f32 0.0, %v1052
      %v1054 = vpop.f32.mrb[0].mxu0
      %1055 = vmatprep.mubr.f32.mxu0 0.0
      %1056 = vmatmul.mubr.f32.gmra.mrb[0].mxu0 %v340
      %v1057 = vpop.f32.mrb[0].mxu0
      %v1058 = vadd.f32 0.0, %v1057
      %v1059 = vpop.f32.mrb[0].mxu0
      %1060 = vdwg.mxu0
      %v1061 = vld [vmem:[%s3] sm:$0xff]
      %v1062 = vld [vmem:[%s3 + $0x8] sm:$0xff]
      %v1063 = vld [vmem:[%s3 + $0x10] sm:$0xff]
      %v1064 = vld [vmem:[%s3 + $0x18] sm:$0xff]
      %v1065 = vld [vmem:[%s3 + $0x20] sm:$0xff]
      %v1066 = vld [vmem:[%s3 + $0x28] sm:$0xff]
      %v1067 = vld [vmem:[%s3 + $0x30] sm:$0xff]
      %v1068 = vld [vmem:[%s3 + $0x38] sm:$0xff]
      %v1069 = vld [vmem:[%s3 + $0x40] sm:$0xff]
      %v1070 = vld [vmem:[%s3 + $0x48] sm:$0xff]
      %v1071 = vld [vmem:[%s3 + $0x50] sm:$0xff]
      %v1072 = vld [vmem:[%s3 + $0x58] sm:$0xff]
      %v1073 = vld [vmem:[%s3 + $0x60] sm:$0xff]
      %v1074 = vld [vmem:[%s3 + $0x68] sm:$0xff]
      %v1075 = vld [vmem:[%s3 + $0x70] sm:$0xff]
      %v1076 = vld [vmem:[%s3 + $0x78] sm:$0xff]
      %v1077 = vld [vmem:[%s3 + $0x80] sm:$0xff]
      %v1078 = vld [vmem:[%s3 + $0x88] sm:$0xff]
      %v1079 = vld [vmem:[%s3 + $0x90] sm:$0xff]
      %v1080 = vld [vmem:[%s3 + $0x98] sm:$0xff]
      %v1081 = vld [vmem:[%s3 + $0xa0] sm:$0xff]
      %v1082 = vld [vmem:[%s3 + $0xa8] sm:$0xff]
      %v1083 = vld [vmem:[%s3 + $0xb0] sm:$0xff]
      %v1084 = vld [vmem:[%s3 + $0xb8] sm:$0xff]
      %v1085 = vld [vmem:[%s3 + $0xc0] sm:$0xff]
      %v1086 = vld [vmem:[%s3 + $0xc8] sm:$0xff]
      %v1087 = vld [vmem:[%s3 + $0xd0] sm:$0xff]
      %v1088 = vld [vmem:[%s3 + $0xd8] sm:$0xff]
      %v1089 = vld [vmem:[%s3 + $0xe0] sm:$0xff]
      %v1090 = vld [vmem:[%s3 + $0xe8] sm:$0xff]
      %v1091 = vld [vmem:[%s3 + $0xf0] sm:$0xff]
      %v1092 = vld [vmem:[%s3 + $0xf8] sm:$0xff]
      %v1093 = vmul.f32 %v903, %v1061
      %v1094 = vmul.f32 %v908, %v1062
      %v1095 = vmul.f32 %v913, %v1063
      %v1096 = vmul.f32 %v918, %v1064
      %v1097 = vmul.f32 %v923, %v1065
      %v1098 = vmul.f32 %v928, %v1066
      %v1099 = vmul.f32 %v933, %v1067
      %v1100 = vmul.f32 %v938, %v1068
      %v1101 = vmul.f32 %v943, %v1069
      %v1102 = vmul.f32 %v948, %v1070
      %v1103 = vmul.f32 %v953, %v1071
      %v1104 = vmul.f32 %v958, %v1072
      %v1105 = vmul.f32 %v963, %v1073
      %v1106 = vmul.f32 %v968, %v1074
      %v1107 = vmul.f32 %v973, %v1075
      %v1108 = vmul.f32 %v978, %v1076
      %v1109 = vmul.f32 %v983, %v1077
      %v1110 = vmul.f32 %v988, %v1078
      %v1111 = vmul.f32 %v993, %v1079
      %v1112 = vmul.f32 %v998, %v1080
      %v1113 = vmul.f32 %v1003, %v1081
      %v1114 = vmul.f32 %v1008, %v1082
      %v1115 = vmul.f32 %v1013, %v1083
      %v1116 = vmul.f32 %v1018, %v1084
      %v1117 = vmul.f32 %v1023, %v1085
      %v1118 = vmul.f32 %v1028, %v1086
      %v1119 = vmul.f32 %v1033, %v1087
      %v1120 = vmul.f32 %v1038, %v1088
      %v1121 = vmul.f32 %v1043, %v1089
      %v1122 = vmul.f32 %v1048, %v1090
      %v1123 = vmul.f32 %v1053, %v1091
      %v1124 = vmul.f32 %v1058, %v1092
      %vm1125 = vcmask 64512
      %1126 = vst.msk [vmem:[%s301] sm:$0xff] %vm1125, %v1093
      %1127 = vst.msk [vmem:[%s301 + $0x8] sm:$0xff] %vm1125, %v1094
      %1128 = vst.msk [vmem:[%s301 + $0x10] sm:$0xff] %vm1125, %v1095
      %1129 = vst.msk [vmem:[%s301 + $0x18] sm:$0xff] %vm1125, %v1096
      %1130 = vst.msk [vmem:[%s301 + $0x20] sm:$0xff] %vm1125, %v1097
      %1131 = vst.msk [vmem:[%s301 + $0x28] sm:$0xff] %vm1125, %v1098
      %1132 = vst.msk [vmem:[%s301 + $0x30] sm:$0xff] %vm1125, %v1099
      %1133 = vst.msk [vmem:[%s301 + $0x38] sm:$0xff] %vm1125, %v1100
      %1134 = vst.msk [vmem:[%s301 + $0x40] sm:$0xff] %vm1125, %v1101
      %1135 = vst.msk [vmem:[%s301 + $0x48] sm:$0xff] %vm1125, %v1102
      %1136 = vst.msk [vmem:[%s301 + $0x50] sm:$0xff] %vm1125, %v1103
      %1137 = vst.msk [vmem:[%s301 + $0x58] sm:$0xff] %vm1125, %v1104
      %1138 = vst.msk [vmem:[%s301 + $0x60] sm:$0xff] %vm1125, %v1105
      %1139 = vst.msk [vmem:[%s301 + $0x68] sm:$0xff] %vm1125, %v1106
      %1140 = vst.msk [vmem:[%s301 + $0x70] sm:$0xff] %vm1125, %v1107
      %1141 = vst.msk [vmem:[%s301 + $0x78] sm:$0xff] %vm1125, %v1108
      %1142 = vst.msk [vmem:[%s301 + $0x80] sm:$0xff] %vm1125, %v1109
      %1143 = vst.msk [vmem:[%s301 + $0x88] sm:$0xff] %vm1125, %v1110
      %1144 = vst.msk [vmem:[%s301 + $0x90] sm:$0xff] %vm1125, %v1111
      %1145 = vst.msk [vmem:[%s301 + $0x98] sm:$0xff] %vm1125, %v1112
      %1146 = vst.msk [vmem:[%s301 + $0xa0] sm:$0xff] %vm1125, %v1113
      %1147 = vst.msk [vmem:[%s301 + $0xa8] sm:$0xff] %vm1125, %v1114
      %1148 = vst.msk [vmem:[%s301 + $0xb0] sm:$0xff] %vm1125, %v1115
      %1149 = vst.msk [vmem:[%s301 + $0xb8] sm:$0xff] %vm1125, %v1116
      %1150 = vst.msk [vmem:[%s301 + $0xc0] sm:$0xff] %vm1125, %v1117
      %1151 = vst.msk [vmem:[%s301 + $0xc8] sm:$0xff] %vm1125, %v1118
      %1152 = vst.msk [vmem:[%s301 + $0xd0] sm:$0xff] %vm1125, %v1119
      %1153 = vst.msk [vmem:[%s301 + $0xd8] sm:$0xff] %vm1125, %v1120
      %1154 = vst.msk [vmem:[%s301 + $0xe0] sm:$0xff] %vm1125, %v1121
      %1155 = vst.msk [vmem:[%s301 + $0xe8] sm:$0xff] %vm1125, %v1122
      %1156 = vst.msk [vmem:[%s301 + $0xf0] sm:$0xff] %vm1125, %v1123
      %1157 = vst.msk [vmem:[%s301 + $0xf8] sm:$0xff] %vm1125, %v1124
      %p1158 = scmp.lt.s32.totalorder %s19, 1
      %s1159 = scalar_select %p1158, %s19, 1
      %s1160 = smul.addr %s1159, 32
      %s1161 = smul.addr %s1160, 8
      %s1162 = scalar_lea.vmem %s4, %s1161
      %p1163 = scmp.lt.s32.totalorder %s19, 1
      %s1164 = scalar_select %p1163, %s19, 1
      %s1165 = smul.addr %s1164, 32
      %s1166 = smul.addr %s1165, 8
      %s1167 = scalar_lea.vmem %s5, %s1166
      %p1168 = scmp.lt.s32.totalorder %s19, 1
      %s1169 = scalar_select %p1168, %s19, 1
      %s1170 = scalar_lea.vmem %s6, %s1169
      %p1171 = scmp.lt.s32.totalorder %s19, 1
      %s1172 = scalar_select %p1171, %s19, 1
      %s1173 = scalar_lea.vmem %s7, %s1172
      // Predicated region
      $region37: #{_lambda_.3} parent=35 // pred_check
        %p1174 = pneg %p126
      $region38: #{_lambda_.3} parent=35 // pred_check_branch
        %1176 = sbr.rel (%p1174) target = $region40
      $region39: #{_lambda_.3} parent=35 // pred_region
        _
      $region40: #{_lambda_.3} parent=35 // pred_fallthru
        _
      // Predicated region
      $region41: #{_lambda_.3} parent=35 // pred_check
        %p1177 = pneg %p152
      $region42: #{_lambda_.3} parent=35 // pred_check_branch
        %1179 = sbr.rel (%p1177) target = $region44
      $region43: #{_lambda_.3} parent=35 // pred_region
        _
      $region44: #{_lambda_.3} parent=35 // pred_fallthru
        _
      // Predicated region
      $region45: #{_lambda_.3} parent=35 // pred_check
        %p1180 = pneg %p178
      $region46: #{_lambda_.3} parent=35 // pred_check_branch
        %1182 = sbr.rel (%p1180) target = $region48
      $region47: #{_lambda_.3} parent=35 // pred_region
        _
      $region48: #{_lambda_.3} parent=35 // pred_fallthru
        _
      // Predicated region
      $region49: #{_lambda_.3} parent=35 // pred_check
        %p1183 = pneg %p204
      $region50: #{_lambda_.3} parent=35 // pred_check_branch
        %1185 = sbr.rel (%p1183) target = $region52
      $region51: #{_lambda_.3} parent=35 // pred_region
        _
      $region52: #{_lambda_.3} parent=35 // pred_fallthru
        _
    $region36: #{_lambda_.3} parent=5 // pred_fallthru
      _
    %p1186 = scmp.le.s32.totalorder 2, %s14
    // Predicated region
    $region53: #{_lambda_.3} parent=5 // pred_check
      %p1187 = pneg %p1186
    $region54: #{_lambda_.3} parent=5 // pred_check_branch
      %1189 = sbr.rel (%p1187) target = $region56
    $region55: #{_lambda_.3} parent=5 // pred_region
      %s1190 = ssub.s32 %s14, 2
      // Predicated region
      $region57: #{_lambda_.3} parent=55 // pred_check
        %p1191 = pneg %p132
      $region58: #{_lambda_.3} parent=55 // pred_check_branch
        %1193 = sbr.rel (%p1191) target = $region60
      $region59: #{_lambda_.3} parent=55 // pred_region
        %p1194 = scmp.lt.s32.totalorder %s20, 1
        %s1195 = scalar_select %p1194, %s20, 1
        %s1196 = smul.addr %s1195, 32
        %s1197 = smul.addr %s1196, 8
        %s1198 = scalar_lea.vmem %s4, %s1197
      $region60: #{_lambda_.3} parent=55 // pred_fallthru
        _
      // Predicated region
      $region61: #{_lambda_.3} parent=55 // pred_check
        %p1199 = pneg %p158
      $region62: #{_lambda_.3} parent=55 // pred_check_branch
        %1201 = sbr.rel (%p1199) target = $region64
      $region63: #{_lambda_.3} parent=55 // pred_region
        %p1202 = scmp.lt.s32.totalorder %s20, 1
        %s1203 = scalar_select %p1202, %s20, 1
        %s1204 = smul.addr %s1203, 32
        %s1205 = smul.addr %s1204, 8
        %s1206 = scalar_lea.vmem %s5, %s1205
      $region64: #{_lambda_.3} parent=55 // pred_fallthru
        _
      // Predicated region
      $region65: #{_lambda_.3} parent=55 // pred_check
        %p1207 = pneg %p184
      $region66: #{_lambda_.3} parent=55 // pred_check_branch
        %1209 = sbr.rel (%p1207) target = $region68
      $region67: #{_lambda_.3} parent=55 // pred_region
        %p1210 = scmp.lt.s32.totalorder %s20, 1
        %s1211 = scalar_select %p1210, %s20, 1
        %s1212 = scalar_lea.vmem %s6, %s1211
      $region68: #{_lambda_.3} parent=55 // pred_fallthru
        _
      // Predicated region
      $region69: #{_lambda_.3} parent=55 // pred_check
        %p1213 = pneg %p210
      $region70: #{_lambda_.3} parent=55 // pred_check_branch
        %1215 = sbr.rel (%p1213) target = $region72
      $region71: #{_lambda_.3} parent=55 // pred_region
        %p1216 = scmp.lt.s32.totalorder %s20, 1
        %s1217 = scalar_select %p1216, %s20, 1
        %s1218 = scalar_lea.vmem %s7, %s1217
      $region72: #{_lambda_.3} parent=55 // pred_fallthru
        _
    $region56: #{_lambda_.3} parent=5 // pred_fallthru
      _
  $region6: #{_lambda_.3} parent=0 // loop_footer
    %s18 = sadd.s32 1, %s14
  $region7: #{_lambda_.3} parent=0 // loop_footer_branch
    %13 = sbr.rel target = $region3
  $region8: #{_lambda_.3} parent=0 // loop_exit
    _

// kernel: _lambda_.5
$region0: #{_lambda_.5}
  #allocation0 [shape = 'u32[]', space=smem, size = 0x4, offset = 0x4, fixed_abs, tag = 'smem constant byte address 0x4 - core index']
  #allocation1 [shape = 'u32[144,128]{1,0:T(1,128)}', space=vmem, size = 0x12000, scoped, tag = 'internal scratch']
  %s0 = inlined_call_operand.vmem [shape: f32[2,256,128], index: 0, kind: input, shape index: {}]
  %s1 = inlined_call_operand.vmem [shape: bf16[128,16], index: 1, kind: input, shape index: {}]
  %s2 = inlined_call_operand.vmem [shape: f32[128,8], index: 2, kind: input, shape index: {}]
  %s3 = inlined_call_operand.vmem [shape: f32[256,8], index: 3, kind: input, shape index: {}]
  %s4 = inlined_call_operand.vmem [shape: f32[2,256,16], index: 4, kind: output, shape index: {0}]
  %s5 = inlined_call_operand.vmem [shape: f32[2,256,8], index: 5, kind: output, shape index: {1}]
  %s6 = inlined_call_operand.vmem [shape: f32[2,1,16], index: 6, kind: output, shape index: {2}]
  %s7 = inlined_call_operand.vmem [shape: f32[2,1,16], index: 7, kind: output, shape index: {3}]
  %8 = xla_tuple %s4, %s5, %s6, %s7
  %s9 = sld [smem:[#allocation0]]
  $region73: #{_lambda_.5} parent=0
    _
  %s11 = ssub.s32 1, %s9
  %s12 = scalar_select 0, %s11, %s9
  loop: start=0, step=1, limit=4
  $region2: #{_lambda_.5} parent=0 // loop_pre_header
    _
  $region3: #{_lambda_.5} parent=0 // loop_header
    %s14 = sphi 0, %s18
    %p15 = scmp.ge.s32.totalorder %s14, 4
    %s24 = sphi 0, %s26
    %s27 = sphi 0, %s24
    %s28 = sphi 0, %s27
    %s44 = sphi 0, %s28
    %s48 = sphi 0, %s48
    %s50 = sphi 0, %s48
    %s51 = sphi 0, %s50
    %s65 = sphi 0, %s51
    %s69 = sphi 0, %s69
    %s71 = sphi 0, %s69
    %s72 = sphi 0, %s71
    %s86 = sphi 0, %s72
    %s90 = sphi 0, %s90
    %s92 = sphi 0, %s90
    %s93 = sphi 0, %s92
    %s107 = sphi 0, %s93
    %s113 = sphi 0, %s115
    %s116 = sphi 0, %s113
    %s117 = sphi 0, %s116
    %s133 = sphi 0, %s117
    %s139 = sphi 0, %s141
    %s142 = sphi 0, %s139
    %s143 = sphi 0, %s142
    %s159 = sphi 0, %s143
    %s165 = sphi 0, %s167
    %s168 = sphi 0, %s165
    %s169 = sphi 0, %s168
    %s185 = sphi 0, %s169
    %s191 = sphi 0, %s193
    %s194 = sphi 0, %s191
    %s195 = sphi 0, %s194
    %s211 = sphi 0, %s195
  $region4: #{_lambda_.5} parent=0 // loop_header_branch
    %17 = sbr.rel (%p15) target = $region8
  $region5: #{_lambda_.5} parent=0 // loop_body
    %s19 = ssub.s32 %s14, 1
    %s20 = ssub.s32 %s14, 2
    %s21 = sadd.s32 %s14, 1
    %s22 = ssub.s32 %s14, %s21
    %p23 = scmp.eq.s32.totalorder %s22, 0
    %s25 = sadd.s32 %s24, 1
    %s26 = scalar_select %p23, %s24, %s25
    %p29 = pneg %p23
    %p30 = scmp.eq.s32.totalorder %s14, 1
    %p31 = por %p29, %p30
    %p32 = scmp.ne.s32.totalorder %s24, %s27
    %p33 = scmp.eq.s32.totalorder %s14, 0
    %p34 = por %p32, %p33
    %p35 = scmp.ne.s32.totalorder %s24, %s27
    %p36 = scmp.eq.s32.totalorder %s19, 1
    %p37 = por %p35, %p36
    %p38 = scmp.ne.s32.totalorder %s27, %s28
    %p39 = scmp.eq.s32.totalorder %s19, 0
    %p40 = por %p38, %p39
    %p41 = scmp.ne.s32.totalorder %s27, %s28
    %p42 = scmp.eq.s32.totalorder %s20, 1
    %p43 = por %p41, %p42
    %p45 = scmp.ne.s32.totalorder %s28, %s44
    %p46 = scmp.eq.s32.totalorder %s20, 0
    %p47 = por %p45, %p46
    %s49 = sadd.s32 %s48, 1
    %p52 = scmp.eq.s32.totalorder %s14, 1
    %p53 = scmp.ne.s32.totalorder %s48, %s50
    %p54 = scmp.eq.s32.totalorder %s14, 0
    %p55 = por %p53, %p54
    %p56 = scmp.ne.s32.totalorder %s48, %s50
    %p57 = scmp.eq.s32.totalorder %s19, 1
    %p58 = por %p56, %p57
    %p59 = scmp.ne.s32.totalorder %s50, %s51
    %p60 = scmp.eq.s32.totalorder %s19, 0
    %p61 = por %p59, %p60
    %p62 = scmp.ne.s32.totalorder %s50, %s51
    %p63 = scmp.eq.s32.totalorder %s20, 1
    %p64 = por %p62, %p63
    %p66 = scmp.ne.s32.totalorder %s51, %s65
    %p67 = scmp.eq.s32.totalorder %s20, 0
    %p68 = por %p66, %p67
    %s70 = sadd.s32 %s69, 1
    %p73 = scmp.eq.s32.totalorder %s14, 1
    %p74 = scmp.ne.s32.totalorder %s69, %s71
    %p75 = scmp.eq.s32.totalorder %s14, 0
    %p76 = por %p74, %p75
    %p77 = scmp.ne.s32.totalorder %s69, %s71
    %p78 = scmp.eq.s32.totalorder %s19, 1
    %p79 = por %p77, %p78
    %p80 = scmp.ne.s32.totalorder %s71, %s72
    %p81 = scmp.eq.s32.totalorder %s19, 0
    %p82 = por %p80, %p81
    %p83 = scmp.ne.s32.totalorder %s71, %s72
    %p84 = scmp.eq.s32.totalorder %s20, 1
    %p85 = por %p83, %p84
    %p87 = scmp.ne.s32.totalorder %s72, %s86
    %p88 = scmp.eq.s32.totalorder %s20, 0
    %p89 = por %p87, %p88
    %s91 = sadd.s32 %s90, 1
    %p94 = scmp.eq.s32.totalorder %s14, 1
    %p95 = scmp.ne.s32.totalorder %s90, %s92
    %p96 = scmp.eq.s32.totalorder %s14, 0
    %p97 = por %p95, %p96
    %p98 = scmp.ne.s32.totalorder %s90, %s92
    %p99 = scmp.eq.s32.totalorder %s19, 1
    %p100 = por %p98, %p99
    %p101 = scmp.ne.s32.totalorder %s92, %s93
    %p102 = scmp.eq.s32.totalorder %s19, 0
    %p103 = por %p101, %p102
    %p104 = scmp.ne.s32.totalorder %s92, %s93
    %p105 = scmp.eq.s32.totalorder %s20, 1
    %p106 = por %p104, %p105
    %p108 = scmp.ne.s32.totalorder %s93, %s107
    %p109 = scmp.eq.s32.totalorder %s20, 0
    %p110 = por %p108, %p109
    %s111 = ssub.s32 %s14, %s21
    %p112 = scmp.eq.s32.totalorder %s111, 0
    %s114 = sadd.s32 %s113, 1
    %s115 = scalar_select %p112, %s113, %s114
    %p118 = pneg %p112
    %p119 = scmp.eq.s32.totalorder %s14, 1
    %p120 = por %p118, %p119
    %p121 = scmp.ne.s32.totalorder %s113, %s116
    %p122 = scmp.eq.s32.totalorder %s14, 0
    %p123 = por %p121, %p122
    %p124 = scmp.ne.s32.totalorder %s113, %s116
    %p125 = scmp.eq.s32.totalorder %s19, 1
    %p126 = por %p124, %p125
    %p127 = scmp.ne.s32.totalorder %s116, %s117
    %p128 = scmp.eq.s32.totalorder %s19, 0
    %p129 = por %p127, %p128
    %p130 = scmp.ne.s32.totalorder %s116, %s117
    %p131 = scmp.eq.s32.totalorder %s20, 1
    %p132 = por %p130, %p131
    %p134 = scmp.ne.s32.totalorder %s117, %s133
    %p135 = scmp.eq.s32.totalorder %s20, 0
    %p136 = por %p134, %p135
    %s137 = ssub.s32 %s14, %s21
    %p138 = scmp.eq.s32.totalorder %s137, 0
    %s140 = sadd.s32 %s139, 1
    %s141 = scalar_select %p138, %s139, %s140
    %p144 = pneg %p138
    %p145 = scmp.eq.s32.totalorder %s14, 1
    %p146 = por %p144, %p145
    %p147 = scmp.ne.s32.totalorder %s139, %s142
    %p148 = scmp.eq.s32.totalorder %s14, 0
    %p149 = por %p147, %p148
    %p150 = scmp.ne.s32.totalorder %s139, %s142
    %p151 = scmp.eq.s32.totalorder %s19, 1
    %p152 = por %p150, %p151
    %p153 = scmp.ne.s32.totalorder %s142, %s143
    %p154 = scmp.eq.s32.totalorder %s19, 0
    %p155 = por %p153, %p154
    %p156 = scmp.ne.s32.totalorder %s142, %s143
    %p157 = scmp.eq.s32.totalorder %s20, 1
    %p158 = por %p156, %p157
    %p160 = scmp.ne.s32.totalorder %s143, %s159
    %p161 = scmp.eq.s32.totalorder %s20, 0
    %p162 = por %p160, %p161
    %s163 = ssub.s32 %s14, %s21
    %p164 = scmp.eq.s32.totalorder %s163, 0
    %s166 = sadd.s32 %s165, 1
    %s167 = scalar_select %p164, %s165, %s166
    %p170 = pneg %p164
    %p171 = scmp.eq.s32.totalorder %s14, 1
    %p172 = por %p170, %p171
    %p173 = scmp.ne.s32.totalorder %s165, %s168
    %p174 = scmp.eq.s32.totalorder %s14, 0
    %p175 = por %p173, %p174
    %p176 = scmp.ne.s32.totalorder %s165, %s168
    %p177 = scmp.eq.s32.totalorder %s19, 1
    %p178 = por %p176, %p177
    %p179 = scmp.ne.s32.totalorder %s168, %s169
    %p180 = scmp.eq.s32.totalorder %s19, 0
    %p181 = por %p179, %p180
    %p182 = scmp.ne.s32.totalorder %s168, %s169
    %p183 = scmp.eq.s32.totalorder %s20, 1
    %p184 = por %p182, %p183
    %p186 = scmp.ne.s32.totalorder %s169, %s185
    %p187 = scmp.eq.s32.totalorder %s20, 0
    %p188 = por %p186, %p187
    %s189 = ssub.s32 %s14, %s21
    %p190 = scmp.eq.s32.totalorder %s189, 0
    %s192 = sadd.s32 %s191, 1
    %s193 = scalar_select %p190, %s191, %s192
    %p196 = pneg %p190
    %p197 = scmp.eq.s32.totalorder %s14, 1
    %p198 = por %p196, %p197
    %p199 = scmp.ne.s32.totalorder %s191, %s194
    %p200 = scmp.eq.s32.totalorder %s14, 0
    %p201 = por %p199, %p200
    %p202 = scmp.ne.s32.totalorder %s191, %s194
    %p203 = scmp.eq.s32.totalorder %s19, 1
    %p204 = por %p202, %p203
    %p205 = scmp.ne.s32.totalorder %s194, %s195
    %p206 = scmp.eq.s32.totalorder %s19, 0
    %p207 = por %p205, %p206
    %p208 = scmp.ne.s32.totalorder %s194, %s195
    %p209 = scmp.eq.s32.totalorder %s20, 1
    %p210 = por %p208, %p209
    %p212 = scmp.ne.s32.totalorder %s195, %s211
    %p213 = scmp.eq.s32.totalorder %s20, 0
    %p214 = por %p212, %p213
    %p215 = scmp.le.s32.totalorder 1, %s14
    %p216 = scmp.lt.s32.totalorder %s14, 3
    %p217 = pnand %p215, %p216
    %p218 = pneg %p217
    // Predicated region
    $region9: #{_lambda_.5} parent=5 // pred_check
      _
    $region10: #{_lambda_.5} parent=5 // pred_check_branch
      %220 = sbr.rel (%p217) target = $region12
    $region11: #{_lambda_.5} parent=5 // pred_region
      %s221 = ssub.s32 %s14, 1
      // Predicated region
      $region13: #{_lambda_.5} parent=11 // pred_check
        %p222 = pneg %p61
      $region14: #{_lambda_.5} parent=11 // pred_check_branch
        %224 = sbr.rel (%p222) target = $region16
      $region15: #{_lambda_.5} parent=11 // pred_region
        _
      $region16: #{_lambda_.5} parent=11 // pred_fallthru
        _
      // Predicated region
      $region17: #{_lambda_.5} parent=11 // pred_check
        %p225 = pneg %p82
      $region18: #{_lambda_.5} parent=11 // pred_check_branch
        %227 = sbr.rel (%p225) target = $region20
      $region19: #{_lambda_.5} parent=11 // pred_region
        _
      $region20: #{_lambda_.5} parent=11 // pred_fallthru
        _
      // Predicated region
      $region21: #{_lambda_.5} parent=11 // pred_check
        %p228 = pneg %p103
      $region22: #{_lambda_.5} parent=11 // pred_check_branch
        %230 = sbr.rel (%p228) target = $region24
      $region23: #{_lambda_.5} parent=11 // pred_region
        _
      $region24: #{_lambda_.5} parent=11 // pred_fallthru
        _
    $region12: #{_lambda_.5} parent=5 // pred_fallthru
      _
    %p231 = scmp.lt.s32.totalorder %s14, 2
    // Predicated region
    $region25: #{_lambda_.5} parent=5 // pred_check
      %p232 = pneg %p231
    $region26: #{_lambda_.5} parent=5 // pred_check_branch
      %234 = sbr.rel (%p232) target = $region28
    $region27: #{_lambda_.5} parent=5 // pred_region
      // Predicated region
      $region29: #{_lambda_.5} parent=27 // pred_check
        %p235 = pneg %p34
      $region30: #{_lambda_.5} parent=27 // pred_check_branch
        %237 = sbr.rel (%p235) target = $region32
      $region31: #{_lambda_.5} parent=27 // pred_region
        %p238 = scmp.lt.s32.totalorder %s14, 1
        %s239 = scalar_select %p238, %s14, 1
        %s240 = smul.addr %s239, 32
        %s241 = smul.addr %s240, 8
        %s242 = scalar_lea.vmem %s0, %s241
      $region32: #{_lambda_.5} parent=27 // pred_fallthru
        _
    $region28: #{_lambda_.5} parent=5 // pred_fallthru
      _
    %p243 = scmp.le.s32.totalorder 1, %s14
    %p244 = scmp.lt.s32.totalorder %s14, 3
    %p245 = pnand %p243, %p244
    %p246 = pneg %p245
    // Predicated region
    $region33: #{_lambda_.5} parent=5 // pred_check
      _
    $region34: #{_lambda_.5} parent=5 // pred_check_branch
      %248 = sbr.rel (%p245) target = $region36
    $region35: #{_lambda_.5} parent=5 // pred_region
      %s249 = ssub.s32 %s14, 1
      %p250 = scmp.lt.s32.totalorder %s19, 1
      %s251 = scalar_select %p250, %s19, 1
      %s252 = smul.addr %s251, 32
      %s253 = smul.addr %s252, 8
      %s254 = scalar_lea.vmem %s0, %s253
      %p255 = pneg %p40
      %p256 = pneg %p37
      %p257 = pneg %p61
      %p258 = pneg %p58
      %p259 = pneg %p82
      %p260 = pneg %p79
      %p261 = pneg %p103
      %p262 = pneg %p100
      %p263 = pneg %p129
      %p264 = pneg %p126
      %p265 = scmp.lt.s32.totalorder %s19, 1
      %s266 = scalar_select %p265, %s19, 1
      %s267 = smul.addr %s266, 32
      %s268 = smul.addr %s267, 8
      %s269 = scalar_lea.vmem %s4, %s268
      %p270 = pneg %p155
      %p271 = pneg %p152
      %p272 = scmp.lt.s32.totalorder %s19, 1
      %s273 = scalar_select %p272, %s19, 1
      %s274 = smul.addr %s273, 32
      %s275 = smul.addr %s274, 8
      %s276 = scalar_lea.vmem %s5, %s275
      %p277 = pneg %p181
      %p278 = pneg %p178
      %p279 = scmp.lt.s32.totalorder %s19, 1
      %s280 = scalar_select %p279, %s19, 1
      %s281 = scalar_lea.vmem %s6, %s280
      %p282 = pneg %p207
      %p283 = pneg %p204
      %p284 = scmp.lt.s32.totalorder %s19, 1
      %s285 = scalar_select %p284, %s19, 1
      %s286 = scalar_lea.vmem %s7, %s285
      %p287 = scmp.lt.s32.totalorder %s19, 1
      %s288 = scalar_select %p287, %s19, 1
      %s289 = smul.addr %s288, 32
      %s290 = smul.addr %s289, 8
      %s291 = scalar_lea.vmem %s0, %s290
      %p292 = scmp.lt.s32.totalorder %s19, 1
      %s293 = scalar_select %p292, %s19, 1
      %s294 = smul.addr %s293, 32
      %s295 = smul.addr %s294, 8
      %s296 = scalar_lea.vmem %s4, %s295
      %p297 = scmp.lt.s32.totalorder %s19, 1
      %s298 = scalar_select %p297, %s19, 1
      %s299 = smul.addr %s298, 32
      %s300 = smul.addr %s299, 8
      %s301 = scalar_lea.vmem %s5, %s300
      %p302 = scmp.lt.s32.totalorder %s19, 1
      %s303 = scalar_select %p302, %s19, 1
      %s304 = scalar_lea.vmem %s6, %s303
      %p305 = scmp.lt.s32.totalorder %s19, 1
      %s306 = scalar_select %p305, %s19, 1
      %s307 = scalar_lea.vmem %s7, %s306
      %v309 = vld [vmem:[%s291] sm:$0xff]
      %v310 = vld [vmem:[%s291 + $0x8] sm:$0xff]
      %v311 = vld [vmem:[%s291 + $0x10] sm:$0xff]
      %v312 = vld [vmem:[%s291 + $0x18] sm:$0xff]
      %v313 = vld [vmem:[%s291 + $0x20] sm:$0xff]
      %v314 = vld [vmem:[%s291 + $0x28] sm:$0xff]
      %v315 = vld [vmem:[%s291 + $0x30] sm:$0xff]
      %v316 = vld [vmem:[%s291 + $0x38] sm:$0xff]
      %v317 = vld [vmem:[%s291 + $0x40] sm:$0xff]
      %v318 = vld [vmem:[%s291 + $0x48] sm:$0xff]
      %v319 = vld [vmem:[%s291 + $0x50] sm:$0xff]
      %v320 = vld [vmem:[%s291 + $0x58] sm:$0xff]
      %v321 = vld [vmem:[%s291 + $0x60] sm:$0xff]
      %v322 = vld [vmem:[%s291 + $0x68] sm:$0xff]
      %v323 = vld [vmem:[%s291 + $0x70] sm:$0xff]
      %v324 = vld [vmem:[%s291 + $0x78] sm:$0xff]
      %v325 = vld [vmem:[%s291 + $0x80] sm:$0xff]
      %v326 = vld [vmem:[%s291 + $0x88] sm:$0xff]
      %v327 = vld [vmem:[%s291 + $0x90] sm:$0xff]
      %v328 = vld [vmem:[%s291 + $0x98] sm:$0xff]
      %v329 = vld [vmem:[%s291 + $0xa0] sm:$0xff]
      %v330 = vld [vmem:[%s291 + $0xa8] sm:$0xff]
      %v331 = vld [vmem:[%s291 + $0xb0] sm:$0xff]
      %v332 = vld [vmem:[%s291 + $0xb8] sm:$0xff]
      %v333 = vld [vmem:[%s291 + $0xc0] sm:$0xff]
      %v334 = vld [vmem:[%s291 + $0xc8] sm:$0xff]
      %v335 = vld [vmem:[%s291 + $0xd0] sm:$0xff]
      %v336 = vld [vmem:[%s291 + $0xd8] sm:$0xff]
      %v337 = vld [vmem:[%s291 + $0xe0] sm:$0xff]
      %v338 = vld [vmem:[%s291 + $0xe8] sm:$0xff]
      %v339 = vld [vmem:[%s291 + $0xf0] sm:$0xff]
      %v340 = vld [vmem:[%s291 + $0xf8] sm:$0xff]
      %v341 = vmax.f32 %v309, 0.0
      %v342 = vmax.f32 %v310, 0.0
      %v343 = vmax.f32 %v311, 0.0
      %v344 = vmax.f32 %v312, 0.0
      %v345 = vmax.f32 %v313, 0.0
      %v346 = vmax.f32 %v314, 0.0
      %v347 = vmax.f32 %v315, 0.0
      %v348 = vmax.f32 %v316, 0.0
      %v349 = vmax.f32 %v317, 0.0
      %v350 = vmax.f32 %v318, 0.0
      %v351 = vmax.f32 %v319, 0.0
      %v352 = vmax.f32 %v320, 0.0
      %v353 = vmax.f32 %v321, 0.0
      %v354 = vmax.f32 %v322, 0.0
      %v355 = vmax.f32 %v323, 0.0
      %v356 = vmax.f32 %v324, 0.0
      %v357 = vmax.f32 %v325, 0.0
      %v358 = vmax.f32 %v326, 0.0
      %v359 = vmax.f32 %v327, 0.0
      %v360 = vmax.f32 %v328, 0.0
      %v361 = vmax.f32 %v329, 0.0
      %v362 = vmax.f32 %v330, 0.0
      %v363 = vmax.f32 %v331, 0.0
      %v364 = vmax.f32 %v332, 0.0
      %v365 = vmax.f32 %v333, 0.0
      %v366 = vmax.f32 %v334, 0.0
      %v367 = vmax.f32 %v335, 0.0
      %v368 = vmax.f32 %v336, 0.0
      %v369 = vmax.f32 %v337, 0.0
      %v370 = vmax.f32 %v338, 0.0
      %v371 = vmax.f32 %v339, 0.0
      %v372 = vmax.f32 %v340, 0.0
      %v373 = vpack.c.bf16 %v342, %v341
      %v374 = vpack.c.bf16 %v344, %v343
      %v375 = vpack.c.bf16 %v346, %v345
      %v376 = vpack.c.bf16 %v348, %v347
      %v377 = vpack.c.bf16 %v350, %v349
      %v378 = vpack.c.bf16 %v352, %v351
      %v379 = vpack.c.bf16 %v354, %v353
      %v380 = vpack.c.bf16 %v356, %v355
      %v381 = vpack.c.bf16 %v358, %v357
      %v382 = vpack.c.bf16 %v360, %v359
      %v383 = vpack.c.bf16 %v362, %v361
      %v384 = vpack.c.bf16 %v364, %v363
      %v385 = vpack.c.bf16 %v366, %v365
      %v386 = vpack.c.bf16 %v368, %v367
      %v387 = vpack.c.bf16 %v370, %v369
      %v388 = vpack.c.bf16 %v372, %v371
      %v389 = vld [vmem:[%s1] sm:$0xf]
      %v390 = vld [vmem:[%s1 + $0x4] sm:$0xf]
      %v391 = vld [vmem:[%s1 + $0x8] sm:$0xf]
      %v392 = vld [vmem:[%s1 + $0xc] sm:$0xf]
      %v393 = vld [vmem:[%s1 + $0x10] sm:$0xf]
      %v394 = vld [vmem:[%s1 + $0x14] sm:$0xf]
      %v395 = vld [vmem:[%s1 + $0x18] sm:$0xf]
      %v396 = vld [vmem:[%s1 + $0x1c] sm:$0xf]
      %v397 = vld [vmem:[%s1 + $0x20] sm:$0xf]
      %v398 = vld [vmem:[%s1 + $0x24] sm:$0xf]
      %v399 = vld [vmem:[%s1 + $0x28] sm:$0xf]
      %v400 = vld [vmem:[%s1 + $0x2c] sm:$0xf]
      %v401 = vld [vmem:[%s1 + $0x30] sm:$0xf]
      %v402 = vld [vmem:[%s1 + $0x34] sm:$0xf]
      %v403 = vld [vmem:[%s1 + $0x38] sm:$0xf]
      %v404 = vld [vmem:[%s1 + $0x3c] sm:$0xf]
      %v421 = vunpack.c.l.b16 %v389
      %v422 = vunpack.c.l.b16 %v390
      %v423 = vunpack.c.l.b16 %v391
      %v424 = vunpack.c.l.b16 %v392
      %v425 = vunpack.c.l.b16 %v393
      %v426 = vunpack.c.l.b16 %v394
      %v427 = vunpack.c.l.b16 %v395
      %v428 = vunpack.c.l.b16 %v396
      %v429 = vunpack.c.l.b16 %v397
      %v430 = vunpack.c.l.b16 %v398
      %v431 = vunpack.c.l.b16 %v399
      %v432 = vunpack.c.l.b16 %v400
      %v433 = vunpack.c.l.b16 %v401
      %v434 = vunpack.c.l.b16 %v402
      %v435 = vunpack.c.l.b16 %v403
      %v436 = vunpack.c.l.b16 %v404
      %v437 = vpack.c.b16 %v422, %v421
      %v438 = vpack.c.b16 %v424, %v423
      %v439 = vpack.c.b16 %v426, %v425
      %v440 = vpack.c.b16 %v428, %v427
      %v441 = vpack.c.b16 %v430, %v429
      %v442 = vpack.c.b16 %v432, %v431
      %v443 = vpack.c.b16 %v434, %v433
      %v444 = vpack.c.b16 %v436, %v435
      %453 = vmatprep.subr.bf16.mxu0 0
      %454 = vmatpush1.bf16.msra.mxu0 %v437
      %455 = vmatprep.subr.bf16.mxu0 0
      %456 = vmatpush1.bf16.msra.mxu0 %v438
      %457 = vmatprep.subr.bf16.mxu0 0
      %458 = vmatpush1.bf16.msra.mxu0 %v439
      %459 = vmatprep.subr.bf16.mxu0 0
      %460 = vmatpush1.bf16.msra.mxu0 %v440
      %461 = vmatprep.subr.bf16.mxu0 0
      %462 = vmatpush1.bf16.msra.mxu0 %v441
      %463 = vmatprep.subr.bf16.mxu0 0
      %464 = vmatpush1.bf16.msra.mxu0 %v442
      %465 = vmatprep.subr.bf16.mxu0 0
      %466 = vmatpush1.bf16.msra.mxu0 %v443
      %467 = vmatprep.subr.bf16.mxu0 0
      %468 = vmatpush1.bf16.msra.mxu0 %v444
      %469 = vmatprep.subr.bf16.mxu0 0
      %470 = vmatpush1.bf16.msra.mxu0 0
      %471 = vmatprep.subr.bf16.mxu0 0
      %472 = vmatpush1.bf16.msra.mxu0 0
      %473 = vmatprep.subr.bf16.mxu0 0
      %474 = vmatpush1.bf16.msra.mxu0 0
      %475 = vmatprep.subr.bf16.mxu0 0
      %476 = vmatpush1.bf16.msra.mxu0 0
      %477 = vmatprep.subr.bf16.mxu0 0
      %478 = vmatpush1.bf16.msra.mxu0 0
      %479 = vmatprep.subr.bf16.mxu0 0
      %480 = vmatpush1.bf16.msra.mxu0 0
      %481 = vmatprep.subr.bf16.mxu0 0
      %482 = vmatpush1.bf16.msra.mxu0 0
      %483 = vmatprep.subr.bf16.mxu0 0
      %484 = vmatpush1.bf16.msra.mxu0 0
      %485 = vmatprep.mubr.bf16.mxu0 0
      %486 = vmatmul.mubr.bf16.gmra.mrb[0].mxu0 %v373
      %v487 = vpop.f32.mrb[0].mxu0
      %v488 = vadd.f32 0.0, %v487
      %v489 = vpop.f32.mrb[0].mxu0
      %v490 = vpop.f32.mrb[0].mxu0
      %v491 = vadd.f32 0.0, %v490
      %v492 = vpop.f32.mrb[0].mxu0
      %493 = vmatprep.mubr.bf16.mxu0 0
      %494 = vmatmul.mubr.bf16.gmra.mrb[0].mxu0 %v374
      %v495 = vpop.f32.mrb[0].mxu0
      %v496 = vadd.f32 0.0, %v495
      %v497 = vpop.f32.mrb[0].mxu0
      %v498 = vpop.f32.mrb[0].mxu0
      %v499 = vadd.f32 0.0, %v498
      %v500 = vpop.f32.mrb[0].mxu0
      %501 = vmatprep.mubr.bf16.mxu0 0
      %502 = vmatmul.mubr.bf16.gmra.mrb[0].mxu0 %v375
      %v503 = vpop.f32.mrb[0].mxu0
      %v504 = vadd.f32 0.0, %v503
      %v505 = vpop.f32.mrb[0].mxu0
      %v506 = vpop.f32.mrb[0].mxu0
      %v507 = vadd.f32 0.0, %v506
      %v508 = vpop.f32.mrb[0].mxu0
      %509 = vmatprep.mubr.bf16.mxu0 0
      %510 = vmatmul.mubr.bf16.gmra.mrb[0].mxu0 %v376
      %v511 = vpop.f32.mrb[0].mxu0
      %v512 = vadd.f32 0.0, %v511
      %v513 = vpop.f32.mrb[0].mxu0
      %v514 = vpop.f32.mrb[0].mxu0
      %v515 = vadd.f32 0.0, %v514
      %v516 = vpop.f32.mrb[0].mxu0
      %517 = vmatprep.mubr.bf16.mxu0 0
      %518 = vmatmul.mubr.bf16.gmra.mrb[0].mxu0 %v377
      %v519 = vpop.f32.mrb[0].mxu0
      %v520 = vadd.f32 0.0, %v519
      %v521 = vpop.f32.mrb[0].mxu0
      %v522 = vpop.f32.mrb[0].mxu0
      %v523 = vadd.f32 0.0, %v522
      %v524 = vpop.f32.mrb[0].mxu0
      %525 = vmatprep.mubr.bf16.mxu0 0
      %526 = vmatmul.mubr.bf16.gmra.mrb[0].mxu0 %v378
      %v527 = vpop.f32.mrb[0].mxu0
      %v528 = vadd.f32 0.0, %v527
      %v529 = vpop.f32.mrb[0].mxu0
      %v530 = vpop.f32.mrb[0].mxu0
      %v531 = vadd.f32 0.0, %v530
      %v532 = vpop.f32.mrb[0].mxu0
      %533 = vmatprep.mubr.bf16.mxu0 0
      %534 = vmatmul.mubr.bf16.gmra.mrb[0].mxu0 %v379
      %v535 = vpop.f32.mrb[0].mxu0
      %v536 = vadd.f32 0.0, %v535
      %v537 = vpop.f32.mrb[0].mxu0
      %v538 = vpop.f32.mrb[0].mxu0
      %v539 = vadd.f32 0.0, %v538
      %v540 = vpop.f32.mrb[0].mxu0
      %541 = vmatprep.mubr.bf16.mxu0 0
      %542 = vmatmul.mubr.bf16.gmra.mrb[0].mxu0 %v380
      %v543 = vpop.f32.mrb[0].mxu0
      %v544 = vadd.f32 0.0, %v543
      %v545 = vpop.f32.mrb[0].mxu0
      %v546 = vpop.f32.mrb[0].mxu0
      %v547 = vadd.f32 0.0, %v546
      %v548 = vpop.f32.mrb[0].mxu0
      %549 = vmatprep.mubr.bf16.mxu0 0
      %550 = vmatmul.mubr.bf16.gmra.mrb[0].mxu0 %v381
      %v551 = vpop.f32.mrb[0].mxu0
      %v552 = vadd.f32 0.0, %v551
      %v553 = vpop.f32.mrb[0].mxu0
      %v554 = vpop.f32.mrb[0].mxu0
      %v555 = vadd.f32 0.0, %v554
      %v556 = vpop.f32.mrb[0].mxu0
      %557 = vmatprep.mubr.bf16.mxu0 0
      %558 = vmatmul.mubr.bf16.gmra.mrb[0].mxu0 %v382
      %v559 = vpop.f32.mrb[0].mxu0
      %v560 = vadd.f32 0.0, %v559
      %v561 = vpop.f32.mrb[0].mxu0
      %v562 = vpop.f32.mrb[0].mxu0
      %v563 = vadd.f32 0.0, %v562
      %v564 = vpop.f32.mrb[0].mxu0
      %565 = vmatprep.mubr.bf16.mxu0 0
      %566 = vmatmul.mubr.bf16.gmra.mrb[0].mxu0 %v383
      %v567 = vpop.f32.mrb[0].mxu0
      %v568 = vadd.f32 0.0, %v567
      %v569 = vpop.f32.mrb[0].mxu0
      %v570 = vpop.f32.mrb[0].mxu0
      %v571 = vadd.f32 0.0, %v570
      %v572 = vpop.f32.mrb[0].mxu0
      %573 = vmatprep.mubr.bf16.mxu0 0
      %574 = vmatmul.mubr.bf16.gmra.mrb[0].mxu0 %v384
      %v575 = vpop.f32.mrb[0].mxu0
      %v576 = vadd.f32 0.0, %v575
      %v577 = vpop.f32.mrb[0].mxu0
      %v578 = vpop.f32.mrb[0].mxu0
      %v579 = vadd.f32 0.0, %v578
      %v580 = vpop.f32.mrb[0].mxu0
      %581 = vmatprep.mubr.bf16.mxu0 0
      %582 = vmatmul.mubr.bf16.gmra.mrb[0].mxu0 %v385
      %v583 = vpop.f32.mrb[0].mxu0
      %v584 = vadd.f32 0.0, %v583
      %v585 = vpop.f32.mrb[0].mxu0
      %v586 = vpop.f32.mrb[0].mxu0
      %v587 = vadd.f32 0.0, %v586
      %v588 = vpop.f32.mrb[0].mxu0
      %589 = vmatprep.mubr.bf16.mxu0 0
      %590 = vmatmul.mubr.bf16.gmra.mrb[0].mxu0 %v386
      %v591 = vpop.f32.mrb[0].mxu0
      %v592 = vadd.f32 0.0, %v591
      %v593 = vpop.f32.mrb[0].mxu0
      %v594 = vpop.f32.mrb[0].mxu0
      %v595 = vadd.f32 0.0, %v594
      %v596 = vpop.f32.mrb[0].mxu0
      %597 = vmatprep.mubr.bf16.mxu0 0
      %598 = vmatmul.mubr.bf16.gmra.mrb[0].mxu0 %v387
      %v599 = vpop.f32.mrb[0].mxu0
      %v600 = vadd.f32 0.0, %v599
      %v601 = vpop.f32.mrb[0].mxu0
      %v602 = vpop.f32.mrb[0].mxu0
      %v603 = vadd.f32 0.0, %v602
      %v604 = vpop.f32.mrb[0].mxu0
      %605 = vmatprep.mubr.bf16.mxu0 0
      %606 = vmatmul.mubr.bf16.gmra.mrb[0].mxu0 %v388
      %v607 = vpop.f32.mrb[0].mxu0
      %v608 = vadd.f32 0.0, %v607
      %v609 = vpop.f32.mrb[0].mxu0
      %v610 = vpop.f32.mrb[0].mxu0
      %v611 = vadd.f32 0.0, %v610
      %v612 = vpop.f32.mrb[0].mxu0
      %613 = vdwg.mxu0
      %vm614 = vcmask 130048
      %615 = vst.msk [vmem:[%s296] sm:$0xff] %vm614, %v488
      %616 = vst.msk [vmem:[%s296 + $0x8] sm:$0xff] %vm614, %v491
      %617 = vst.msk [vmem:[%s296 + $0x10] sm:$0xff] %vm614, %v496
      %618 = vst.msk [vmem:[%s296 + $0x18] sm:$0xff] %vm614, %v499
      %619 = vst.msk [vmem:[%s296 + $0x20] sm:$0xff] %vm614, %v504
      %620 = vst.msk [vmem:[%s296 + $0x28] sm:$0xff] %vm614, %v507
      %621 = vst.msk [vmem:[%s296 + $0x30] sm:$0xff] %vm614, %v512
      %622 = vst.msk [vmem:[%s296 + $0x38] sm:$0xff] %vm614, %v515
      %623 = vst.msk [vmem:[%s296 + $0x40] sm:$0xff] %vm614, %v520
      %624 = vst.msk [vmem:[%s296 + $0x48] sm:$0xff] %vm614, %v523
      %625 = vst.msk [vmem:[%s296 + $0x50] sm:$0xff] %vm614, %v528
      %626 = vst.msk [vmem:[%s296 + $0x58] sm:$0xff] %vm614, %v531
      %627 = vst.msk [vmem:[%s296 + $0x60] sm:$0xff] %vm614, %v536
      %628 = vst.msk [vmem:[%s296 + $0x68] sm:$0xff] %vm614, %v539
      %629 = vst.msk [vmem:[%s296 + $0x70] sm:$0xff] %vm614, %v544
      %630 = vst.msk [vmem:[%s296 + $0x78] sm:$0xff] %vm614, %v547
      %631 = vst.msk [vmem:[%s296 + $0x80] sm:$0xff] %vm614, %v552
      %632 = vst.msk [vmem:[%s296 + $0x88] sm:$0xff] %vm614, %v555
      %633 = vst.msk [vmem:[%s296 + $0x90] sm:$0xff] %vm614, %v560
      %634 = vst.msk [vmem:[%s296 + $0x98] sm:$0xff] %vm614, %v563
      %635 = vst.msk [vmem:[%s296 + $0xa0] sm:$0xff] %vm614, %v568
      %636 = vst.msk [vmem:[%s296 + $0xa8] sm:$0xff] %vm614, %v571
      %637 = vst.msk [vmem:[%s296 + $0xb0] sm:$0xff] %vm614, %v576
      %638 = vst.msk [vmem:[%s296 + $0xb8] sm:$0xff] %vm614, %v579
      %639 = vst.msk [vmem:[%s296 + $0xc0] sm:$0xff] %vm614, %v584
      %640 = vst.msk [vmem:[%s296 + $0xc8] sm:$0xff] %vm614, %v587
      %641 = vst.msk [vmem:[%s296 + $0xd0] sm:$0xff] %vm614, %v592
      %642 = vst.msk [vmem:[%s296 + $0xd8] sm:$0xff] %vm614, %v595
      %643 = vst.msk [vmem:[%s296 + $0xe0] sm:$0xff] %vm614, %v600
      %644 = vst.msk [vmem:[%s296 + $0xe8] sm:$0xff] %vm614, %v603
      %645 = vst.msk [vmem:[%s296 + $0xf0] sm:$0xff] %vm614, %v608
      %646 = vst.msk [vmem:[%s296 + $0xf8] sm:$0xff] %vm614, %v611
      %v647 = vsel %vm614, %v488, 0.0
      %v648 = vsel %vm614, %v491, 0.0
      %v649 = vadd.f32 %v647, %v648
      %v650 = vsel %vm614, %v496, 0.0
      %v651 = vadd.f32 %v649, %v650
      %v652 = vsel %vm614, %v499, 0.0
      %v653 = vadd.f32 %v651, %v652
      %v654 = vsel %vm614, %v504, 0.0
      %v655 = vadd.f32 %v653, %v654
      %v656 = vsel %vm614, %v507, 0.0
      %v657 = vadd.f32 %v655, %v656
      %v658 = vsel %vm614, %v512, 0.0
      %v659 = vadd.f32 %v657, %v658
      %v660 = vsel %vm614, %v515, 0.0
      %v661 = vadd.f32 %v659, %v660
      %v662 = vsel %vm614, %v520, 0.0
      %v663 = vadd.f32 %v661, %v662
      %v664 = vsel %vm614, %v523, 0.0
      %v665 = vadd.f32 %v663, %v664
      %v666 = vsel %vm614, %v528, 0.0
      %v667 = vadd.f32 %v665, %v666
      %v668 = vsel %vm614, %v531, 0.0
      %v669 = vadd.f32 %v667, %v668
      %v670 = vsel %vm614, %v536, 0.0
      %v671 = vadd.f32 %v669, %v670
      %v672 = vsel %vm614, %v539, 0.0
      %v673 = vadd.f32 %v671, %v672
      %v674 = vsel %vm614, %v544, 0.0
      %v675 = vadd.f32 %v673, %v674
      %v676 = vsel %vm614, %v547, 0.0
      %v677 = vadd.f32 %v675, %v676
      %v678 = vsel %vm614, %v552, 0.0
      %v679 = vadd.f32 %v677, %v678
      %v680 = vsel %vm614, %v555, 0.0
      %v681 = vadd.f32 %v679, %v680
      %v682 = vsel %vm614, %v560, 0.0
      %v683 = vadd.f32 %v681, %v682
      %v684 = vsel %vm614, %v563, 0.0
      %v685 = vadd.f32 %v683, %v684
      %v686 = vsel %vm614, %v568, 0.0
      %v687 = vadd.f32 %v685, %v686
      %v688 = vsel %vm614, %v571, 0.0
      %v689 = vadd.f32 %v687, %v688
      %v690 = vsel %vm614, %v576, 0.0
      %v691 = vadd.f32 %v689, %v690
      %v692 = vsel %vm614, %v579, 0.0
      %v693 = vadd.f32 %v691, %v692
      %v694 = vsel %vm614, %v584, 0.0
      %v695 = vadd.f32 %v693, %v694
      %v696 = vsel %vm614, %v587, 0.0
      %v697 = vadd.f32 %v695, %v696
      %v698 = vsel %vm614, %v592, 0.0
      %v699 = vadd.f32 %v697, %v698
      %v700 = vsel %vm614, %v595, 0.0
      %v701 = vadd.f32 %v699, %v700
      %v702 = vsel %vm614, %v600, 0.0
      %v703 = vadd.f32 %v701, %v702
      %v704 = vsel %vm614, %v603, 0.0
      %v705 = vadd.f32 %v703, %v704
      %v706 = vsel %vm614, %v608, 0.0
      %v707 = vadd.f32 %v705, %v706
      %v708 = vsel %vm614, %v611, 0.0
      %v709 = vadd.f32 %v707, %v708
      %v710 = vrot.slane %v709, 4
      %v711 = vadd.f32 %v709, %v710
      %v712 = vrot.slane %v711, 2
      %v713 = vadd.f32 %v711, %v712
      %v714 = vrot.slane %v713, 1
      %v715 = vadd.f32 %v713, %v714
      %vm716 = vcmask 122880
      %717 = vst.msk [vmem:[%s304] sm:$0x1] %vm716, %v715
      %v718 = vmul.f32 %v488, %v488
      %v719 = vmul.f32 %v491, %v491
      %v720 = vmul.f32 %v496, %v496
      %v721 = vmul.f32 %v499, %v499
      %v722 = vmul.f32 %v504, %v504
      %v723 = vmul.f32 %v507, %v507
      %v724 = vmul.f32 %v512, %v512
      %v725 = vmul.f32 %v515, %v515
      %v726 = vmul.f32 %v520, %v520
      %v727 = vmul.f32 %v523, %v523
      %v728 = vmul.f32 %v528, %v528
      %v729 = vmul.f32 %v531, %v531
      %v730 = vmul.f32 %v536, %v536
      %v731 = vmul.f32 %v539, %v539
      %v732 = vmul.f32 %v544, %v544
      %v733 = vmul.f32 %v547, %v547
      %v734 = vmul.f32 %v552, %v552
      %v735 = vmul.f32 %v555, %v555
      %v736 = vmul.f32 %v560, %v560
      %v737 = vmul.f32 %v563, %v563
      %v738 = vmul.f32 %v568, %v568
      %v739 = vmul.f32 %v571, %v571
      %v740 = vmul.f32 %v576, %v576
      %v741 = vmul.f32 %v579, %v579
      %v742 = vmul.f32 %v584, %v584
      %v743 = vmul.f32 %v587, %v587
      %v744 = vmul.f32 %v592, %v592
      %v745 = vmul.f32 %v595, %v595
      %v746 = vmul.f32 %v600, %v600
      %v747 = vmul.f32 %v603, %v603
      %v748 = vmul.f32 %v608, %v608
      %v749 = vmul.f32 %v611, %v611
      %v750 = vsel %vm614, %v718, 0.0
      %v751 = vsel %vm614, %v719, 0.0
      %v752 = vadd.f32 %v750, %v751
      %v753 = vsel %vm614, %v720, 0.0
      %v754 = vadd.f32 %v752, %v753
      %v755 = vsel %vm614, %v721, 0.0
      %v756 = vadd.f32 %v754, %v755
      %v757 = vsel %vm614, %v722, 0.0
      %v758 = vadd.f32 %v756, %v757
      %v759 = vsel %vm614, %v723, 0.0
      %v760 = vadd.f32 %v758, %v759
      %v761 = vsel %vm614, %v724, 0.0
      %v762 = vadd.f32 %v760, %v761
      %v763 = vsel %vm614, %v725, 0.0
      %v764 = vadd.f32 %v762, %v763
      %v765 = vsel %vm614, %v726, 0.0
      %v766 = vadd.f32 %v764, %v765
      %v767 = vsel %vm614, %v727, 0.0
      %v768 = vadd.f32 %v766, %v767
      %v769 = vsel %vm614, %v728, 0.0
      %v770 = vadd.f32 %v768, %v769
      %v771 = vsel %vm614, %v729, 0.0
      %v772 = vadd.f32 %v770, %v771
      %v773 = vsel %vm614, %v730, 0.0
      %v774 = vadd.f32 %v772, %v773
      %v775 = vsel %vm614, %v731, 0.0
      %v776 = vadd.f32 %v774, %v775
      %v777 = vsel %vm614, %v732, 0.0
      %v778 = vadd.f32 %v776, %v777
      %v779 = vsel %vm614, %v733, 0.0
      %v780 = vadd.f32 %v778, %v779
      %v781 = vsel %vm614, %v734, 0.0
      %v782 = vadd.f32 %v780, %v781
      %v783 = vsel %vm614, %v735, 0.0
      %v784 = vadd.f32 %v782, %v783
      %v785 = vsel %vm614, %v736, 0.0
      %v786 = vadd.f32 %v784, %v785
      %v787 = vsel %vm614, %v737, 0.0
      %v788 = vadd.f32 %v786, %v787
      %v789 = vsel %vm614, %v738, 0.0
      %v790 = vadd.f32 %v788, %v789
      %v791 = vsel %vm614, %v739, 0.0
      %v792 = vadd.f32 %v790, %v791
      %v793 = vsel %vm614, %v740, 0.0
      %v794 = vadd.f32 %v792, %v793
      %v795 = vsel %vm614, %v741, 0.0
      %v796 = vadd.f32 %v794, %v795
      %v797 = vsel %vm614, %v742, 0.0
      %v798 = vadd.f32 %v796, %v797
      %v799 = vsel %vm614, %v743, 0.0
      %v800 = vadd.f32 %v798, %v799
      %v801 = vsel %vm614, %v744, 0.0
      %v802 = vadd.f32 %v800, %v801
      %v803 = vsel %vm614, %v745, 0.0
      %v804 = vadd.f32 %v802, %v803
      %v805 = vsel %vm614, %v746, 0.0
      %v806 = vadd.f32 %v804, %v805
      %v807 = vsel %vm614, %v747, 0.0
      %v808 = vadd.f32 %v806, %v807
      %v809 = vsel %vm614, %v748, 0.0
      %v810 = vadd.f32 %v808, %v809
      %v811 = vsel %vm614, %v749, 0.0
      %v812 = vadd.f32 %v810, %v811
      %v813 = vrot.slane %v812, 4
      %v814 = vadd.f32 %v812, %v813
      %v815 = vrot.slane %v814, 2
      %v816 = vadd.f32 %v814, %v815
      %v817 = vrot.slane %v816, 1
      %v818 = vadd.f32 %v816, %v817
      %819 = vst.msk [vmem:[%s307] sm:$0x1] %vm716, %v818
      %v820 = vld [vmem:[%s2] sm:$0xff]
      %v821 = vld [vmem:[%s2 + $0x8] sm:$0xff]
      %v822 = vld [vmem:[%s2 + $0x10] sm:$0xff]
      %v823 = vld [vmem:[%s2 + $0x18] sm:$0xff]
      %v824 = vld [vmem:[%s2 + $0x20] sm:$0xff]
      %v825 = vld [vmem:[%s2 + $0x28] sm:$0xff]
      %v826 = vld [vmem:[%s2 + $0x30] sm:$0xff]
      %v827 = vld [vmem:[%s2 + $0x38] sm:$0xff]
      %v828 = vld [vmem:[%s2 + $0x40] sm:$0xff]
      %v829 = vld [vmem:[%s2 + $0x48] sm:$0xff]
      %v830 = vld [vmem:[%s2 + $0x50] sm:$0xff]
      %v831 = vld [vmem:[%s2 + $0x58] sm:$0xff]
      %v832 = vld [vmem:[%s2 + $0x60] sm:$0xff]
      %v833 = vld [vmem:[%s2 + $0x68] sm:$0xff]
      %v834 = vld [vmem:[%s2 + $0x70] sm:$0xff]
      %v835 = vld [vmem:[%s2 + $0x78] sm:$0xff]
      %836 = vmatprep.subr.mxu0 0.0
      %837 = vmatpush1.msra.mxu0 %v820
      %838 = vmatprep.subr.mxu0 0.0
      %839 = vmatpush1.msra.mxu0 %v821
      %840 = vmatprep.subr.mxu0 0.0
      %841 = vmatpush1.msra.mxu0 %v822
      %842 = vmatprep.subr.mxu0 0.0
      %843 = vmatpush1.msra.mxu0 %v823
      %844 = vmatprep.subr.mxu0 0.0
      %845 = vmatpush1.msra.mxu0 %v824
      %846 = vmatprep.subr.mxu0 0.0
      %847 = vmatpush1.msra.mxu0 %v825
      %848 = vmatprep.subr.mxu0 0.0
      %849 = vmatpush1.msra.mxu0 %v826
      %850 = vmatprep.subr.mxu0 0.0
      %851 = vmatpush1.msra.mxu0 %v827
      %852 = vmatprep.subr.mxu0 0.0
      %853 = vmatpush1.msra.mxu0 %v828
      %854 = vmatprep.subr.mxu0 0.0
      %855 = vmatpush1.msra.mxu0 %v829
      %856 = vmatprep.subr.mxu0 0.0
      %857 = vmatpush1.msra.mxu0 %v830
      %858 = vmatprep.subr.mxu0 0.0
      %859 = vmatpush1.msra.mxu0 %v831
      %860 = vmatprep.subr.mxu0 0.0
      %861 = vmatpush1.msra.mxu0 %v832
      %862 = vmatprep.subr.mxu0 0.0
      %863 = vmatpush1.msra.mxu0 %v833
      %864 = vmatprep.subr.mxu0 0.0
      %865 = vmatpush1.msra.mxu0 %v834
      %866 = vmatprep.subr.mxu0 0.0
      %867 = vmatpush1.msra.mxu0 %v835
      %868 = vmatprep.subr.mxu0 0.0
      %869 = vmatpush1.msra.mxu0 0.0
      %870 = vmatprep.subr.mxu0 0.0
      %871 = vmatpush1.msra.mxu0 0.0
      %872 = vmatprep.subr.mxu0 0.0
      %873 = vmatpush1.msra.mxu0 0.0
      %874 = vmatprep.subr.mxu0 0.0
      %875 = vmatpush1.msra.mxu0 0.0
      %876 = vmatprep.subr.mxu0 0.0
      %877 = vmatpush1.msra.mxu0 0.0
      %878 = vmatprep.subr.mxu0 0.0
      %879 = vmatpush1.msra.mxu0 0.0
      %880 = vmatprep.subr.mxu0 0.0
      %881 = vmatpush1.msra.mxu0 0.0
      %882 = vmatprep.subr.mxu0 0.0
      %883 = vmatpush1.msra.mxu0 0.0
      %884 = vmatprep.subr.mxu0 0.0
      %885 = vmatpush1.msra.mxu0 0.0
      %886 = vmatprep.subr.mxu0 0.0
      %887 = vmatpush1.msra.mxu0 0.0
      %888 = vmatprep.subr.mxu0 0.0
      %889 = vmatpush1.msra.mxu0 0.0
      %890 = vmatprep.subr.mxu0 0.0
      %891 = vmatpush1.msra.mxu0 0.0
      %892 = vmatprep.subr.mxu0 0.0
      %893 = vmatpush1.msra.mxu0 0.0
      %894 = vmatprep.subr.mxu0 0.0
      %895 = vmatpush1.msra.mxu0 0.0
      %896 = vmatprep.subr.mxu0 0.0
      %897 = vmatpush1.msra.mxu0 0.0
      %898 = vmatprep.subr.mxu0 0.0
      %899 = vmatpush1.msra.mxu0 0.0
      %900 = vmatprep.mubr.f32.mxu0 0.0
      %901 = vmatmul.mubr.f32.gmra.mrb[0].mxu0 %v309
      %v902 = vpop.f32.mrb[0].mxu0
      %v903 = vadd.f32 0.0, %v902
      %v904 = vpop.f32.mrb[0].mxu0
      %905 = vmatprep.mubr.f32.mxu0 0.0
      %906 = vmatmul.mubr.f32.gmra.mrb[0].mxu0 %v310
      %v907 = vpop.f32.mrb[0].mxu0
      %v908 = vadd.f32 0.0, %v907
      %v909 = vpop.f32.mrb[0].mxu0
      %910 = vmatprep.mubr.f32.mxu0 0.0
      %911 = vmatmul.mubr.f32.gmra.mrb[0].mxu0 %v311
      %v912 = vpop.f32.mrb[0].mxu0
      %v913 = vadd.f32 0.0, %v912
      %v914 = vpop.f32.mrb[0].mxu0
      %915 = vmatprep.mubr.f32.mxu0 0.0
      %916 = vmatmul.mubr.f32.gmra.mrb[0].mxu0 %v312
      %v917 = vpop.f32.mrb[0].mxu0
      %v918 = vadd.f32 0.0, %v917
      %v919 = vpop.f32.mrb[0].mxu0
      %920 = vmatprep.mubr.f32.mxu0 0.0
      %921 = vmatmul.mubr.f32.gmra.mrb[0].mxu0 %v313
      %v922 = vpop.f32.mrb[0].mxu0
      %v923 = vadd.f32 0.0, %v922
      %v924 = vpop.f32.mrb[0].mxu0
      %925 = vmatprep.mubr.f32.mxu0 0.0
      %926 = vmatmul.mubr.f32.gmra.mrb[0].mxu0 %v314
      %v927 = vpop.f32.mrb[0].mxu0
      %v928 = vadd.f32 0.0, %v927
      %v929 = vpop.f32.mrb[0].mxu0
      %930 = vmatprep.mubr.f32.mxu0 0.0
      %931 = vmatmul.mubr.f32.gmra.mrb[0].mxu0 %v315
      %v932 = vpop.f32.mrb[0].mxu0
      %v933 = vadd.f32 0.0, %v932
      %v934 = vpop.f32.mrb[0].mxu0
      %935 = vmatprep.mubr.f32.mxu0 0.0
      %936 = vmatmul.mubr.f32.gmra.mrb[0].mxu0 %v316
      %v937 = vpop.f32.mrb[0].mxu0
      %v938 = vadd.f32 0.0, %v937
      %v939 = vpop.f32.mrb[0].mxu0
      %940 = vmatprep.mubr.f32.mxu0 0.0
      %941 = vmatmul.mubr.f32.gmra.mrb[0].mxu0 %v317
      %v942 = vpop.f32.mrb[0].mxu0
      %v943 = vadd.f32 0.0, %v942
      %v944 = vpop.f32.mrb[0].mxu0
      %945 = vmatprep.mubr.f32.mxu0 0.0
      %946 = vmatmul.mubr.f32.gmra.mrb[0].mxu0 %v318
      %v947 = vpop.f32.mrb[0].mxu0
      %v948 = vadd.f32 0.0, %v947
      %v949 = vpop.f32.mrb[0].mxu0
      %950 = vmatprep.mubr.f32.mxu0 0.0
      %951 = vmatmul.mubr.f32.gmra.mrb[0].mxu0 %v319
      %v952 = vpop.f32.mrb[0].mxu0
      %v953 = vadd.f32 0.0, %v952
      %v954 = vpop.f32.mrb[0].mxu0
      %955 = vmatprep.mubr.f32.mxu0 0.0
      %956 = vmatmul.mubr.f32.gmra.mrb[0].mxu0 %v320
      %v957 = vpop.f32.mrb[0].mxu0
      %v958 = vadd.f32 0.0, %v957
      %v959 = vpop.f32.mrb[0].mxu0
      %960 = vmatprep.mubr.f32.mxu0 0.0
      %961 = vmatmul.mubr.f32.gmra.mrb[0].mxu0 %v321
      %v962 = vpop.f32.mrb[0].mxu0
      %v963 = vadd.f32 0.0, %v962
      %v964 = vpop.f32.mrb[0].mxu0
      %965 = vmatprep.mubr.f32.mxu0 0.0
      %966 = vmatmul.mubr.f32.gmra.mrb[0].mxu0 %v322
      %v967 = vpop.f32.mrb[0].mxu0
      %v968 = vadd.f32 0.0, %v967
      %v969 = vpop.f32.mrb[0].mxu0
      %970 = vmatprep.mubr.f32.mxu0 0.0
      %971 = vmatmul.mubr.f32.gmra.mrb[0].mxu0 %v323
      %v972 = vpop.f32.mrb[0].mxu0
      %v973 = vadd.f32 0.0, %v972
      %v974 = vpop.f32.mrb[0].mxu0
      %975 = vmatprep.mubr.f32.mxu0 0.0
      %976 = vmatmul.mubr.f32.gmra.mrb[0].mxu0 %v324
      %v977 = vpop.f32.mrb[0].mxu0
      %v978 = vadd.f32 0.0, %v977
      %v979 = vpop.f32.mrb[0].mxu0
      %980 = vmatprep.mubr.f32.mxu0 0.0
      %981 = vmatmul.mubr.f32.gmra.mrb[0].mxu0 %v325
      %v982 = vpop.f32.mrb[0].mxu0
      %v983 = vadd.f32 0.0, %v982
      %v984 = vpop.f32.mrb[0].mxu0
      %985 = vmatprep.mubr.f32.mxu0 0.0
      %986 = vmatmul.mubr.f32.gmra.mrb[0].mxu0 %v326
      %v987 = vpop.f32.mrb[0].mxu0
      %v988 = vadd.f32 0.0, %v987
      %v989 = vpop.f32.mrb[0].mxu0
      %990 = vmatprep.mubr.f32.mxu0 0.0
      %991 = vmatmul.mubr.f32.gmra.mrb[0].mxu0 %v327
      %v992 = vpop.f32.mrb[0].mxu0
      %v993 = vadd.f32 0.0, %v992
      %v994 = vpop.f32.mrb[0].mxu0
      %995 = vmatprep.mubr.f32.mxu0 0.0
      %996 = vmatmul.mubr.f32.gmra.mrb[0].mxu0 %v328
      %v997 = vpop.f32.mrb[0].mxu0
      %v998 = vadd.f32 0.0, %v997
      %v999 = vpop.f32.mrb[0].mxu0
      %1000 = vmatprep.mubr.f32.mxu0 0.0
      %1001 = vmatmul.mubr.f32.gmra.mrb[0].mxu0 %v329
      %v1002 = vpop.f32.mrb[0].mxu0
      %v1003 = vadd.f32 0.0, %v1002
      %v1004 = vpop.f32.mrb[0].mxu0
      %1005 = vmatprep.mubr.f32.mxu0 0.0
      %1006 = vmatmul.mubr.f32.gmra.mrb[0].mxu0 %v330
      %v1007 = vpop.f32.mrb[0].mxu0
      %v1008 = vadd.f32 0.0, %v1007
      %v1009 = vpop.f32.mrb[0].mxu0
      %1010 = vmatprep.mubr.f32.mxu0 0.0
      %1011 = vmatmul.mubr.f32.gmra.mrb[0].mxu0 %v331
      %v1012 = vpop.f32.mrb[0].mxu0
      %v1013 = vadd.f32 0.0, %v1012
      %v1014 = vpop.f32.mrb[0].mxu0
      %1015 = vmatprep.mubr.f32.mxu0 0.0
      %1016 = vmatmul.mubr.f32.gmra.mrb[0].mxu0 %v332
      %v1017 = vpop.f32.mrb[0].mxu0
      %v1018 = vadd.f32 0.0, %v1017
      %v1019 = vpop.f32.mrb[0].mxu0
      %1020 = vmatprep.mubr.f32.mxu0 0.0
      %1021 = vmatmul.mubr.f32.gmra.mrb[0].mxu0 %v333
      %v1022 = vpop.f32.mrb[0].mxu0
      %v1023 = vadd.f32 0.0, %v1022
      %v1024 = vpop.f32.mrb[0].mxu0
      %1025 = vmatprep.mubr.f32.mxu0 0.0
      %1026 = vmatmul.mubr.f32.gmra.mrb[0].mxu0 %v334
      %v1027 = vpop.f32.mrb[0].mxu0
      %v1028 = vadd.f32 0.0, %v1027
      %v1029 = vpop.f32.mrb[0].mxu0
      %1030 = vmatprep.mubr.f32.mxu0 0.0
      %1031 = vmatmul.mubr.f32.gmra.mrb[0].mxu0 %v335
      %v1032 = vpop.f32.mrb[0].mxu0
      %v1033 = vadd.f32 0.0, %v1032
      %v1034 = vpop.f32.mrb[0].mxu0
      %1035 = vmatprep.mubr.f32.mxu0 0.0
      %1036 = vmatmul.mubr.f32.gmra.mrb[0].mxu0 %v336
      %v1037 = vpop.f32.mrb[0].mxu0
      %v1038 = vadd.f32 0.0, %v1037
      %v1039 = vpop.f32.mrb[0].mxu0
      %1040 = vmatprep.mubr.f32.mxu0 0.0
      %1041 = vmatmul.mubr.f32.gmra.mrb[0].mxu0 %v337
      %v1042 = vpop.f32.mrb[0].mxu0
      %v1043 = vadd.f32 0.0, %v1042
      %v1044 = vpop.f32.mrb[0].mxu0
      %1045 = vmatprep.mubr.f32.mxu0 0.0
      %1046 = vmatmul.mubr.f32.gmra.mrb[0].mxu0 %v338
      %v1047 = vpop.f32.mrb[0].mxu0
      %v1048 = vadd.f32 0.0, %v1047
      %v1049 = vpop.f32.mrb[0].mxu0
      %1050 = vmatprep.mubr.f32.mxu0 0.0
      %1051 = vmatmul.mubr.f32.gmra.mrb[0].mxu0 %v339
      %v1052 = vpop.f32.mrb[0].mxu0
      %v1053 = vadd.f32 0.0, %v1052
      %v1054 = vpop.f32.mrb[0].mxu0
      %1055 = vmatprep.mubr.f32.mxu0 0.0
      %1056 = vmatmul.mubr.f32.gmra.mrb[0].mxu0 %v340
      %v1057 = vpop.f32.mrb[0].mxu0
      %v1058 = vadd.f32 0.0, %v1057
      %v1059 = vpop.f32.mrb[0].mxu0
      %1060 = vdwg.mxu0
      %v1061 = vld [vmem:[%s3] sm:$0xff]
      %v1062 = vld [vmem:[%s3 + $0x8] sm:$0xff]
      %v1063 = vld [vmem:[%s3 + $0x10] sm:$0xff]
      %v1064 = vld [vmem:[%s3 + $0x18] sm:$0xff]
      %v1065 = vld [vmem:[%s3 + $0x20] sm:$0xff]
      %v1066 = vld [vmem:[%s3 + $0x28] sm:$0xff]
      %v1067 = vld [vmem:[%s3 + $0x30] sm:$0xff]
      %v1068 = vld [vmem:[%s3 + $0x38] sm:$0xff]
      %v1069 = vld [vmem:[%s3 + $0x40] sm:$0xff]
      %v1070 = vld [vmem:[%s3 + $0x48] sm:$0xff]
      %v1071 = vld [vmem:[%s3 + $0x50] sm:$0xff]
      %v1072 = vld [vmem:[%s3 + $0x58] sm:$0xff]
      %v1073 = vld [vmem:[%s3 + $0x60] sm:$0xff]
      %v1074 = vld [vmem:[%s3 + $0x68] sm:$0xff]
      %v1075 = vld [vmem:[%s3 + $0x70] sm:$0xff]
      %v1076 = vld [vmem:[%s3 + $0x78] sm:$0xff]
      %v1077 = vld [vmem:[%s3 + $0x80] sm:$0xff]
      %v1078 = vld [vmem:[%s3 + $0x88] sm:$0xff]
      %v1079 = vld [vmem:[%s3 + $0x90] sm:$0xff]
      %v1080 = vld [vmem:[%s3 + $0x98] sm:$0xff]
      %v1081 = vld [vmem:[%s3 + $0xa0] sm:$0xff]
      %v1082 = vld [vmem:[%s3 + $0xa8] sm:$0xff]
      %v1083 = vld [vmem:[%s3 + $0xb0] sm:$0xff]
      %v1084 = vld [vmem:[%s3 + $0xb8] sm:$0xff]
      %v1085 = vld [vmem:[%s3 + $0xc0] sm:$0xff]
      %v1086 = vld [vmem:[%s3 + $0xc8] sm:$0xff]
      %v1087 = vld [vmem:[%s3 + $0xd0] sm:$0xff]
      %v1088 = vld [vmem:[%s3 + $0xd8] sm:$0xff]
      %v1089 = vld [vmem:[%s3 + $0xe0] sm:$0xff]
      %v1090 = vld [vmem:[%s3 + $0xe8] sm:$0xff]
      %v1091 = vld [vmem:[%s3 + $0xf0] sm:$0xff]
      %v1092 = vld [vmem:[%s3 + $0xf8] sm:$0xff]
      %v1093 = vmul.f32 %v903, %v1061
      %v1094 = vmul.f32 %v908, %v1062
      %v1095 = vmul.f32 %v913, %v1063
      %v1096 = vmul.f32 %v918, %v1064
      %v1097 = vmul.f32 %v923, %v1065
      %v1098 = vmul.f32 %v928, %v1066
      %v1099 = vmul.f32 %v933, %v1067
      %v1100 = vmul.f32 %v938, %v1068
      %v1101 = vmul.f32 %v943, %v1069
      %v1102 = vmul.f32 %v948, %v1070
      %v1103 = vmul.f32 %v953, %v1071
      %v1104 = vmul.f32 %v958, %v1072
      %v1105 = vmul.f32 %v963, %v1073
      %v1106 = vmul.f32 %v968, %v1074
      %v1107 = vmul.f32 %v973, %v1075
      %v1108 = vmul.f32 %v978, %v1076
      %v1109 = vmul.f32 %v983, %v1077
      %v1110 = vmul.f32 %v988, %v1078
      %v1111 = vmul.f32 %v993, %v1079
      %v1112 = vmul.f32 %v998, %v1080
      %v1113 = vmul.f32 %v1003, %v1081
      %v1114 = vmul.f32 %v1008, %v1082
      %v1115 = vmul.f32 %v1013, %v1083
      %v1116 = vmul.f32 %v1018, %v1084
      %v1117 = vmul.f32 %v1023, %v1085
      %v1118 = vmul.f32 %v1028, %v1086
      %v1119 = vmul.f32 %v1033, %v1087
      %v1120 = vmul.f32 %v1038, %v1088
      %v1121 = vmul.f32 %v1043, %v1089
      %v1122 = vmul.f32 %v1048, %v1090
      %v1123 = vmul.f32 %v1053, %v1091
      %v1124 = vmul.f32 %v1058, %v1092
      %vm1125 = vcmask 64512
      %1126 = vst.msk [vmem:[%s301] sm:$0xff] %vm1125, %v1093
      %1127 = vst.msk [vmem:[%s301 + $0x8] sm:$0xff] %vm1125, %v1094
      %1128 = vst.msk [vmem:[%s301 + $0x10] sm:$0xff] %vm1125, %v1095
      %1129 = vst.msk [vmem:[%s301 + $0x18] sm:$0xff] %vm1125, %v1096
      %1130 = vst.msk [vmem:[%s301 + $0x20] sm:$0xff] %vm1125, %v1097
      %1131 = vst.msk [vmem:[%s301 + $0x28] sm:$0xff] %vm1125, %v1098
      %1132 = vst.msk [vmem:[%s301 + $0x30] sm:$0xff] %vm1125, %v1099
      %1133 = vst.msk [vmem:[%s301 + $0x38] sm:$0xff] %vm1125, %v1100
      %1134 = vst.msk [vmem:[%s301 + $0x40] sm:$0xff] %vm1125, %v1101
      %1135 = vst.msk [vmem:[%s301 + $0x48] sm:$0xff] %vm1125, %v1102
      %1136 = vst.msk [vmem:[%s301 + $0x50] sm:$0xff] %vm1125, %v1103
      %1137 = vst.msk [vmem:[%s301 + $0x58] sm:$0xff] %vm1125, %v1104
      %1138 = vst.msk [vmem:[%s301 + $0x60] sm:$0xff] %vm1125, %v1105
      %1139 = vst.msk [vmem:[%s301 + $0x68] sm:$0xff] %vm1125, %v1106
      %1140 = vst.msk [vmem:[%s301 + $0x70] sm:$0xff] %vm1125, %v1107
      %1141 = vst.msk [vmem:[%s301 + $0x78] sm:$0xff] %vm1125, %v1108
      %1142 = vst.msk [vmem:[%s301 + $0x80] sm:$0xff] %vm1125, %v1109
      %1143 = vst.msk [vmem:[%s301 + $0x88] sm:$0xff] %vm1125, %v1110
      %1144 = vst.msk [vmem:[%s301 + $0x90] sm:$0xff] %vm1125, %v1111
      %1145 = vst.msk [vmem:[%s301 + $0x98] sm:$0xff] %vm1125, %v1112
      %1146 = vst.msk [vmem:[%s301 + $0xa0] sm:$0xff] %vm1125, %v1113
      %1147 = vst.msk [vmem:[%s301 + $0xa8] sm:$0xff] %vm1125, %v1114
      %1148 = vst.msk [vmem:[%s301 + $0xb0] sm:$0xff] %vm1125, %v1115
      %1149 = vst.msk [vmem:[%s301 + $0xb8] sm:$0xff] %vm1125, %v1116
      %1150 = vst.msk [vmem:[%s301 + $0xc0] sm:$0xff] %vm1125, %v1117
      %1151 = vst.msk [vmem:[%s301 + $0xc8] sm:$0xff] %vm1125, %v1118
      %1152 = vst.msk [vmem:[%s301 + $0xd0] sm:$0xff] %vm1125, %v1119
      %1153 = vst.msk [vmem:[%s301 + $0xd8] sm:$0xff] %vm1125, %v1120
      %1154 = vst.msk [vmem:[%s301 + $0xe0] sm:$0xff] %vm1125, %v1121
      %1155 = vst.msk [vmem:[%s301 + $0xe8] sm:$0xff] %vm1125, %v1122
      %1156 = vst.msk [vmem:[%s301 + $0xf0] sm:$0xff] %vm1125, %v1123
      %1157 = vst.msk [vmem:[%s301 + $0xf8] sm:$0xff] %vm1125, %v1124
      %p1158 = scmp.lt.s32.totalorder %s19, 1
      %s1159 = scalar_select %p1158, %s19, 1
      %s1160 = smul.addr %s1159, 32
      %s1161 = smul.addr %s1160, 8
      %s1162 = scalar_lea.vmem %s4, %s1161
      %p1163 = scmp.lt.s32.totalorder %s19, 1
      %s1164 = scalar_select %p1163, %s19, 1
      %s1165 = smul.addr %s1164, 32
      %s1166 = smul.addr %s1165, 8
      %s1167 = scalar_lea.vmem %s5, %s1166
      %p1168 = scmp.lt.s32.totalorder %s19, 1
      %s1169 = scalar_select %p1168, %s19, 1
      %s1170 = scalar_lea.vmem %s6, %s1169
      %p1171 = scmp.lt.s32.totalorder %s19, 1
      %s1172 = scalar_select %p1171, %s19, 1
      %s1173 = scalar_lea.vmem %s7, %s1172
      // Predicated region
      $region37: #{_lambda_.5} parent=35 // pred_check
        %p1174 = pneg %p126
      $region38: #{_lambda_.5} parent=35 // pred_check_branch
        %1176 = sbr.rel (%p1174) target = $region40
      $region39: #{_lambda_.5} parent=35 // pred_region
        _
      $region40: #{_lambda_.5} parent=35 // pred_fallthru
        _
      // Predicated region
      $region41: #{_lambda_.5} parent=35 // pred_check
        %p1177 = pneg %p152
      $region42: #{_lambda_.5} parent=35 // pred_check_branch
        %1179 = sbr.rel (%p1177) target = $region44
      $region43: #{_lambda_.5} parent=35 // pred_region
        _
      $region44: #{_lambda_.5} parent=35 // pred_fallthru
        _
      // Predicated region
      $region45: #{_lambda_.5} parent=35 // pred_check
        %p1180 = pneg %p178
      $region46: #{_lambda_.5} parent=35 // pred_check_branch
        %1182 = sbr.rel (%p1180) target = $region48
      $region47: #{_lambda_.5} parent=35 // pred_region
        _
      $region48: #{_lambda_.5} parent=35 // pred_fallthru
        _
      // Predicated region
      $region49: #{_lambda_.5} parent=35 // pred_check
        %p1183 = pneg %p204
      $region50: #{_lambda_.5} parent=35 // pred_check_branch
        %1185 = sbr.rel (%p1183) target = $region52
      $region51: #{_lambda_.5} parent=35 // pred_region
        _
      $region52: #{_lambda_.5} parent=35 // pred_fallthru
        _
    $region36: #{_lambda_.5} parent=5 // pred_fallthru
      _
    %p1186 = scmp.le.s32.totalorder 2, %s14
    // Predicated region
    $region53: #{_lambda_.5} parent=5 // pred_check
      %p1187 = pneg %p1186
    $region54: #{_lambda_.5} parent=5 // pred_check_branch
      %1189 = sbr.rel (%p1187) target = $region56
    $region55: #{_lambda_.5} parent=5 // pred_region
      %s1190 = ssub.s32 %s14, 2
      // Predicated region
      $region57: #{_lambda_.5} parent=55 // pred_check
        %p1191 = pneg %p132
      $region58: #{_lambda_.5} parent=55 // pred_check_branch
        %1193 = sbr.rel (%p1191) target = $region60
      $region59: #{_lambda_.5} parent=55 // pred_region
        %p1194 = scmp.lt.s32.totalorder %s20, 1
        %s1195 = scalar_select %p1194, %s20, 1
        %s1196 = smul.addr %s1195, 32
        %s1197 = smul.addr %s1196, 8
        %s1198 = scalar_lea.vmem %s4, %s1197
      $region60: #{_lambda_.5} parent=55 // pred_fallthru
        _
      // Predicated region
      $region61: #{_lambda_.5} parent=55 // pred_check
        %p1199 = pneg %p158
      $region62: #{_lambda_.5} parent=55 // pred_check_branch
        %1201 = sbr.rel (%p1199) target = $region64
      $region63: #{_lambda_.5} parent=55 // pred_region
        %p1202 = scmp.lt.s32.totalorder %s20, 1
        %s1203 = scalar_select %p1202, %s20, 1
        %s1204 = smul.addr %s1203, 32
        %s1205 = smul.addr %s1204, 8
        %s1206 = scalar_lea.vmem %s5, %s1205
      $region64: #{_lambda_.5} parent=55 // pred_fallthru
        _
      // Predicated region
      $region65: #{_lambda_.5} parent=55 // pred_check
        %p1207 = pneg %p184
      $region66: #{_lambda_.5} parent=55 // pred_check_branch
        %1209 = sbr.rel (%p1207) target = $region68
      $region67: #{_lambda_.5} parent=55 // pred_region
        %p1210 = scmp.lt.s32.totalorder %s20, 1
        %s1211 = scalar_select %p1210, %s20, 1
        %s1212 = scalar_lea.vmem %s6, %s1211
      $region68: #{_lambda_.5} parent=55 // pred_fallthru
        _
      // Predicated region
      $region69: #{_lambda_.5} parent=55 // pred_check
        %p1213 = pneg %p210
      $region70: #{_lambda_.5} parent=55 // pred_check_branch
        %1215 = sbr.rel (%p1213) target = $region72
      $region71: #{_lambda_.5} parent=55 // pred_region
        %p1216 = scmp.lt.s32.totalorder %s20, 1
        %s1217 = scalar_select %p1216, %s20, 1
        %s1218 = scalar_lea.vmem %s7, %s1217
      $region72: #{_lambda_.5} parent=55 // pred_fallthru
        _
    $region56: #{_lambda_.5} parent=5 // pred_fallthru
      _
  $region6: #{_lambda_.5} parent=0 // loop_footer
    %s18 = sadd.s32 1, %s14
  $region7: #{_lambda_.5} parent=0 // loop_footer_branch
    %13 = sbr.rel target = $region3
  $region8: #{_lambda_.5} parent=0 // loop_exit
    _

</llo_original>
